<compile_context>
chip_gen: v7x
topology: tpu7x:2x2x1
jax: 0.10.0
libtpu: 0.0.40
codegen_flags: <defaults>
</compile_context>

<pallas_src>
import functools

import numpy as np

import jax
import jax.numpy as jnp
from jax.experimental import pallas as pl
from jax.experimental.pallas import tpu as pltpu


# ----------------------------------------------------------------------------
# Pallas kernels
# ----------------------------------------------------------------------------
def _stem_conv_kernel(x_ref, t_ref, w_ref, scale_ref, shift_ref, o_ref):
    """Full (1,3) conv: sum_d (T_d @ x) @ W_d, then BN + ReLU6. All in one block."""
    x = x_ref[...]                                   # (M_in, Cin) bf16
    acc = jnp.zeros(o_ref.shape, jnp.float32)        # (M_out, Cout) f32
    for d in range(3):
        # Exact 0/1 row gather of the d-th spatial tap (stride / pad folded in T).
        tap = jnp.dot(t_ref[d], x, preferred_element_type=jnp.float32)
        acc = acc + jnp.dot(tap.astype(jnp.bfloat16), w_ref[d],
                            preferred_element_type=jnp.float32)
    y = acc * scale_ref[...] + shift_ref[...]
    o_ref[...] = jnp.minimum(jnp.maximum(y, 0.0), 6.0).astype(o_ref.dtype)


def _inverted_residual_kernel(*refs, has_expand, has_residual):
    """Fused expand(1x1)+BN+ReLU6 -> depthwise(1,3)+BN+ReLU6 -> project(1x1)+BN [+res]."""
    if has_expand:
        (x_ref, exp_w_ref, exp_s_ref, exp_b_ref,
         t_ref, dw_w_ref, dw_s_ref, dw_b_ref,
         proj_w_ref, proj_s_ref, proj_b_ref, o_ref) = refs
    else:
        (x_ref, t_ref, dw_w_ref, dw_s_ref, dw_b_ref,
         proj_w_ref, proj_s_ref, proj_b_ref, o_ref) = refs

    x = x_ref[...]                                   # (M_in, Cin) bf16

    # -- expand 1x1 conv + BN + ReLU6 (hidden activation stays on-chip) -------
    if has_expand:
        h = jnp.dot(x, exp_w_ref[...], preferred_element_type=jnp.float32)
        h = h * exp_s_ref[...] + exp_b_ref[...]
        h = jnp.minimum(jnp.maximum(h, 0.0), 6.0).astype(jnp.bfloat16)
    else:
        h = x                                        # expand_ratio == 1

    # -- depthwise (1,3) conv: exact 0/1 tap-matmul gather + per-channel MAC --
    acc = jnp.zeros((t_ref.shape[1], h.shape[1]), jnp.float32)   # (M_out, hidden)
    for d in range(3):
        tap = jnp.dot(t_ref[d], h, preferred_element_type=jnp.float32)
        acc = acc + tap * dw_w_ref[d]                # (1, hidden) per-tap weights
    y = acc * dw_s_ref[...] + dw_b_ref[...]
    y = jnp.minimum(jnp.maximum(y, 0.0), 6.0).astype(jnp.bfloat16)

    # -- project 1x1 conv + BN (+ residual) -----------------------------------
    out = jnp.dot(y, proj_w_ref[...], preferred_element_type=jnp.float32)
    out = out * proj_s_ref[...] + proj_b_ref[...]
    if has_residual:
        out = out + x.astype(jnp.float32)
    o_ref[...] = out.astype(o_ref.dtype)


# ----------------------------------------------------------------------------
# pallas_call wrappers (one block per layer, grid=(1,))
# ----------------------------------------------------------------------------
def _full_spec(shape):
    zeros = (0,) * len(shape)
    return pl.BlockSpec(shape, lambda i, _z=zeros: _z)


def stem_conv(x_flat, t_mats, w, scale, shift):
    _, m_out, _ = t_mats.shape
    cout = w.shape[-1]
    args = (x_flat, t_mats, w, scale, shift)
    return pl.pallas_call(
        _stem_conv_kernel,
        grid=(1,),
        in_specs=[_full_spec(a.shape) for a in args],
        out_specs=_full_spec((m_out, cout)),
        out_shape=jax.ShapeDtypeStruct((m_out, cout), jnp.bfloat16),
        compiler_params=pltpu.CompilerParams(dimension_semantics=("arbitrary",)),
    )(*args)


def inverted_residual(x_flat, t_mats, blk):
    _, m_out, _ = t_mats.shape
    oup = blk["oup"]
    has_expand = blk["expand"] != 1
    has_residual = (blk["stride"] == 1) and (blk["inp"] == blk["oup"])

    args = [x_flat]
    if has_expand:
        args += [blk["exp_w"], blk["exp_s"], blk["exp_b"]]
    args += [t_mats, blk["dw_w"], blk["dw_s"], blk["dw_b"],
             blk["proj_w"], blk["proj_s"], blk["proj_b"]]

    kernel = functools.partial(_inverted_residual_kernel,
                               has_expand=has_expand, has_residual=has_residual)
    return pl.pallas_call(
        kernel,
        grid=(1,),
        in_specs=[_full_spec(a.shape) for a in args],
        out_specs=_full_spec((m_out, oup)),
        out_shape=jax.ShapeDtypeStruct((m_out, oup), jnp.bfloat16),
        compiler_params=pltpu.CompilerParams(dimension_semantics=("arbitrary",)),
    )(*args)


# ----------------------------------------------------------------------------
# Constant tap matrices: encode kernel (1,3), padding (0,1), stride along W and
# the (n,h)-group boundaries of the flattened rows as 0/1 selection matrices.
# Built at trace time (shape-only constants), so no per-forward XLA glue.
# ----------------------------------------------------------------------------
def _tap_matrices(n, h, w_in, stride):
    w_out = (w_in + 2 - 3) // stride + 1
    g = n * h
    m_in, m_out = g * w_in, g * w_out
    t = np.zeros((3, m_out, m_in), np.float32)
    for d in range(3):
        for gi in range(g):
            for wo in range(w_out):
                wi = wo * stride + d - 1
                if 0 <= wi < w_in:
                    t[d, gi * w_out + wo, gi * w_in + wi] = 1.0
    return jnp.asarray(t, dtype=jnp.bfloat16), w_out


# ----------------------------------------------------------------------------
# Parameter construction (deterministic, synthetic, final kernel layout)
# ----------------------------------------------------------------------------
def _make_divisible(v, divisor, min_value=None):
    if min_value is None:
        min_value = divisor
    new_v = max(min_value, int(v + divisor / 2) // divisor * divisor)
    if new_v < 0.9 * v:
        new_v += divisor
    return new_v


def _bn_affine(c, eps=1e-5):
    # BatchNorm2d at module init: gamma=1, beta=0, running_mean=0, running_var=1.
    gamma = jnp.ones((1, c), jnp.float32)
    beta = jnp.zeros((1, c), jnp.float32)
    mean = jnp.zeros((1, c), jnp.float32)
    var = jnp.ones((1, c), jnp.float32)
    scale = gamma / jnp.sqrt(var + eps)
    shift = beta - mean * scale
    return scale, shift


def _kaiming_conv(key, kw, cin, cout):
    std = (2.0 / (cout * kw)) ** 0.5
    return std * jax.random.normal(key, (kw, cin, cout), dtype=jnp.float32)


def _kaiming_pw(key, cin, cout):
    std = (2.0 / cout) ** 0.5
    return std * jax.random.normal(key, (cin, cout), dtype=jnp.float32)


def _kaiming_dw(key, kw, c):
    std = (2.0 / (c * kw)) ** 0.5
    return std * jax.random.normal(key, (kw, 1, c), dtype=jnp.float32)


def build_mobilenet_v2(key, width_mult=1.0, round_nearest=8):
    # (t, c, n, stride-along-W) — matches the module's inverted_residual_setting.
    settings = [(1, 16, 1, 2), (6, 32, 2, 2), (6, 64, 2, 2), (6, 128, 1, 1)]
    input_channel = _make_divisible(32 * width_mult, round_nearest)
    keys = iter(jax.random.split(key, 64))
    layers = []

    c0 = input_channel
    s0, b0 = _bn_affine(c0)
    layers.append(dict(kind="conv0", stride=2,
                       w=_kaiming_conv(next(keys), 3, c0, c0).astype(jnp.bfloat16),
                       s=s0, b=b0))

    for t, cc, n, s in settings:
        out_c = _make_divisible(cc * width_mult, round_nearest)
        for i in range(n):
            stride = s if i == 0 else 1
            hidden = int(round(input_channel * t))
            blk = dict(kind="ir", stride=stride, expand=t,
                       inp=input_channel, oup=out_c, hidden=hidden)
            if t != 1:
                blk["exp_w"] = _kaiming_pw(next(keys), input_channel, hidden).astype(jnp.bfloat16)
                blk["exp_s"], blk["exp_b"] = _bn_affine(hidden)
            blk["dw_w"] = _kaiming_dw(next(keys), 3, hidden)           # (3, 1, hidden) f32
            blk["dw_s"], blk["dw_b"] = _bn_affine(hidden)
            blk["proj_w"] = _kaiming_pw(next(keys), hidden, out_c).astype(jnp.bfloat16)
            blk["proj_s"], blk["proj_b"] = _bn_affine(out_c)
            layers.append(blk)
            input_channel = out_c
    return layers


# ----------------------------------------------------------------------------
# Forward pass: NCHW -> flattened NHWC rows (bf16) -> 7 fused kernels -> NCHW.
# ----------------------------------------------------------------------------
def mobilenet_v2_forward(x_nchw, layers):
    x_nhwc = jnp.transpose(x_nchw, (0, 2, 3, 1))
    n, h, w, c = x_nhwc.shape
    x = x_nhwc.reshape(n * h * w, c).astype(jnp.bfloat16)
    w_cur = w
    for blk in layers:
        t_mats, w_out = _tap_matrices(n, h, w_cur, blk["stride"])
        if blk["kind"] == "conv0":
            x = stem_conv(x, t_mats, blk["w"], blk["s"], blk["b"])
        else:
            x = inverted_residual(x, t_mats, blk)
        w_cur = w_out
    out = x.astype(jnp.float32).reshape(n, h, w_cur, -1)
    return jnp.transpose(out, (0, 3, 1, 2))


# ----------------------------------------------------------------------------
if __name__ == "__main__":
    key = jax.random.PRNGKey(0)
    pkey, xkey = jax.random.split(key)
    layers = build_mobilenet_v2(pkey)

    # Input: NCHW, C must equal the stem width (32). Small spatial size: H=4, W=16.
    x = jax.random.normal(xkey, (2, 32, 4, 16), dtype=jnp.float32)

    fwd = jax.jit(lambda xx: mobilenet_v2_forward(xx, layers))
    out = fwd(x)
    jax.block_until_ready(out)

    # W is halved 4 times (stem + three stride-2 blocks): 16 -> 1; last channel 128.
    assert out.shape == (2, 128, 4, 1), out.shape
    assert bool(jnp.all(jnp.isfinite(out))), "non-finite output"
    print("KERNEL_OK")
</pallas_src>

<mosaic_0001>
module attributes {stable_mosaic.version = 11 : i64} {
  func.func @_stem_conv_kernel(%arg0: i32, %arg1: memref<128x32xbf16, #tpu.memory_space<vmem>>, %arg2: memref<3x64x128xbf16, #tpu.memory_space<vmem>>, %arg3: memref<3x32x32xbf16, #tpu.memory_space<vmem>>, %arg4: memref<1x32xf32, #tpu.memory_space<vmem>>, %arg5: memref<1x32xf32, #tpu.memory_space<vmem>>, %arg6: memref<64x32xbf16, #tpu.memory_space<vmem>>) attributes {dimension_semantics = [#tpu.dimension_semantics<arbitrary>], iteration_bounds = array<i64: 1>, scalar_prefetch = 0 : i64, scratch_operands = 0 : i64, tpu.core_type = #tpu.core_type<tc>, window_params = [{pipeline_mode = #tpu.pipeline_mode<synchronous>, transform_indices = @transform_0, window_bounds = array<i64: 128, 32>}, {pipeline_mode = #tpu.pipeline_mode<synchronous>, transform_indices = @transform_1, window_bounds = array<i64: 3, 64, 128>}, {pipeline_mode = #tpu.pipeline_mode<synchronous>, transform_indices = @transform_2, window_bounds = array<i64: 3, 32, 32>}, {pipeline_mode = #tpu.pipeline_mode<synchronous>, transform_indices = @transform_3, window_bounds = array<i64: 1, 32>}, {pipeline_mode = #tpu.pipeline_mode<synchronous>, transform_indices = @transform_4, window_bounds = array<i64: 1, 32>}, {pipeline_mode = #tpu.pipeline_mode<synchronous>, transform_indices = @transform_5, window_bounds = array<i64: 64, 32>}]} {
    %c0 = arith.constant 0 : index
    %c0_0 = arith.constant 0 : index
    %0 = vector.load %arg1[%c0, %c0_0] : memref<128x32xbf16, #tpu.memory_space<vmem>>, vector<128x32xbf16>
    %cst = arith.constant 0.000000e+00 : f32
    %1 = vector.broadcast %cst : f32 to vector<64x32xf32>
    %c0_1 = arith.constant 0 : index
    %c0_2 = arith.constant 0 : index
    %c0_3 = arith.constant 0 : index
    %2 = vector.load %arg2[%c0_1, %c0_2, %c0_3] : memref<3x64x128xbf16, #tpu.memory_space<vmem>>, vector<1x64x128xbf16>
    %3 = vector.shape_cast %2 : vector<1x64x128xbf16> to vector<64x128xbf16>
    %cst_4 = arith.constant dense<0.000000e+00> : vector<64x32xf32>
    %4 = tpu.matmul %3, %0, %cst_4 {dimension_numbers = #tpu.dot_dimension_numbers<[1], [0], [0], [1], [0, 0, 1, 1], [], []>} : vector<64x128xbf16>, vector<128x32xbf16>, vector<64x32xf32> -> vector<64x32xf32>
    %5 = arith.truncf %4 : vector<64x32xf32> to vector<64x32xbf16>
    %c0_5 = arith.constant 0 : index
    %c0_6 = arith.constant 0 : index
    %c0_7 = arith.constant 0 : index
    %6 = vector.load %arg3[%c0_5, %c0_6, %c0_7] : memref<3x32x32xbf16, #tpu.memory_space<vmem>>, vector<1x32x32xbf16>
    %7 = vector.shape_cast %6 : vector<1x32x32xbf16> to vector<32x32xbf16>
    %cst_8 = arith.constant dense<0.000000e+00> : vector<64x32xf32>
    %8 = tpu.matmul %5, %7, %cst_8 {dimension_numbers = #tpu.dot_dimension_numbers<[1], [0], [0], [1], [0, 0, 1, 1], [], []>} : vector<64x32xbf16>, vector<32x32xbf16>, vector<64x32xf32> -> vector<64x32xf32>
    %9 = arith.addf %1, %8 : vector<64x32xf32>
    %c1 = arith.constant 1 : index
    %c0_9 = arith.constant 0 : index
    %c0_10 = arith.constant 0 : index
    %10 = vector.load %arg2[%c1, %c0_9, %c0_10] : memref<3x64x128xbf16, #tpu.memory_space<vmem>>, vector<1x64x128xbf16>
    %11 = vector.shape_cast %10 : vector<1x64x128xbf16> to vector<64x128xbf16>
    %cst_11 = arith.constant dense<0.000000e+00> : vector<64x32xf32>
    %12 = tpu.matmul %11, %0, %cst_11 {dimension_numbers = #tpu.dot_dimension_numbers<[1], [0], [0], [1], [0, 0, 1, 1], [], []>} : vector<64x128xbf16>, vector<128x32xbf16>, vector<64x32xf32> -> vector<64x32xf32>
    %13 = arith.truncf %12 : vector<64x32xf32> to vector<64x32xbf16>
    %c1_12 = arith.constant 1 : index
    %c0_13 = arith.constant 0 : index
    %c0_14 = arith.constant 0 : index
    %14 = vector.load %arg3[%c1_12, %c0_13, %c0_14] : memref<3x32x32xbf16, #tpu.memory_space<vmem>>, vector<1x32x32xbf16>
    %15 = vector.shape_cast %14 : vector<1x32x32xbf16> to vector<32x32xbf16>
    %cst_15 = arith.constant dense<0.000000e+00> : vector<64x32xf32>
    %16 = tpu.matmul %13, %15, %cst_15 {dimension_numbers = #tpu.dot_dimension_numbers<[1], [0], [0], [1], [0, 0, 1, 1], [], []>} : vector<64x32xbf16>, vector<32x32xbf16>, vector<64x32xf32> -> vector<64x32xf32>
    %17 = arith.addf %9, %16 : vector<64x32xf32>
    %c2 = arith.constant 2 : index
    %c0_16 = arith.constant 0 : index
    %c0_17 = arith.constant 0 : index
    %18 = vector.load %arg2[%c2, %c0_16, %c0_17] : memref<3x64x128xbf16, #tpu.memory_space<vmem>>, vector<1x64x128xbf16>
    %19 = vector.shape_cast %18 : vector<1x64x128xbf16> to vector<64x128xbf16>
    %cst_18 = arith.constant dense<0.000000e+00> : vector<64x32xf32>
    %20 = tpu.matmul %19, %0, %cst_18 {dimension_numbers = #tpu.dot_dimension_numbers<[1], [0], [0], [1], [0, 0, 1, 1], [], []>} : vector<64x128xbf16>, vector<128x32xbf16>, vector<64x32xf32> -> vector<64x32xf32>
    %21 = arith.truncf %20 : vector<64x32xf32> to vector<64x32xbf16>
    %c2_19 = arith.constant 2 : index
    %c0_20 = arith.constant 0 : index
    %c0_21 = arith.constant 0 : index
    %22 = vector.load %arg3[%c2_19, %c0_20, %c0_21] : memref<3x32x32xbf16, #tpu.memory_space<vmem>>, vector<1x32x32xbf16>
    %23 = vector.shape_cast %22 : vector<1x32x32xbf16> to vector<32x32xbf16>
    %cst_22 = arith.constant dense<0.000000e+00> : vector<64x32xf32>
    %24 = tpu.matmul %21, %23, %cst_22 {dimension_numbers = #tpu.dot_dimension_numbers<[1], [0], [0], [1], [0, 0, 1, 1], [], []>} : vector<64x32xbf16>, vector<32x32xbf16>, vector<64x32xf32> -> vector<64x32xf32>
    %25 = arith.addf %17, %24 : vector<64x32xf32>
    %c0_23 = arith.constant 0 : index
    %c0_24 = arith.constant 0 : index
    %26 = vector.load %arg4[%c0_23, %c0_24] : memref<1x32xf32, #tpu.memory_space<vmem>>, vector<1x32xf32>
    %27 = vector.broadcast %26 : vector<1x32xf32> to vector<64x32xf32>
    %28 = arith.mulf %25, %27 : vector<64x32xf32>
    %c0_25 = arith.constant 0 : index
    %c0_26 = arith.constant 0 : index
    %29 = vector.load %arg5[%c0_25, %c0_26] : memref<1x32xf32, #tpu.memory_space<vmem>>, vector<1x32xf32>
    %30 = vector.broadcast %29 : vector<1x32xf32> to vector<64x32xf32>
    %31 = arith.addf %28, %30 : vector<64x32xf32>
    %cst_27 = arith.constant 0.000000e+00 : f32
    %32 = vector.broadcast %cst_27 : f32 to vector<64x32xf32>
    %33 = arith.maximumf %31, %32 : vector<64x32xf32>
    %cst_28 = arith.constant 6.000000e+00 : f32
    %34 = vector.broadcast %cst_28 : f32 to vector<64x32xf32>
    %35 = arith.minimumf %33, %34 : vector<64x32xf32>
    %36 = arith.truncf %35 : vector<64x32xf32> to vector<64x32xbf16>
    %c0_29 = arith.constant 0 : index
    %c0_30 = arith.constant 0 : index
    %37 = vector.load %arg6[%c0_29, %c0_30] : memref<64x32xbf16, #tpu.memory_space<vmem>>, vector<64x32xbf16>
    tpu.vector_store %arg6[%c0_29, %c0_30], %36 {strides = array<i32>} : memref<64x32xbf16, #tpu.memory_space<vmem>>, vector<64x32xbf16>,
    return
  }
  func.func @transform_0(%arg0: i32) -> (i32, i32) {
    %c0_i32 = arith.constant 0 : i32
    %c0_i32_0 = arith.constant 0 : i32
    %c0_i32_1 = arith.constant 0 : i32
    return %c0_i32, %c0_i32_0 : i32, i32
  }
  func.func @transform_1(%arg0: i32) -> (i32, i32, i32) {
    %c0_i32 = arith.constant 0 : i32
    %c0_i32_0 = arith.constant 0 : i32
    %c0_i32_1 = arith.constant 0 : i32
    %c0_i32_2 = arith.constant 0 : i32
    return %c0_i32, %c0_i32_0, %c0_i32_1 : i32, i32, i32
  }
  func.func @transform_2(%arg0: i32) -> (i32, i32, i32) {
    %c0_i32 = arith.constant 0 : i32
    %c0_i32_0 = arith.constant 0 : i32
    %c0_i32_1 = arith.constant 0 : i32
    %c0_i32_2 = arith.constant 0 : i32
    return %c0_i32, %c0_i32_0, %c0_i32_1 : i32, i32, i32
  }
  func.func @transform_3(%arg0: i32) -> (i32, i32) {
    %c0_i32 = arith.constant 0 : i32
    %c0_i32_0 = arith.constant 0 : i32
    %c0_i32_1 = arith.constant 0 : i32
    return %c0_i32, %c0_i32_0 : i32, i32
  }
  func.func @transform_4(%arg0: i32) -> (i32, i32) {
    %c0_i32 = arith.constant 0 : i32
    %c0_i32_0 = arith.constant 0 : i32
    %c0_i32_1 = arith.constant 0 : i32
    return %c0_i32, %c0_i32_0 : i32, i32
  }
  func.func @transform_5(%arg0: i32) -> (i32, i32) {
    %c0_i32 = arith.constant 0 : i32
    %c0_i32_0 = arith.constant 0 : i32
    %c0_i32_1 = arith.constant 0 : i32
    return %c0_i32, %c0_i32_0 : i32, i32
  }
}

module attributes {stable_mosaic.version = 11 : i64} {
  func.func @_inverted_residual_kernel(%arg0: i32, %arg1: memref<64x32xbf16, #tpu.memory_space<vmem>>, %arg2: memref<3x32x64xbf16, #tpu.memory_space<vmem>>, %arg3: memref<3x1x32xf32, #tpu.memory_space<vmem>>, %arg4: memref<1x32xf32, #tpu.memory_space<vmem>>, %arg5: memref<1x32xf32, #tpu.memory_space<vmem>>, %arg6: memref<32x16xbf16, #tpu.memory_space<vmem>>, %arg7: memref<1x16xf32, #tpu.memory_space<vmem>>, %arg8: memref<1x16xf32, #tpu.memory_space<vmem>>, %arg9: memref<32x16xbf16, #tpu.memory_space<vmem>>) attributes {dimension_semantics = [#tpu.dimension_semantics<arbitrary>], iteration_bounds = array<i64: 1>, scalar_prefetch = 0 : i64, scratch_operands = 0 : i64, tpu.core_type = #tpu.core_type<tc>, window_params = [{pipeline_mode = #tpu.pipeline_mode<synchronous>, transform_indices = @transform_0, window_bounds = array<i64: 64, 32>}, {pipeline_mode = #tpu.pipeline_mode<synchronous>, transform_indices = @transform_1, window_bounds = array<i64: 3, 32, 64>}, {pipeline_mode = #tpu.pipeline_mode<synchronous>, transform_indices = @transform_2, window_bounds = array<i64: 3, 1, 32>}, {pipeline_mode = #tpu.pipeline_mode<synchronous>, transform_indices = @transform_3, window_bounds = array<i64: 1, 32>}, {pipeline_mode = #tpu.pipeline_mode<synchronous>, transform_indices = @transform_4, window_bounds = array<i64: 1, 32>}, {pipeline_mode = #tpu.pipeline_mode<synchronous>, transform_indices = @transform_5, window_bounds = array<i64: 32, 16>}, {pipeline_mode = #tpu.pipeline_mode<synchronous>, transform_indices = @transform_6, window_bounds = array<i64: 1, 16>}, {pipeline_mode = #tpu.pipeline_mode<synchronous>, transform_indices = @transform_7, window_bounds = array<i64: 1, 16>}, {pipeline_mode = #tpu.pipeline_mode<synchronous>, transform_indices = @transform_8, window_bounds = array<i64: 32, 16>}]} {
    %c0 = arith.constant 0 : index
    %c0_0 = arith.constant 0 : index
    %0 = vector.load %arg1[%c0, %c0_0] : memref<64x32xbf16, #tpu.memory_space<vmem>>, vector<64x32xbf16>
    %cst = arith.constant 0.000000e+00 : f32
    %1 = vector.broadcast %cst : f32 to vector<32x32xf32>
    %c0_1 = arith.constant 0 : index
    %c0_2 = arith.constant 0 : index
    %c0_3 = arith.constant 0 : index
    %2 = vector.load %arg2[%c0_1, %c0_2, %c0_3] : memref<3x32x64xbf16, #tpu.memory_space<vmem>>, vector<1x32x64xbf16>
    %3 = vector.shape_cast %2 : vector<1x32x64xbf16> to vector<32x64xbf16>
    %cst_4 = arith.constant dense<0.000000e+00> : vector<32x32xf32>
    %4 = tpu.matmul %3, %0, %cst_4 {dimension_numbers = #tpu.dot_dimension_numbers<[1], [0], [0], [1], [0, 0, 1, 1], [], []>} : vector<32x64xbf16>, vector<64x32xbf16>, vector<32x32xf32> -> vector<32x32xf32>
    %c0_5 = arith.constant 0 : index
    %c0_6 = arith.constant 0 : index
    %c0_7 = arith.constant 0 : index
    %5 = vector.load %arg3[%c0_5, %c0_6, %c0_7] : memref<3x1x32xf32, #tpu.memory_space<vmem>>, vector<1x1x32xf32>
    %6 = vector.shape_cast %5 : vector<1x1x32xf32> to vector<1x32xf32>
    %7 = vector.broadcast %6 : vector<1x32xf32> to vector<32x32xf32>
    %8 = arith.mulf %4, %7 : vector<32x32xf32>
    %9 = arith.addf %1, %8 : vector<32x32xf32>
    %c1 = arith.constant 1 : index
    %c0_8 = arith.constant 0 : index
    %c0_9 = arith.constant 0 : index
    %10 = vector.load %arg2[%c1, %c0_8, %c0_9] : memref<3x32x64xbf16, #tpu.memory_space<vmem>>, vector<1x32x64xbf16>
    %11 = vector.shape_cast %10 : vector<1x32x64xbf16> to vector<32x64xbf16>
    %cst_10 = arith.constant dense<0.000000e+00> : vector<32x32xf32>
    %12 = tpu.matmul %11, %0, %cst_10 {dimension_numbers = #tpu.dot_dimension_numbers<[1], [0], [0], [1], [0, 0, 1, 1], [], []>} : vector<32x64xbf16>, vector<64x32xbf16>, vector<32x32xf32> -> vector<32x32xf32>
    %c1_11 = arith.constant 1 : index
    %c0_12 = arith.constant 0 : index
    %c0_13 = arith.constant 0 : index
    %13 = vector.load %arg3[%c1_11, %c0_12, %c0_13] : memref<3x1x32xf32, #tpu.memory_space<vmem>>, vector<1x1x32xf32>
    %14 = vector.shape_cast %13 : vector<1x1x32xf32> to vector<1x32xf32>
    %15 = vector.broadcast %14 : vector<1x32xf32> to vector<32x32xf32>
    %16 = arith.mulf %12, %15 : vector<32x32xf32>
    %17 = arith.addf %9, %16 : vector<32x32xf32>
    %c2 = arith.constant 2 : index
    %c0_14 = arith.constant 0 : index
    %c0_15 = arith.constant 0 : index
    %18 = vector.load %arg2[%c2, %c0_14, %c0_15] : memref<3x32x64xbf16, #tpu.memory_space<vmem>>, vector<1x32x64xbf16>
    %19 = vector.shape_cast %18 : vector<1x32x64xbf16> to vector<32x64xbf16>
    %cst_16 = arith.constant dense<0.000000e+00> : vector<32x32xf32>
    %20 = tpu.matmul %19, %0, %cst_16 {dimension_numbers = #tpu.dot_dimension_numbers<[1], [0], [0], [1], [0, 0, 1, 1], [], []>} : vector<32x64xbf16>, vector<64x32xbf16>, vector<32x32xf32> -> vector<32x32xf32>
    %c2_17 = arith.constant 2 : index
    %c0_18 = arith.constant 0 : index
    %c0_19 = arith.constant 0 : index
    %21 = vector.load %arg3[%c2_17, %c0_18, %c0_19] : memref<3x1x32xf32, #tpu.memory_space<vmem>>, vector<1x1x32xf32>
    %22 = vector.shape_cast %21 : vector<1x1x32xf32> to vector<1x32xf32>
    %23 = vector.broadcast %22 : vector<1x32xf32> to vector<32x32xf32>
    %24 = arith.mulf %20, %23 : vector<32x32xf32>
    %25 = arith.addf %17, %24 : vector<32x32xf32>
    %c0_20 = arith.constant 0 : index
    %c0_21 = arith.constant 0 : index
    %26 = vector.load %arg4[%c0_20, %c0_21] : memref<1x32xf32, #tpu.memory_space<vmem>>, vector<1x32xf32>
    %27 = vector.broadcast %26 : vector<1x32xf32> to vector<32x32xf32>
    %28 = arith.mulf %25, %27 : vector<32x32xf32>
    %c0_22 = arith.constant 0 : index
    %c0_23 = arith.constant 0 : index
    %29 = vector.load %arg5[%c0_22, %c0_23] : memref<1x32xf32, #tpu.memory_space<vmem>>, vector<1x32xf32>
    %30 = vector.broadcast %29 : vector<1x32xf32> to vector<32x32xf32>
    %31 = arith.addf %28, %30 : vector<32x32xf32>
    %cst_24 = arith.constant 0.000000e+00 : f32
    %32 = vector.broadcast %cst_24 : f32 to vector<32x32xf32>
    %33 = arith.maximumf %31, %32 : vector<32x32xf32>
    %cst_25 = arith.constant 6.000000e+00 : f32
    %34 = vector.broadcast %cst_25 : f32 to vector<32x32xf32>
    %35 = arith.minimumf %33, %34 : vector<32x32xf32>
    %36 = arith.truncf %35 : vector<32x32xf32> to vector<32x32xbf16>
    %c0_26 = arith.constant 0 : index
    %c0_27 = arith.constant 0 : index
    %37 = vector.load %arg6[%c0_26, %c0_27] : memref<32x16xbf16, #tpu.memory_space<vmem>>, vector<32x16xbf16>
    %cst_28 = arith.constant dense<0.000000e+00> : vector<32x16xf32>
    %38 = tpu.matmul %36, %37, %cst_28 {dimension_numbers = #tpu.dot_dimension_numbers<[1], [0], [0], [1], [0, 0, 1, 1], [], []>} : vector<32x32xbf16>, vector<32x16xbf16>, vector<32x16xf32> -> vector<32x16xf32>
    %c0_29 = arith.constant 0 : index
    %c0_30 = arith.constant 0 : index
    %39 = vector.load %arg7[%c0_29, %c0_30] : memref<1x16xf32, #tpu.memory_space<vmem>>, vector<1x16xf32>
    %40 = vector.broadcast %39 : vector<1x16xf32> to vector<32x16xf32>
    %41 = arith.mulf %38, %40 : vector<32x16xf32>
    %c0_31 = arith.constant 0 : index
    %c0_32 = arith.constant 0 : index
    %42 = vector.load %arg8[%c0_31, %c0_32] : memref<1x16xf32, #tpu.memory_space<vmem>>, vector<1x16xf32>
    %43 = vector.broadcast %42 : vector<1x16xf32> to vector<32x16xf32>
    %44 = arith.addf %41, %43 : vector<32x16xf32>
    %45 = arith.truncf %44 : vector<32x16xf32> to vector<32x16xbf16>
    %c0_33 = arith.constant 0 : index
    %c0_34 = arith.constant 0 : index
    %46 = vector.load %arg9[%c0_33, %c0_34] : memref<32x16xbf16, #tpu.memory_space<vmem>>, vector<32x16xbf16>
    tpu.vector_store %arg9[%c0_33, %c0_34], %45 {strides = array<i32>} : memref<32x16xbf16, #tpu.memory_space<vmem>>, vector<32x16xbf16>,
    return
  }
  func.func @transform_0(%arg0: i32) -> (i32, i32) {
    %c0_i32 = arith.constant 0 : i32
    %c0_i32_0 = arith.constant 0 : i32
    %c0_i32_1 = arith.constant 0 : i32
    return %c0_i32, %c0_i32_0 : i32, i32
  }
  func.func @transform_1(%arg0: i32) -> (i32, i32, i32) {
    %c0_i32 = arith.constant 0 : i32
    %c0_i32_0 = arith.constant 0 : i32
    %c0_i32_1 = arith.constant 0 : i32
    %c0_i32_2 = arith.constant 0 : i32
    return %c0_i32, %c0_i32_0, %c0_i32_1 : i32, i32, i32
  }
  func.func @transform_2(%arg0: i32) -> (i32, i32, i32) {
    %c0_i32 = arith.constant 0 : i32
    %c0_i32_0 = arith.constant 0 : i32
    %c0_i32_1 = arith.constant 0 : i32
    %c0_i32_2 = arith.constant 0 : i32
    return %c0_i32, %c0_i32_0, %c0_i32_1 : i32, i32, i32
  }
  func.func @transform_3(%arg0: i32) -> (i32, i32) {
    %c0_i32 = arith.constant 0 : i32
    %c0_i32_0 = arith.constant 0 : i32
    %c0_i32_1 = arith.constant 0 : i32
    return %c0_i32, %c0_i32_0 : i32, i32
  }
  func.func @transform_4(%arg0: i32) -> (i32, i32) {
    %c0_i32 = arith.constant 0 : i32
    %c0_i32_0 = arith.constant 0 : i32
    %c0_i32_1 = arith.constant 0 : i32
    return %c0_i32, %c0_i32_0 : i32, i32
  }
  func.func @transform_5(%arg0: i32) -> (i32, i32) {
    %c0_i32 = arith.constant 0 : i32
    %c0_i32_0 = arith.constant 0 : i32
    %c0_i32_1 = arith.constant 0 : i32
    return %c0_i32, %c0_i32_0 : i32, i32
  }
  func.func @transform_6(%arg0: i32) -> (i32, i32) {
    %c0_i32 = arith.constant 0 : i32
    %c0_i32_0 = arith.constant 0 : i32
    %c0_i32_1 = arith.constant 0 : i32
    return %c0_i32, %c0_i32_0 : i32, i32
  }
  func.func @transform_7(%arg0: i32) -> (i32, i32) {
    %c0_i32 = arith.constant 0 : i32
    %c0_i32_0 = arith.constant 0 : i32
    %c0_i32_1 = arith.constant 0 : i32
    return %c0_i32, %c0_i32_0 : i32, i32
  }
  func.func @transform_8(%arg0: i32) -> (i32, i32) {
    %c0_i32 = arith.constant 0 : i32
    %c0_i32_0 = arith.constant 0 : i32
    %c0_i32_1 = arith.constant 0 : i32
    return %c0_i32, %c0_i32_0 : i32, i32
  }
}

module attributes {stable_mosaic.version = 11 : i64} {
  func.func @_inverted_residual_kernel(%arg0: i32, %arg1: memref<32x16xbf16, #tpu.memory_space<vmem>>, %arg2: memref<16x96xbf16, #tpu.memory_space<vmem>>, %arg3: memref<1x96xf32, #tpu.memory_space<vmem>>, %arg4: memref<1x96xf32, #tpu.memory_space<vmem>>, %arg5: memref<3x16x32xbf16, #tpu.memory_space<vmem>>, %arg6: memref<3x1x96xf32, #tpu.memory_space<vmem>>, %arg7: memref<1x96xf32, #tpu.memory_space<vmem>>, %arg8: memref<1x96xf32, #tpu.memory_space<vmem>>, %arg9: memref<96x32xbf16, #tpu.memory_space<vmem>>, %arg10: memref<1x32xf32, #tpu.memory_space<vmem>>, %arg11: memref<1x32xf32, #tpu.memory_space<vmem>>, %arg12: memref<16x32xbf16, #tpu.memory_space<vmem>>) attributes {dimension_semantics = [#tpu.dimension_semantics<arbitrary>], iteration_bounds = array<i64: 1>, scalar_prefetch = 0 : i64, scratch_operands = 0 : i64, tpu.core_type = #tpu.core_type<tc>, window_params = [{pipeline_mode = #tpu.pipeline_mode<synchronous>, transform_indices = @transform_0, window_bounds = array<i64: 32, 16>}, {pipeline_mode = #tpu.pipeline_mode<synchronous>, transform_indices = @transform_1, window_bounds = array<i64: 16, 96>}, {pipeline_mode = #tpu.pipeline_mode<synchronous>, transform_indices = @transform_2, window_bounds = array<i64: 1, 96>}, {pipeline_mode = #tpu.pipeline_mode<synchronous>, transform_indices = @transform_3, window_bounds = array<i64: 1, 96>}, {pipeline_mode = #tpu.pipeline_mode<synchronous>, transform_indices = @transform_4, window_bounds = array<i64: 3, 16, 32>}, {pipeline_mode = #tpu.pipeline_mode<synchronous>, transform_indices = @transform_5, window_bounds = array<i64: 3, 1, 96>}, {pipeline_mode = #tpu.pipeline_mode<synchronous>, transform_indices = @transform_6, window_bounds = array<i64: 1, 96>}, {pipeline_mode = #tpu.pipeline_mode<synchronous>, transform_indices = @transform_7, window_bounds = array<i64: 1, 96>}, {pipeline_mode = #tpu.pipeline_mode<synchronous>, transform_indices = @transform_8, window_bounds = array<i64: 96, 32>}, {pipeline_mode = #tpu.pipeline_mode<synchronous>, transform_indices = @transform_9, window_bounds = array<i64: 1, 32>}, {pipeline_mode = #tpu.pipeline_mode<synchronous>, transform_indices = @transform_10, window_bounds = array<i64: 1, 32>}, {pipeline_mode = #tpu.pipeline_mode<synchronous>, transform_indices = @transform_11, window_bounds = array<i64: 16, 32>}]} {
    %c0 = arith.constant 0 : index
    %c0_0 = arith.constant 0 : index
    %0 = vector.load %arg1[%c0, %c0_0] : memref<32x16xbf16, #tpu.memory_space<vmem>>, vector<32x16xbf16>
    %c0_1 = arith.constant 0 : index
    %c0_2 = arith.constant 0 : index
    %1 = vector.load %arg2[%c0_1, %c0_2] : memref<16x96xbf16, #tpu.memory_space<vmem>>, vector<16x96xbf16>
    %cst = arith.constant dense<0.000000e+00> : vector<32x96xf32>
    %2 = tpu.matmul %0, %1, %cst {dimension_numbers = #tpu.dot_dimension_numbers<[1], [0], [0], [1], [0, 0, 1, 1], [], []>} : vector<32x16xbf16>, vector<16x96xbf16>, vector<32x96xf32> -> vector<32x96xf32>
    %c0_3 = arith.constant 0 : index
    %c0_4 = arith.constant 0 : index
    %3 = vector.load %arg3[%c0_3, %c0_4] : memref<1x96xf32, #tpu.memory_space<vmem>>, vector<1x96xf32>
    %4 = vector.broadcast %3 : vector<1x96xf32> to vector<32x96xf32>
    %5 = arith.mulf %2, %4 : vector<32x96xf32>
    %c0_5 = arith.constant 0 : index
    %c0_6 = arith.constant 0 : index
    %6 = vector.load %arg4[%c0_5, %c0_6] : memref<1x96xf32, #tpu.memory_space<vmem>>, vector<1x96xf32>
    %7 = vector.broadcast %6 : vector<1x96xf32> to vector<32x96xf32>
    %8 = arith.addf %5, %7 : vector<32x96xf32>
    %cst_7 = arith.constant 0.000000e+00 : f32
    %9 = vector.broadcast %cst_7 : f32 to vector<32x96xf32>
    %10 = arith.maximumf %8, %9 : vector<32x96xf32>
    %cst_8 = arith.constant 6.000000e+00 : f32
    %11 = vector.broadcast %cst_8 : f32 to vector<32x96xf32>
    %12 = arith.minimumf %10, %11 : vector<32x96xf32>
    %13 = arith.truncf %12 : vector<32x96xf32> to vector<32x96xbf16>
    %cst_9 = arith.constant 0.000000e+00 : f32
    %14 = vector.broadcast %cst_9 : f32 to vector<16x96xf32>
    %c0_10 = arith.constant 0 : index
    %c0_11 = arith.constant 0 : index
    %c0_12 = arith.constant 0 : index
    %15 = vector.load %arg5[%c0_10, %c0_11, %c0_12] : memref<3x16x32xbf16, #tpu.memory_space<vmem>>, vector<1x16x32xbf16>
    %16 = vector.shape_cast %15 : vector<1x16x32xbf16> to vector<16x32xbf16>
    %cst_13 = arith.constant dense<0.000000e+00> : vector<16x96xf32>
    %17 = tpu.matmul %16, %13, %cst_13 {dimension_numbers = #tpu.dot_dimension_numbers<[1], [0], [0], [1], [0, 0, 1, 1], [], []>} : vector<16x32xbf16>, vector<32x96xbf16>, vector<16x96xf32> -> vector<16x96xf32>
    %c0_14 = arith.constant 0 : index
    %c0_15 = arith.constant 0 : index
    %c0_16 = arith.constant 0 : index
    %18 = vector.load %arg6[%c0_14, %c0_15, %c0_16] : memref<3x1x96xf32, #tpu.memory_space<vmem>>, vector<1x1x96xf32>
    %19 = vector.shape_cast %18 : vector<1x1x96xf32> to vector<1x96xf32>
    %20 = vector.broadcast %19 : vector<1x96xf32> to vector<16x96xf32>
    %21 = arith.mulf %17, %20 : vector<16x96xf32>
    %22 = arith.addf %14, %21 : vector<16x96xf32>
    %c1 = arith.constant 1 : index
    %c0_17 = arith.constant 0 : index
    %c0_18 = arith.constant 0 : index
    %23 = vector.load %arg5[%c1, %c0_17, %c0_18] : memref<3x16x32xbf16, #tpu.memory_space<vmem>>, vector<1x16x32xbf16>
    %24 = vector.shape_cast %23 : vector<1x16x32xbf16> to vector<16x32xbf16>
    %cst_19 = arith.constant dense<0.000000e+00> : vector<16x96xf32>
    %25 = tpu.matmul %24, %13, %cst_19 {dimension_numbers = #tpu.dot_dimension_numbers<[1], [0], [0], [1], [0, 0, 1, 1], [], []>} : vector<16x32xbf16>, vector<32x96xbf16>, vector<16x96xf32> -> vector<16x96xf32>
    %c1_20 = arith.constant 1 : index
    %c0_21 = arith.constant 0 : index
    %c0_22 = arith.constant 0 : index
    %26 = vector.load %arg6[%c1_20, %c0_21, %c0_22] : memref<3x1x96xf32, #tpu.memory_space<vmem>>, vector<1x1x96xf32>
    %27 = vector.shape_cast %26 : vector<1x1x96xf32> to vector<1x96xf32>
    %28 = vector.broadcast %27 : vector<1x96xf32> to vector<16x96xf32>
    %29 = arith.mulf %25, %28 : vector<16x96xf32>
    %30 = arith.addf %22, %29 : vector<16x96xf32>
    %c2 = arith.constant 2 : index
    %c0_23 = arith.constant 0 : index
    %c0_24 = arith.constant 0 : index
    %31 = vector.load %arg5[%c2, %c0_23, %c0_24] : memref<3x16x32xbf16, #tpu.memory_space<vmem>>, vector<1x16x32xbf16>
    %32 = vector.shape_cast %31 : vector<1x16x32xbf16> to vector<16x32xbf16>
    %cst_25 = arith.constant dense<0.000000e+00> : vector<16x96xf32>
    %33 = tpu.matmul %32, %13, %cst_25 {dimension_numbers = #tpu.dot_dimension_numbers<[1], [0], [0], [1], [0, 0, 1, 1], [], []>} : vector<16x32xbf16>, vector<32x96xbf16>, vector<16x96xf32> -> vector<16x96xf32>
    %c2_26 = arith.constant 2 : index
    %c0_27 = arith.constant 0 : index
    %c0_28 = arith.constant 0 : index
    %34 = vector.load %arg6[%c2_26, %c0_27, %c0_28] : memref<3x1x96xf32, #tpu.memory_space<vmem>>, vector<1x1x96xf32>
    %35 = vector.shape_cast %34 : vector<1x1x96xf32> to vector<1x96xf32>
    %36 = vector.broadcast %35 : vector<1x96xf32> to vector<16x96xf32>
    %37 = arith.mulf %33, %36 : vector<16x96xf32>
    %38 = arith.addf %30, %37 : vector<16x96xf32>
    %c0_29 = arith.constant 0 : index
    %c0_30 = arith.constant 0 : index
    %39 = vector.load %arg7[%c0_29, %c0_30] : memref<1x96xf32, #tpu.memory_space<vmem>>, vector<1x96xf32>
    %40 = vector.broadcast %39 : vector<1x96xf32> to vector<16x96xf32>
    %41 = arith.mulf %38, %40 : vector<16x96xf32>
    %c0_31 = arith.constant 0 : index
    %c0_32 = arith.constant 0 : index
    %42 = vector.load %arg8[%c0_31, %c0_32] : memref<1x96xf32, #tpu.memory_space<vmem>>, vector<1x96xf32>
    %43 = vector.broadcast %42 : vector<1x96xf32> to vector<16x96xf32>
    %44 = arith.addf %41, %43 : vector<16x96xf32>
    %cst_33 = arith.constant 0.000000e+00 : f32
    %45 = vector.broadcast %cst_33 : f32 to vector<16x96xf32>
    %46 = arith.maximumf %44, %45 : vector<16x96xf32>
    %cst_34 = arith.constant 6.000000e+00 : f32
    %47 = vector.broadcast %cst_34 : f32 to vector<16x96xf32>
    %48 = arith.minimumf %46, %47 : vector<16x96xf32>
    %49 = arith.truncf %48 : vector<16x96xf32> to vector<16x96xbf16>
    %c0_35 = arith.constant 0 : index
    %c0_36 = arith.constant 0 : index
    %50 = vector.load %arg9[%c0_35, %c0_36] : memref<96x32xbf16, #tpu.memory_space<vmem>>, vector<96x32xbf16>
    %cst_37 = arith.constant dense<0.000000e+00> : vector<16x32xf32>
    %51 = tpu.matmul %49, %50, %cst_37 {dimension_numbers = #tpu.dot_dimension_numbers<[1], [0], [0], [1], [0, 0, 1, 1], [], []>} : vector<16x96xbf16>, vector<96x32xbf16>, vector<16x32xf32> -> vector<16x32xf32>
    %c0_38 = arith.constant 0 : index
    %c0_39 = arith.constant 0 : index
    %52 = vector.load %arg10[%c0_38, %c0_39] : memref<1x32xf32, #tpu.memory_space<vmem>>, vector<1x32xf32>
    %53 = vector.broadcast %52 : vector<1x32xf32> to vector<16x32xf32>
    %54 = arith.mulf %51, %53 : vector<16x32xf32>
    %c0_40 = arith.constant 0 : index
    %c0_41 = arith.constant 0 : index
    %55 = vector.load %arg11[%c0_40, %c0_41] : memref<1x32xf32, #tpu.memory_space<vmem>>, vector<1x32xf32>
    %56 = vector.broadcast %55 : vector<1x32xf32> to vector<16x32xf32>
    %57 = arith.addf %54, %56 : vector<16x32xf32>
    %58 = arith.truncf %57 : vector<16x32xf32> to vector<16x32xbf16>
    %c0_42 = arith.constant 0 : index
    %c0_43 = arith.constant 0 : index
    %59 = vector.load %arg12[%c0_42, %c0_43] : memref<16x32xbf16, #tpu.memory_space<vmem>>, vector<16x32xbf16>
    tpu.vector_store %arg12[%c0_42, %c0_43], %58 {strides = array<i32>} : memref<16x32xbf16, #tpu.memory_space<vmem>>, vector<16x32xbf16>,
    return
  }
  func.func @transform_0(%arg0: i32) -> (i32, i32) {
    %c0_i32 = arith.constant 0 : i32
    %c0_i32_0 = arith.constant 0 : i32
    %c0_i32_1 = arith.constant 0 : i32
    return %c0_i32, %c0_i32_0 : i32, i32
  }
  func.func @transform_1(%arg0: i32) -> (i32, i32) {
    %c0_i32 = arith.constant 0 : i32
    %c0_i32_0 = arith.constant 0 : i32
    %c0_i32_1 = arith.constant 0 : i32
    return %c0_i32, %c0_i32_0 : i32, i32
  }
  func.func @transform_2(%arg0: i32) -> (i32, i32) {
    %c0_i32 = arith.constant 0 : i32
    %c0_i32_0 = arith.constant 0 : i32
    %c0_i32_1 = arith.constant 0 : i32
    return %c0_i32, %c0_i32_0 : i32, i32
  }
  func.func @transform_3(%arg0: i32) -> (i32, i32) {
    %c0_i32 = arith.constant 0 : i32
    %c0_i32_0 = arith.constant 0 : i32
    %c0_i32_1 = arith.constant 0 : i32
    return %c0_i32, %c0_i32_0 : i32, i32
  }
  func.func @transform_4(%arg0: i32) -> (i32, i32, i32) {
    %c0_i32 = arith.constant 0 : i32
    %c0_i32_0 = arith.constant 0 : i32
    %c0_i32_1 = arith.constant 0 : i32
    %c0_i32_2 = arith.constant 0 : i32
    return %c0_i32, %c0_i32_0, %c0_i32_1 : i32, i32, i32
  }
  func.func @transform_5(%arg0: i32) -> (i32, i32, i32) {
    %c0_i32 = arith.constant 0 : i32
    %c0_i32_0 = arith.constant 0 : i32
    %c0_i32_1 = arith.constant 0 : i32
    %c0_i32_2 = arith.constant 0 : i32
    return %c0_i32, %c0_i32_0, %c0_i32_1 : i32, i32, i32
  }
  func.func @transform_6(%arg0: i32) -> (i32, i32) {
    %c0_i32 = arith.constant 0 : i32
    %c0_i32_0 = arith.constant 0 : i32
    %c0_i32_1 = arith.constant 0 : i32
    return %c0_i32, %c0_i32_0 : i32, i32
  }
  func.func @transform_7(%arg0: i32) -> (i32, i32) {
    %c0_i32 = arith.constant 0 : i32
    %c0_i32_0 = arith.constant 0 : i32
    %c0_i32_1 = arith.constant 0 : i32
    return %c0_i32, %c0_i32_0 : i32, i32
  }
  func.func @transform_8(%arg0: i32) -> (i32, i32) {
    %c0_i32 = arith.constant 0 : i32
    %c0_i32_0 = arith.constant 0 : i32
    %c0_i32_1 = arith.constant 0 : i32
    return %c0_i32, %c0_i32_0 : i32, i32
  }
  func.func @transform_9(%arg0: i32) -> (i32, i32) {
    %c0_i32 = arith.constant 0 : i32
    %c0_i32_0 = arith.constant 0 : i32
    %c0_i32_1 = arith.constant 0 : i32
    return %c0_i32, %c0_i32_0 : i32, i32
  }
  func.func @transform_10(%arg0: i32) -> (i32, i32) {
    %c0_i32 = arith.constant 0 : i32
    %c0_i32_0 = arith.constant 0 : i32
    %c0_i32_1 = arith.constant 0 : i32
    return %c0_i32, %c0_i32_0 : i32, i32
  }
  func.func @transform_11(%arg0: i32) -> (i32, i32) {
    %c0_i32 = arith.constant 0 : i32
    %c0_i32_0 = arith.constant 0 : i32
    %c0_i32_1 = arith.constant 0 : i32
    return %c0_i32, %c0_i32_0 : i32, i32
  }
}

module attributes {stable_mosaic.version = 11 : i64} {
  func.func @_inverted_residual_kernel(%arg0: i32, %arg1: memref<16x32xbf16, #tpu.memory_space<vmem>>, %arg2: memref<32x192xbf16, #tpu.memory_space<vmem>>, %arg3: memref<1x192xf32, #tpu.memory_space<vmem>>, %arg4: memref<1x192xf32, #tpu.memory_space<vmem>>, %arg5: memref<3x16x16xbf16, #tpu.memory_space<vmem>>, %arg6: memref<3x1x192xf32, #tpu.memory_space<vmem>>, %arg7: memref<1x192xf32, #tpu.memory_space<vmem>>, %arg8: memref<1x192xf32, #tpu.memory_space<vmem>>, %arg9: memref<192x32xbf16, #tpu.memory_space<vmem>>, %arg10: memref<1x32xf32, #tpu.memory_space<vmem>>, %arg11: memref<1x32xf32, #tpu.memory_space<vmem>>, %arg12: memref<16x32xbf16, #tpu.memory_space<vmem>>) attributes {dimension_semantics = [#tpu.dimension_semantics<arbitrary>], iteration_bounds = array<i64: 1>, scalar_prefetch = 0 : i64, scratch_operands = 0 : i64, tpu.core_type = #tpu.core_type<tc>, window_params = [{pipeline_mode = #tpu.pipeline_mode<synchronous>, transform_indices = @transform_0, window_bounds = array<i64: 16, 32>}, {pipeline_mode = #tpu.pipeline_mode<synchronous>, transform_indices = @transform_1, window_bounds = array<i64: 32, 192>}, {pipeline_mode = #tpu.pipeline_mode<synchronous>, transform_indices = @transform_2, window_bounds = array<i64: 1, 192>}, {pipeline_mode = #tpu.pipeline_mode<synchronous>, transform_indices = @transform_3, window_bounds = array<i64: 1, 192>}, {pipeline_mode = #tpu.pipeline_mode<synchronous>, transform_indices = @transform_4, window_bounds = array<i64: 3, 16, 16>}, {pipeline_mode = #tpu.pipeline_mode<synchronous>, transform_indices = @transform_5, window_bounds = array<i64: 3, 1, 192>}, {pipeline_mode = #tpu.pipeline_mode<synchronous>, transform_indices = @transform_6, window_bounds = array<i64: 1, 192>}, {pipeline_mode = #tpu.pipeline_mode<synchronous>, transform_indices = @transform_7, window_bounds = array<i64: 1, 192>}, {pipeline_mode = #tpu.pipeline_mode<synchronous>, transform_indices = @transform_8, window_bounds = array<i64: 192, 32>}, {pipeline_mode = #tpu.pipeline_mode<synchronous>, transform_indices = @transform_9, window_bounds = array<i64: 1, 32>}, {pipeline_mode = #tpu.pipeline_mode<synchronous>, transform_indices = @transform_10, window_bounds = array<i64: 1, 32>}, {pipeline_mode = #tpu.pipeline_mode<synchronous>, transform_indices = @transform_11, window_bounds = array<i64: 16, 32>}]} {
    %c0 = arith.constant 0 : index
    %c0_0 = arith.constant 0 : index
    %0 = vector.load %arg1[%c0, %c0_0] : memref<16x32xbf16, #tpu.memory_space<vmem>>, vector<16x32xbf16>
    %c0_1 = arith.constant 0 : index
    %c0_2 = arith.constant 0 : index
    %1 = vector.load %arg2[%c0_1, %c0_2] : memref<32x192xbf16, #tpu.memory_space<vmem>>, vector<32x192xbf16>
    %cst = arith.constant dense<0.000000e+00> : vector<16x192xf32>
    %2 = tpu.matmul %0, %1, %cst {dimension_numbers = #tpu.dot_dimension_numbers<[1], [0], [0], [1], [0, 0, 1, 1], [], []>} : vector<16x32xbf16>, vector<32x192xbf16>, vector<16x192xf32> -> vector<16x192xf32>
    %c0_3 = arith.constant 0 : index
    %c0_4 = arith.constant 0 : index
    %3 = vector.load %arg3[%c0_3, %c0_4] : memref<1x192xf32, #tpu.memory_space<vmem>>, vector<1x192xf32>
    %4 = vector.broadcast %3 : vector<1x192xf32> to vector<16x192xf32>
    %5 = arith.mulf %2, %4 : vector<16x192xf32>
    %c0_5 = arith.constant 0 : index
    %c0_6 = arith.constant 0 : index
    %6 = vector.load %arg4[%c0_5, %c0_6] : memref<1x192xf32, #tpu.memory_space<vmem>>, vector<1x192xf32>
    %7 = vector.broadcast %6 : vector<1x192xf32> to vector<16x192xf32>
    %8 = arith.addf %5, %7 : vector<16x192xf32>
    %cst_7 = arith.constant 0.000000e+00 : f32
    %9 = vector.broadcast %cst_7 : f32 to vector<16x192xf32>
    %10 = arith.maximumf %8, %9 : vector<16x192xf32>
    %cst_8 = arith.constant 6.000000e+00 : f32
    %11 = vector.broadcast %cst_8 : f32 to vector<16x192xf32>
    %12 = arith.minimumf %10, %11 : vector<16x192xf32>
    %13 = arith.truncf %12 : vector<16x192xf32> to vector<16x192xbf16>
    %cst_9 = arith.constant 0.000000e+00 : f32
    %14 = vector.broadcast %cst_9 : f32 to vector<16x192xf32>
    %c0_10 = arith.constant 0 : index
    %c0_11 = arith.constant 0 : index
    %c0_12 = arith.constant 0 : index
    %15 = vector.load %arg5[%c0_10, %c0_11, %c0_12] : memref<3x16x16xbf16, #tpu.memory_space<vmem>>, vector<1x16x16xbf16>
    %16 = vector.shape_cast %15 : vector<1x16x16xbf16> to vector<16x16xbf16>
    %cst_13 = arith.constant dense<0.000000e+00> : vector<16x192xf32>
    %17 = tpu.matmul %16, %13, %cst_13 {dimension_numbers = #tpu.dot_dimension_numbers<[1], [0], [0], [1], [0, 0, 1, 1], [], []>} : vector<16x16xbf16>, vector<16x192xbf16>, vector<16x192xf32> -> vector<16x192xf32>
    %c0_14 = arith.constant 0 : index
    %c0_15 = arith.constant 0 : index
    %c0_16 = arith.constant 0 : index
    %18 = vector.load %arg6[%c0_14, %c0_15, %c0_16] : memref<3x1x192xf32, #tpu.memory_space<vmem>>, vector<1x1x192xf32>
    %19 = vector.shape_cast %18 : vector<1x1x192xf32> to vector<1x192xf32>
    %20 = vector.broadcast %19 : vector<1x192xf32> to vector<16x192xf32>
    %21 = arith.mulf %17, %20 : vector<16x192xf32>
    %22 = arith.addf %14, %21 : vector<16x192xf32>
    %c1 = arith.constant 1 : index
    %c0_17 = arith.constant 0 : index
    %c0_18 = arith.constant 0 : index
    %23 = vector.load %arg5[%c1, %c0_17, %c0_18] : memref<3x16x16xbf16, #tpu.memory_space<vmem>>, vector<1x16x16xbf16>
    %24 = vector.shape_cast %23 : vector<1x16x16xbf16> to vector<16x16xbf16>
    %cst_19 = arith.constant dense<0.000000e+00> : vector<16x192xf32>
    %25 = tpu.matmul %24, %13, %cst_19 {dimension_numbers = #tpu.dot_dimension_numbers<[1], [0], [0], [1], [0, 0, 1, 1], [], []>} : vector<16x16xbf16>, vector<16x192xbf16>, vector<16x192xf32> -> vector<16x192xf32>
    %c1_20 = arith.constant 1 : index
    %c0_21 = arith.constant 0 : index
    %c0_22 = arith.constant 0 : index
    %26 = vector.load %arg6[%c1_20, %c0_21, %c0_22] : memref<3x1x192xf32, #tpu.memory_space<vmem>>, vector<1x1x192xf32>
    %27 = vector.shape_cast %26 : vector<1x1x192xf32> to vector<1x192xf32>
    %28 = vector.broadcast %27 : vector<1x192xf32> to vector<16x192xf32>
    %29 = arith.mulf %25, %28 : vector<16x192xf32>
    %30 = arith.addf %22, %29 : vector<16x192xf32>
    %c2 = arith.constant 2 : index
    %c0_23 = arith.constant 0 : index
    %c0_24 = arith.constant 0 : index
    %31 = vector.load %arg5[%c2, %c0_23, %c0_24] : memref<3x16x16xbf16, #tpu.memory_space<vmem>>, vector<1x16x16xbf16>
    %32 = vector.shape_cast %31 : vector<1x16x16xbf16> to vector<16x16xbf16>
    %cst_25 = arith.constant dense<0.000000e+00> : vector<16x192xf32>
    %33 = tpu.matmul %32, %13, %cst_25 {dimension_numbers = #tpu.dot_dimension_numbers<[1], [0], [0], [1], [0, 0, 1, 1], [], []>} : vector<16x16xbf16>, vector<16x192xbf16>, vector<16x192xf32> -> vector<16x192xf32>
    %c2_26 = arith.constant 2 : index
    %c0_27 = arith.constant 0 : index
    %c0_28 = arith.constant 0 : index
    %34 = vector.load %arg6[%c2_26, %c0_27, %c0_28] : memref<3x1x192xf32, #tpu.memory_space<vmem>>, vector<1x1x192xf32>
    %35 = vector.shape_cast %34 : vector<1x1x192xf32> to vector<1x192xf32>
    %36 = vector.broadcast %35 : vector<1x192xf32> to vector<16x192xf32>
    %37 = arith.mulf %33, %36 : vector<16x192xf32>
    %38 = arith.addf %30, %37 : vector<16x192xf32>
    %c0_29 = arith.constant 0 : index
    %c0_30 = arith.constant 0 : index
    %39 = vector.load %arg7[%c0_29, %c0_30] : memref<1x192xf32, #tpu.memory_space<vmem>>, vector<1x192xf32>
    %40 = vector.broadcast %39 : vector<1x192xf32> to vector<16x192xf32>
    %41 = arith.mulf %38, %40 : vector<16x192xf32>
    %c0_31 = arith.constant 0 : index
    %c0_32 = arith.constant 0 : index
    %42 = vector.load %arg8[%c0_31, %c0_32] : memref<1x192xf32, #tpu.memory_space<vmem>>, vector<1x192xf32>
    %43 = vector.broadcast %42 : vector<1x192xf32> to vector<16x192xf32>
    %44 = arith.addf %41, %43 : vector<16x192xf32>
    %cst_33 = arith.constant 0.000000e+00 : f32
    %45 = vector.broadcast %cst_33 : f32 to vector<16x192xf32>
    %46 = arith.maximumf %44, %45 : vector<16x192xf32>
    %cst_34 = arith.constant 6.000000e+00 : f32
    %47 = vector.broadcast %cst_34 : f32 to vector<16x192xf32>
    %48 = arith.minimumf %46, %47 : vector<16x192xf32>
    %49 = arith.truncf %48 : vector<16x192xf32> to vector<16x192xbf16>
    %c0_35 = arith.constant 0 : index
    %c0_36 = arith.constant 0 : index
    %50 = vector.load %arg9[%c0_35, %c0_36] : memref<192x32xbf16, #tpu.memory_space<vmem>>, vector<192x32xbf16>
    %cst_37 = arith.constant dense<0.000000e+00> : vector<16x32xf32>
    %51 = tpu.matmul %49, %50, %cst_37 {dimension_numbers = #tpu.dot_dimension_numbers<[1], [0], [0], [1], [0, 0, 1, 1], [], []>} : vector<16x192xbf16>, vector<192x32xbf16>, vector<16x32xf32> -> vector<16x32xf32>
    %c0_38 = arith.constant 0 : index
    %c0_39 = arith.constant 0 : index
    %52 = vector.load %arg10[%c0_38, %c0_39] : memref<1x32xf32, #tpu.memory_space<vmem>>, vector<1x32xf32>
    %53 = vector.broadcast %52 : vector<1x32xf32> to vector<16x32xf32>
    %54 = arith.mulf %51, %53 : vector<16x32xf32>
    %c0_40 = arith.constant 0 : index
    %c0_41 = arith.constant 0 : index
    %55 = vector.load %arg11[%c0_40, %c0_41] : memref<1x32xf32, #tpu.memory_space<vmem>>, vector<1x32xf32>
    %56 = vector.broadcast %55 : vector<1x32xf32> to vector<16x32xf32>
    %57 = arith.addf %54, %56 : vector<16x32xf32>
    %58 = arith.extf %0 : vector<16x32xbf16> to vector<16x32xf32>
    %59 = arith.addf %57, %58 : vector<16x32xf32>
    %60 = arith.truncf %59 : vector<16x32xf32> to vector<16x32xbf16>
    %c0_42 = arith.constant 0 : index
    %c0_43 = arith.constant 0 : index
    %61 = vector.load %arg12[%c0_42, %c0_43] : memref<16x32xbf16, #tpu.memory_space<vmem>>, vector<16x32xbf16>
    tpu.vector_store %arg12[%c0_42, %c0_43], %60 {strides = array<i32>} : memref<16x32xbf16, #tpu.memory_space<vmem>>, vector<16x32xbf16>,
    return
  }
  func.func @transform_0(%arg0: i32) -> (i32, i32) {
    %c0_i32 = arith.constant 0 : i32
    %c0_i32_0 = arith.constant 0 : i32
    %c0_i32_1 = arith.constant 0 : i32
    return %c0_i32, %c0_i32_0 : i32, i32
  }
  func.func @transform_1(%arg0: i32) -> (i32, i32) {
    %c0_i32 = arith.constant 0 : i32
    %c0_i32_0 = arith.constant 0 : i32
    %c0_i32_1 = arith.constant 0 : i32
    return %c0_i32, %c0_i32_0 : i32, i32
  }
  func.func @transform_2(%arg0: i32) -> (i32, i32) {
    %c0_i32 = arith.constant 0 : i32
    %c0_i32_0 = arith.constant 0 : i32
    %c0_i32_1 = arith.constant 0 : i32
    return %c0_i32, %c0_i32_0 : i32, i32
  }
  func.func @transform_3(%arg0: i32) -> (i32, i32) {
    %c0_i32 = arith.constant 0 : i32
    %c0_i32_0 = arith.constant 0 : i32
    %c0_i32_1 = arith.constant 0 : i32
    return %c0_i32, %c0_i32_0 : i32, i32
  }
  func.func @transform_4(%arg0: i32) -> (i32, i32, i32) {
    %c0_i32 = arith.constant 0 : i32
    %c0_i32_0 = arith.constant 0 : i32
    %c0_i32_1 = arith.constant 0 : i32
    %c0_i32_2 = arith.constant 0 : i32
    return %c0_i32, %c0_i32_0, %c0_i32_1 : i32, i32, i32
  }
  func.func @transform_5(%arg0: i32) -> (i32, i32, i32) {
    %c0_i32 = arith.constant 0 : i32
    %c0_i32_0 = arith.constant 0 : i32
    %c0_i32_1 = arith.constant 0 : i32
    %c0_i32_2 = arith.constant 0 : i32
    return %c0_i32, %c0_i32_0, %c0_i32_1 : i32, i32, i32
  }
  func.func @transform_6(%arg0: i32) -> (i32, i32) {
    %c0_i32 = arith.constant 0 : i32
    %c0_i32_0 = arith.constant 0 : i32
    %c0_i32_1 = arith.constant 0 : i32
    return %c0_i32, %c0_i32_0 : i32, i32
  }
  func.func @transform_7(%arg0: i32) -> (i32, i32) {
    %c0_i32 = arith.constant 0 : i32
    %c0_i32_0 = arith.constant 0 : i32
    %c0_i32_1 = arith.constant 0 : i32
    return %c0_i32, %c0_i32_0 : i32, i32
  }
  func.func @transform_8(%arg0: i32) -> (i32, i32) {
    %c0_i32 = arith.constant 0 : i32
    %c0_i32_0 = arith.constant 0 : i32
    %c0_i32_1 = arith.constant 0 : i32
    return %c0_i32, %c0_i32_0 : i32, i32
  }
  func.func @transform_9(%arg0: i32) -> (i32, i32) {
    %c0_i32 = arith.constant 0 : i32
    %c0_i32_0 = arith.constant 0 : i32
    %c0_i32_1 = arith.constant 0 : i32
    return %c0_i32, %c0_i32_0 : i32, i32
  }
  func.func @transform_10(%arg0: i32) -> (i32, i32) {
    %c0_i32 = arith.constant 0 : i32
    %c0_i32_0 = arith.constant 0 : i32
    %c0_i32_1 = arith.constant 0 : i32
    return %c0_i32, %c0_i32_0 : i32, i32
  }
  func.func @transform_11(%arg0: i32) -> (i32, i32) {
    %c0_i32 = arith.constant 0 : i32
    %c0_i32_0 = arith.constant 0 : i32
    %c0_i32_1 = arith.constant 0 : i32
    return %c0_i32, %c0_i32_0 : i32, i32
  }
}

module attributes {stable_mosaic.version = 11 : i64} {
  func.func @_inverted_residual_kernel(%arg0: i32, %arg1: memref<16x32xbf16, #tpu.memory_space<vmem>>, %arg2: memref<32x192xbf16, #tpu.memory_space<vmem>>, %arg3: memref<1x192xf32, #tpu.memory_space<vmem>>, %arg4: memref<1x192xf32, #tpu.memory_space<vmem>>, %arg5: memref<3x8x16xbf16, #tpu.memory_space<vmem>>, %arg6: memref<3x1x192xf32, #tpu.memory_space<vmem>>, %arg7: memref<1x192xf32, #tpu.memory_space<vmem>>, %arg8: memref<1x192xf32, #tpu.memory_space<vmem>>, %arg9: memref<192x64xbf16, #tpu.memory_space<vmem>>, %arg10: memref<1x64xf32, #tpu.memory_space<vmem>>, %arg11: memref<1x64xf32, #tpu.memory_space<vmem>>, %arg12: memref<8x64xbf16, #tpu.memory_space<vmem>>) attributes {dimension_semantics = [#tpu.dimension_semantics<arbitrary>], iteration_bounds = array<i64: 1>, scalar_prefetch = 0 : i64, scratch_operands = 0 : i64, tpu.core_type = #tpu.core_type<tc>, window_params = [{pipeline_mode = #tpu.pipeline_mode<synchronous>, transform_indices = @transform_0, window_bounds = array<i64: 16, 32>}, {pipeline_mode = #tpu.pipeline_mode<synchronous>, transform_indices = @transform_1, window_bounds = array<i64: 32, 192>}, {pipeline_mode = #tpu.pipeline_mode<synchronous>, transform_indices = @transform_2, window_bounds = array<i64: 1, 192>}, {pipeline_mode = #tpu.pipeline_mode<synchronous>, transform_indices = @transform_3, window_bounds = array<i64: 1, 192>}, {pipeline_mode = #tpu.pipeline_mode<synchronous>, transform_indices = @transform_4, window_bounds = array<i64: 3, 8, 16>}, {pipeline_mode = #tpu.pipeline_mode<synchronous>, transform_indices = @transform_5, window_bounds = array<i64: 3, 1, 192>}, {pipeline_mode = #tpu.pipeline_mode<synchronous>, transform_indices = @transform_6, window_bounds = array<i64: 1, 192>}, {pipeline_mode = #tpu.pipeline_mode<synchronous>, transform_indices = @transform_7, window_bounds = array<i64: 1, 192>}, {pipeline_mode = #tpu.pipeline_mode<synchronous>, transform_indices = @transform_8, window_bounds = array<i64: 192, 64>}, {pipeline_mode = #tpu.pipeline_mode<synchronous>, transform_indices = @transform_9, window_bounds = array<i64: 1, 64>}, {pipeline_mode = #tpu.pipeline_mode<synchronous>, transform_indices = @transform_10, window_bounds = array<i64: 1, 64>}, {pipeline_mode = #tpu.pipeline_mode<synchronous>, transform_indices = @transform_11, window_bounds = array<i64: 8, 64>}]} {
    %c0 = arith.constant 0 : index
    %c0_0 = arith.constant 0 : index
    %0 = vector.load %arg1[%c0, %c0_0] : memref<16x32xbf16, #tpu.memory_space<vmem>>, vector<16x32xbf16>
    %c0_1 = arith.constant 0 : index
    %c0_2 = arith.constant 0 : index
    %1 = vector.load %arg2[%c0_1, %c0_2] : memref<32x192xbf16, #tpu.memory_space<vmem>>, vector<32x192xbf16>
    %cst = arith.constant dense<0.000000e+00> : vector<16x192xf32>
    %2 = tpu.matmul %0, %1, %cst {dimension_numbers = #tpu.dot_dimension_numbers<[1], [0], [0], [1], [0, 0, 1, 1], [], []>} : vector<16x32xbf16>, vector<32x192xbf16>, vector<16x192xf32> -> vector<16x192xf32>
    %c0_3 = arith.constant 0 : index
    %c0_4 = arith.constant 0 : index
    %3 = vector.load %arg3[%c0_3, %c0_4] : memref<1x192xf32, #tpu.memory_space<vmem>>, vector<1x192xf32>
    %4 = vector.broadcast %3 : vector<1x192xf32> to vector<16x192xf32>
    %5 = arith.mulf %2, %4 : vector<16x192xf32>
    %c0_5 = arith.constant 0 : index
    %c0_6 = arith.constant 0 : index
    %6 = vector.load %arg4[%c0_5, %c0_6] : memref<1x192xf32, #tpu.memory_space<vmem>>, vector<1x192xf32>
    %7 = vector.broadcast %6 : vector<1x192xf32> to vector<16x192xf32>
    %8 = arith.addf %5, %7 : vector<16x192xf32>
    %cst_7 = arith.constant 0.000000e+00 : f32
    %9 = vector.broadcast %cst_7 : f32 to vector<16x192xf32>
    %10 = arith.maximumf %8, %9 : vector<16x192xf32>
    %cst_8 = arith.constant 6.000000e+00 : f32
    %11 = vector.broadcast %cst_8 : f32 to vector<16x192xf32>
    %12 = arith.minimumf %10, %11 : vector<16x192xf32>
    %13 = arith.truncf %12 : vector<16x192xf32> to vector<16x192xbf16>
    %cst_9 = arith.constant 0.000000e+00 : f32
    %14 = vector.broadcast %cst_9 : f32 to vector<8x192xf32>
    %c0_10 = arith.constant 0 : index
    %c0_11 = arith.constant 0 : index
    %c0_12 = arith.constant 0 : index
    %15 = vector.load %arg5[%c0_10, %c0_11, %c0_12] : memref<3x8x16xbf16, #tpu.memory_space<vmem>>, vector<1x8x16xbf16>
    %16 = vector.shape_cast %15 : vector<1x8x16xbf16> to vector<8x16xbf16>
    %cst_13 = arith.constant dense<0.000000e+00> : vector<8x192xf32>
    %17 = tpu.matmul %16, %13, %cst_13 {dimension_numbers = #tpu.dot_dimension_numbers<[1], [0], [0], [1], [0, 0, 1, 1], [], []>} : vector<8x16xbf16>, vector<16x192xbf16>, vector<8x192xf32> -> vector<8x192xf32>
    %c0_14 = arith.constant 0 : index
    %c0_15 = arith.constant 0 : index
    %c0_16 = arith.constant 0 : index
    %18 = vector.load %arg6[%c0_14, %c0_15, %c0_16] : memref<3x1x192xf32, #tpu.memory_space<vmem>>, vector<1x1x192xf32>
    %19 = vector.shape_cast %18 : vector<1x1x192xf32> to vector<1x192xf32>
    %20 = vector.broadcast %19 : vector<1x192xf32> to vector<8x192xf32>
    %21 = arith.mulf %17, %20 : vector<8x192xf32>
    %22 = arith.addf %14, %21 : vector<8x192xf32>
    %c1 = arith.constant 1 : index
    %c0_17 = arith.constant 0 : index
    %c0_18 = arith.constant 0 : index
    %23 = vector.load %arg5[%c1, %c0_17, %c0_18] : memref<3x8x16xbf16, #tpu.memory_space<vmem>>, vector<1x8x16xbf16>
    %24 = vector.shape_cast %23 : vector<1x8x16xbf16> to vector<8x16xbf16>
    %cst_19 = arith.constant dense<0.000000e+00> : vector<8x192xf32>
    %25 = tpu.matmul %24, %13, %cst_19 {dimension_numbers = #tpu.dot_dimension_numbers<[1], [0], [0], [1], [0, 0, 1, 1], [], []>} : vector<8x16xbf16>, vector<16x192xbf16>, vector<8x192xf32> -> vector<8x192xf32>
    %c1_20 = arith.constant 1 : index
    %c0_21 = arith.constant 0 : index
    %c0_22 = arith.constant 0 : index
    %26 = vector.load %arg6[%c1_20, %c0_21, %c0_22] : memref<3x1x192xf32, #tpu.memory_space<vmem>>, vector<1x1x192xf32>
    %27 = vector.shape_cast %26 : vector<1x1x192xf32> to vector<1x192xf32>
    %28 = vector.broadcast %27 : vector<1x192xf32> to vector<8x192xf32>
    %29 = arith.mulf %25, %28 : vector<8x192xf32>
    %30 = arith.addf %22, %29 : vector<8x192xf32>
    %c2 = arith.constant 2 : index
    %c0_23 = arith.constant 0 : index
    %c0_24 = arith.constant 0 : index
    %31 = vector.load %arg5[%c2, %c0_23, %c0_24] : memref<3x8x16xbf16, #tpu.memory_space<vmem>>, vector<1x8x16xbf16>
    %32 = vector.shape_cast %31 : vector<1x8x16xbf16> to vector<8x16xbf16>
    %cst_25 = arith.constant dense<0.000000e+00> : vector<8x192xf32>
    %33 = tpu.matmul %32, %13, %cst_25 {dimension_numbers = #tpu.dot_dimension_numbers<[1], [0], [0], [1], [0, 0, 1, 1], [], []>} : vector<8x16xbf16>, vector<16x192xbf16>, vector<8x192xf32> -> vector<8x192xf32>
    %c2_26 = arith.constant 2 : index
    %c0_27 = arith.constant 0 : index
    %c0_28 = arith.constant 0 : index
    %34 = vector.load %arg6[%c2_26, %c0_27, %c0_28] : memref<3x1x192xf32, #tpu.memory_space<vmem>>, vector<1x1x192xf32>
    %35 = vector.shape_cast %34 : vector<1x1x192xf32> to vector<1x192xf32>
    %36 = vector.broadcast %35 : vector<1x192xf32> to vector<8x192xf32>
    %37 = arith.mulf %33, %36 : vector<8x192xf32>
    %38 = arith.addf %30, %37 : vector<8x192xf32>
    %c0_29 = arith.constant 0 : index
    %c0_30 = arith.constant 0 : index
    %39 = vector.load %arg7[%c0_29, %c0_30] : memref<1x192xf32, #tpu.memory_space<vmem>>, vector<1x192xf32>
    %40 = vector.broadcast %39 : vector<1x192xf32> to vector<8x192xf32>
    %41 = arith.mulf %38, %40 : vector<8x192xf32>
    %c0_31 = arith.constant 0 : index
    %c0_32 = arith.constant 0 : index
    %42 = vector.load %arg8[%c0_31, %c0_32] : memref<1x192xf32, #tpu.memory_space<vmem>>, vector<1x192xf32>
    %43 = vector.broadcast %42 : vector<1x192xf32> to vector<8x192xf32>
    %44 = arith.addf %41, %43 : vector<8x192xf32>
    %cst_33 = arith.constant 0.000000e+00 : f32
    %45 = vector.broadcast %cst_33 : f32 to vector<8x192xf32>
    %46 = arith.maximumf %44, %45 : vector<8x192xf32>
    %cst_34 = arith.constant 6.000000e+00 : f32
    %47 = vector.broadcast %cst_34 : f32 to vector<8x192xf32>
    %48 = arith.minimumf %46, %47 : vector<8x192xf32>
    %49 = arith.truncf %48 : vector<8x192xf32> to vector<8x192xbf16>
    %c0_35 = arith.constant 0 : index
    %c0_36 = arith.constant 0 : index
    %50 = vector.load %arg9[%c0_35, %c0_36] : memref<192x64xbf16, #tpu.memory_space<vmem>>, vector<192x64xbf16>
    %cst_37 = arith.constant dense<0.000000e+00> : vector<8x64xf32>
    %51 = tpu.matmul %49, %50, %cst_37 {dimension_numbers = #tpu.dot_dimension_numbers<[1], [0], [0], [1], [0, 0, 1, 1], [], []>} : vector<8x192xbf16>, vector<192x64xbf16>, vector<8x64xf32> -> vector<8x64xf32>
    %c0_38 = arith.constant 0 : index
    %c0_39 = arith.constant 0 : index
    %52 = vector.load %arg10[%c0_38, %c0_39] : memref<1x64xf32, #tpu.memory_space<vmem>>, vector<1x64xf32>
    %53 = vector.broadcast %52 : vector<1x64xf32> to vector<8x64xf32>
    %54 = arith.mulf %51, %53 : vector<8x64xf32>
    %c0_40 = arith.constant 0 : index
    %c0_41 = arith.constant 0 : index
    %55 = vector.load %arg11[%c0_40, %c0_41] : memref<1x64xf32, #tpu.memory_space<vmem>>, vector<1x64xf32>
    %56 = vector.broadcast %55 : vector<1x64xf32> to vector<8x64xf32>
    %57 = arith.addf %54, %56 : vector<8x64xf32>
    %58 = arith.truncf %57 : vector<8x64xf32> to vector<8x64xbf16>
    %c0_42 = arith.constant 0 : index
    %c0_43 = arith.constant 0 : index
    %59 = vector.load %arg12[%c0_42, %c0_43] : memref<8x64xbf16, #tpu.memory_space<vmem>>, vector<8x64xbf16>
    tpu.vector_store %arg12[%c0_42, %c0_43], %58 {strides = array<i32>} : memref<8x64xbf16, #tpu.memory_space<vmem>>, vector<8x64xbf16>,
    return
  }
  func.func @transform_0(%arg0: i32) -> (i32, i32) {
    %c0_i32 = arith.constant 0 : i32
    %c0_i32_0 = arith.constant 0 : i32
    %c0_i32_1 = arith.constant 0 : i32
    return %c0_i32, %c0_i32_0 : i32, i32
  }
  func.func @transform_1(%arg0: i32) -> (i32, i32) {
    %c0_i32 = arith.constant 0 : i32
    %c0_i32_0 = arith.constant 0 : i32
    %c0_i32_1 = arith.constant 0 : i32
    return %c0_i32, %c0_i32_0 : i32, i32
  }
  func.func @transform_2(%arg0: i32) -> (i32, i32) {
    %c0_i32 = arith.constant 0 : i32
    %c0_i32_0 = arith.constant 0 : i32
    %c0_i32_1 = arith.constant 0 : i32
    return %c0_i32, %c0_i32_0 : i32, i32
  }
  func.func @transform_3(%arg0: i32) -> (i32, i32) {
    %c0_i32 = arith.constant 0 : i32
    %c0_i32_0 = arith.constant 0 : i32
    %c0_i32_1 = arith.constant 0 : i32
    return %c0_i32, %c0_i32_0 : i32, i32
  }
  func.func @transform_4(%arg0: i32) -> (i32, i32, i32) {
    %c0_i32 = arith.constant 0 : i32
    %c0_i32_0 = arith.constant 0 : i32
    %c0_i32_1 = arith.constant 0 : i32
    %c0_i32_2 = arith.constant 0 : i32
    return %c0_i32, %c0_i32_0, %c0_i32_1 : i32, i32, i32
  }
  func.func @transform_5(%arg0: i32) -> (i32, i32, i32) {
    %c0_i32 = arith.constant 0 : i32
    %c0_i32_0 = arith.constant 0 : i32
    %c0_i32_1 = arith.constant 0 : i32
    %c0_i32_2 = arith.constant 0 : i32
    return %c0_i32, %c0_i32_0, %c0_i32_1 : i32, i32, i32
  }
  func.func @transform_6(%arg0: i32) -> (i32, i32) {
    %c0_i32 = arith.constant 0 : i32
    %c0_i32_0 = arith.constant 0 : i32
    %c0_i32_1 = arith.constant 0 : i32
    return %c0_i32, %c0_i32_0 : i32, i32
  }
  func.func @transform_7(%arg0: i32) -> (i32, i32) {
    %c0_i32 = arith.constant 0 : i32
    %c0_i32_0 = arith.constant 0 : i32
    %c0_i32_1 = arith.constant 0 : i32
    return %c0_i32, %c0_i32_0 : i32, i32
  }
  func.func @transform_8(%arg0: i32) -> (i32, i32) {
    %c0_i32 = arith.constant 0 : i32
    %c0_i32_0 = arith.constant 0 : i32
    %c0_i32_1 = arith.constant 0 : i32
    return %c0_i32, %c0_i32_0 : i32, i32
  }
  func.func @transform_9(%arg0: i32) -> (i32, i32) {
    %c0_i32 = arith.constant 0 : i32
    %c0_i32_0 = arith.constant 0 : i32
    %c0_i32_1 = arith.constant 0 : i32
    return %c0_i32, %c0_i32_0 : i32, i32
  }
  func.func @transform_10(%arg0: i32) -> (i32, i32) {
    %c0_i32 = arith.constant 0 : i32
    %c0_i32_0 = arith.constant 0 : i32
    %c0_i32_1 = arith.constant 0 : i32
    return %c0_i32, %c0_i32_0 : i32, i32
  }
  func.func @transform_11(%arg0: i32) -> (i32, i32) {
    %c0_i32 = arith.constant 0 : i32
    %c0_i32_0 = arith.constant 0 : i32
    %c0_i32_1 = arith.constant 0 : i32
    return %c0_i32, %c0_i32_0 : i32, i32
  }
}

module attributes {stable_mosaic.version = 11 : i64} {
  func.func @_inverted_residual_kernel(%arg0: i32, %arg1: memref<8x64xbf16, #tpu.memory_space<vmem>>, %arg2: memref<64x384xbf16, #tpu.memory_space<vmem>>, %arg3: memref<1x384xf32, #tpu.memory_space<vmem>>, %arg4: memref<1x384xf32, #tpu.memory_space<vmem>>, %arg5: memref<3x8x8xbf16, #tpu.memory_space<vmem>>, %arg6: memref<3x1x384xf32, #tpu.memory_space<vmem>>, %arg7: memref<1x384xf32, #tpu.memory_space<vmem>>, %arg8: memref<1x384xf32, #tpu.memory_space<vmem>>, %arg9: memref<384x64xbf16, #tpu.memory_space<vmem>>, %arg10: memref<1x64xf32, #tpu.memory_space<vmem>>, %arg11: memref<1x64xf32, #tpu.memory_space<vmem>>, %arg12: memref<8x64xbf16, #tpu.memory_space<vmem>>) attributes {dimension_semantics = [#tpu.dimension_semantics<arbitrary>], iteration_bounds = array<i64: 1>, scalar_prefetch = 0 : i64, scratch_operands = 0 : i64, tpu.core_type = #tpu.core_type<tc>, window_params = [{pipeline_mode = #tpu.pipeline_mode<synchronous>, transform_indices = @transform_0, window_bounds = array<i64: 8, 64>}, {pipeline_mode = #tpu.pipeline_mode<synchronous>, transform_indices = @transform_1, window_bounds = array<i64: 64, 384>}, {pipeline_mode = #tpu.pipeline_mode<synchronous>, transform_indices = @transform_2, window_bounds = array<i64: 1, 384>}, {pipeline_mode = #tpu.pipeline_mode<synchronous>, transform_indices = @transform_3, window_bounds = array<i64: 1, 384>}, {pipeline_mode = #tpu.pipeline_mode<synchronous>, transform_indices = @transform_4, window_bounds = array<i64: 3, 8, 8>}, {pipeline_mode = #tpu.pipeline_mode<synchronous>, transform_indices = @transform_5, window_bounds = array<i64: 3, 1, 384>}, {pipeline_mode = #tpu.pipeline_mode<synchronous>, transform_indices = @transform_6, window_bounds = array<i64: 1, 384>}, {pipeline_mode = #tpu.pipeline_mode<synchronous>, transform_indices = @transform_7, window_bounds = array<i64: 1, 384>}, {pipeline_mode = #tpu.pipeline_mode<synchronous>, transform_indices = @transform_8, window_bounds = array<i64: 384, 64>}, {pipeline_mode = #tpu.pipeline_mode<synchronous>, transform_indices = @transform_9, window_bounds = array<i64: 1, 64>}, {pipeline_mode = #tpu.pipeline_mode<synchronous>, transform_indices = @transform_10, window_bounds = array<i64: 1, 64>}, {pipeline_mode = #tpu.pipeline_mode<synchronous>, transform_indices = @transform_11, window_bounds = array<i64: 8, 64>}]} {
    %c0 = arith.constant 0 : index
    %c0_0 = arith.constant 0 : index
    %0 = vector.load %arg1[%c0, %c0_0] : memref<8x64xbf16, #tpu.memory_space<vmem>>, vector<8x64xbf16>
    %c0_1 = arith.constant 0 : index
    %c0_2 = arith.constant 0 : index
    %1 = vector.load %arg2[%c0_1, %c0_2] : memref<64x384xbf16, #tpu.memory_space<vmem>>, vector<64x384xbf16>
    %cst = arith.constant dense<0.000000e+00> : vector<8x384xf32>
    %2 = tpu.matmul %0, %1, %cst {dimension_numbers = #tpu.dot_dimension_numbers<[1], [0], [0], [1], [0, 0, 1, 1], [], []>} : vector<8x64xbf16>, vector<64x384xbf16>, vector<8x384xf32> -> vector<8x384xf32>
    %c0_3 = arith.constant 0 : index
    %c0_4 = arith.constant 0 : index
    %3 = vector.load %arg3[%c0_3, %c0_4] : memref<1x384xf32, #tpu.memory_space<vmem>>, vector<1x384xf32>
    %4 = vector.broadcast %3 : vector<1x384xf32> to vector<8x384xf32>
    %5 = arith.mulf %2, %4 : vector<8x384xf32>
    %c0_5 = arith.constant 0 : index
    %c0_6 = arith.constant 0 : index
    %6 = vector.load %arg4[%c0_5, %c0_6] : memref<1x384xf32, #tpu.memory_space<vmem>>, vector<1x384xf32>
    %7 = vector.broadcast %6 : vector<1x384xf32> to vector<8x384xf32>
    %8 = arith.addf %5, %7 : vector<8x384xf32>
    %cst_7 = arith.constant 0.000000e+00 : f32
    %9 = vector.broadcast %cst_7 : f32 to vector<8x384xf32>
    %10 = arith.maximumf %8, %9 : vector<8x384xf32>
    %cst_8 = arith.constant 6.000000e+00 : f32
    %11 = vector.broadcast %cst_8 : f32 to vector<8x384xf32>
    %12 = arith.minimumf %10, %11 : vector<8x384xf32>
    %13 = arith.truncf %12 : vector<8x384xf32> to vector<8x384xbf16>
    %cst_9 = arith.constant 0.000000e+00 : f32
    %14 = vector.broadcast %cst_9 : f32 to vector<8x384xf32>
    %c0_10 = arith.constant 0 : index
    %c0_11 = arith.constant 0 : index
    %c0_12 = arith.constant 0 : index
    %15 = vector.load %arg5[%c0_10, %c0_11, %c0_12] : memref<3x8x8xbf16, #tpu.memory_space<vmem>>, vector<1x8x8xbf16>
    %16 = vector.shape_cast %15 : vector<1x8x8xbf16> to vector<8x8xbf16>
    %cst_13 = arith.constant dense<0.000000e+00> : vector<8x384xf32>
    %17 = tpu.matmul %16, %13, %cst_13 {dimension_numbers = #tpu.dot_dimension_numbers<[1], [0], [0], [1], [0, 0, 1, 1], [], []>} : vector<8x8xbf16>, vector<8x384xbf16>, vector<8x384xf32> -> vector<8x384xf32>
    %c0_14 = arith.constant 0 : index
    %c0_15 = arith.constant 0 : index
    %c0_16 = arith.constant 0 : index
    %18 = vector.load %arg6[%c0_14, %c0_15, %c0_16] : memref<3x1x384xf32, #tpu.memory_space<vmem>>, vector<1x1x384xf32>
    %19 = vector.shape_cast %18 : vector<1x1x384xf32> to vector<1x384xf32>
    %20 = vector.broadcast %19 : vector<1x384xf32> to vector<8x384xf32>
    %21 = arith.mulf %17, %20 : vector<8x384xf32>
    %22 = arith.addf %14, %21 : vector<8x384xf32>
    %c1 = arith.constant 1 : index
    %c0_17 = arith.constant 0 : index
    %c0_18 = arith.constant 0 : index
    %23 = vector.load %arg5[%c1, %c0_17, %c0_18] : memref<3x8x8xbf16, #tpu.memory_space<vmem>>, vector<1x8x8xbf16>
    %24 = vector.shape_cast %23 : vector<1x8x8xbf16> to vector<8x8xbf16>
    %cst_19 = arith.constant dense<0.000000e+00> : vector<8x384xf32>
    %25 = tpu.matmul %24, %13, %cst_19 {dimension_numbers = #tpu.dot_dimension_numbers<[1], [0], [0], [1], [0, 0, 1, 1], [], []>} : vector<8x8xbf16>, vector<8x384xbf16>, vector<8x384xf32> -> vector<8x384xf32>
    %c1_20 = arith.constant 1 : index
    %c0_21 = arith.constant 0 : index
    %c0_22 = arith.constant 0 : index
    %26 = vector.load %arg6[%c1_20, %c0_21, %c0_22] : memref<3x1x384xf32, #tpu.memory_space<vmem>>, vector<1x1x384xf32>
    %27 = vector.shape_cast %26 : vector<1x1x384xf32> to vector<1x384xf32>
    %28 = vector.broadcast %27 : vector<1x384xf32> to vector<8x384xf32>
    %29 = arith.mulf %25, %28 : vector<8x384xf32>
    %30 = arith.addf %22, %29 : vector<8x384xf32>
    %c2 = arith.constant 2 : index
    %c0_23 = arith.constant 0 : index
    %c0_24 = arith.constant 0 : index
    %31 = vector.load %arg5[%c2, %c0_23, %c0_24] : memref<3x8x8xbf16, #tpu.memory_space<vmem>>, vector<1x8x8xbf16>
    %32 = vector.shape_cast %31 : vector<1x8x8xbf16> to vector<8x8xbf16>
    %cst_25 = arith.constant dense<0.000000e+00> : vector<8x384xf32>
    %33 = tpu.matmul %32, %13, %cst_25 {dimension_numbers = #tpu.dot_dimension_numbers<[1], [0], [0], [1], [0, 0, 1, 1], [], []>} : vector<8x8xbf16>, vector<8x384xbf16>, vector<8x384xf32> -> vector<8x384xf32>
    %c2_26 = arith.constant 2 : index
    %c0_27 = arith.constant 0 : index
    %c0_28 = arith.constant 0 : index
    %34 = vector.load %arg6[%c2_26, %c0_27, %c0_28] : memref<3x1x384xf32, #tpu.memory_space<vmem>>, vector<1x1x384xf32>
    %35 = vector.shape_cast %34 : vector<1x1x384xf32> to vector<1x384xf32>
    %36 = vector.broadcast %35 : vector<1x384xf32> to vector<8x384xf32>
    %37 = arith.mulf %33, %36 : vector<8x384xf32>
    %38 = arith.addf %30, %37 : vector<8x384xf32>
    %c0_29 = arith.constant 0 : index
    %c0_30 = arith.constant 0 : index
    %39 = vector.load %arg7[%c0_29, %c0_30] : memref<1x384xf32, #tpu.memory_space<vmem>>, vector<1x384xf32>
    %40 = vector.broadcast %39 : vector<1x384xf32> to vector<8x384xf32>
    %41 = arith.mulf %38, %40 : vector<8x384xf32>
    %c0_31 = arith.constant 0 : index
    %c0_32 = arith.constant 0 : index
    %42 = vector.load %arg8[%c0_31, %c0_32] : memref<1x384xf32, #tpu.memory_space<vmem>>, vector<1x384xf32>
    %43 = vector.broadcast %42 : vector<1x384xf32> to vector<8x384xf32>
    %44 = arith.addf %41, %43 : vector<8x384xf32>
    %cst_33 = arith.constant 0.000000e+00 : f32
    %45 = vector.broadcast %cst_33 : f32 to vector<8x384xf32>
    %46 = arith.maximumf %44, %45 : vector<8x384xf32>
    %cst_34 = arith.constant 6.000000e+00 : f32
    %47 = vector.broadcast %cst_34 : f32 to vector<8x384xf32>
    %48 = arith.minimumf %46, %47 : vector<8x384xf32>
    %49 = arith.truncf %48 : vector<8x384xf32> to vector<8x384xbf16>
    %c0_35 = arith.constant 0 : index
    %c0_36 = arith.constant 0 : index
    %50 = vector.load %arg9[%c0_35, %c0_36] : memref<384x64xbf16, #tpu.memory_space<vmem>>, vector<384x64xbf16>
    %cst_37 = arith.constant dense<0.000000e+00> : vector<8x64xf32>
    %51 = tpu.matmul %49, %50, %cst_37 {dimension_numbers = #tpu.dot_dimension_numbers<[1], [0], [0], [1], [0, 0, 1, 1], [], []>} : vector<8x384xbf16>, vector<384x64xbf16>, vector<8x64xf32> -> vector<8x64xf32>
    %c0_38 = arith.constant 0 : index
    %c0_39 = arith.constant 0 : index
    %52 = vector.load %arg10[%c0_38, %c0_39] : memref<1x64xf32, #tpu.memory_space<vmem>>, vector<1x64xf32>
    %53 = vector.broadcast %52 : vector<1x64xf32> to vector<8x64xf32>
    %54 = arith.mulf %51, %53 : vector<8x64xf32>
    %c0_40 = arith.constant 0 : index
    %c0_41 = arith.constant 0 : index
    %55 = vector.load %arg11[%c0_40, %c0_41] : memref<1x64xf32, #tpu.memory_space<vmem>>, vector<1x64xf32>
    %56 = vector.broadcast %55 : vector<1x64xf32> to vector<8x64xf32>
    %57 = arith.addf %54, %56 : vector<8x64xf32>
    %58 = arith.extf %0 : vector<8x64xbf16> to vector<8x64xf32>
    %59 = arith.addf %57, %58 : vector<8x64xf32>
    %60 = arith.truncf %59 : vector<8x64xf32> to vector<8x64xbf16>
    %c0_42 = arith.constant 0 : index
    %c0_43 = arith.constant 0 : index
    %61 = vector.load %arg12[%c0_42, %c0_43] : memref<8x64xbf16, #tpu.memory_space<vmem>>, vector<8x64xbf16>
    tpu.vector_store %arg12[%c0_42, %c0_43], %60 {strides = array<i32>} : memref<8x64xbf16, #tpu.memory_space<vmem>>, vector<8x64xbf16>,
    return
  }
  func.func @transform_0(%arg0: i32) -> (i32, i32) {
    %c0_i32 = arith.constant 0 : i32
    %c0_i32_0 = arith.constant 0 : i32
    %c0_i32_1 = arith.constant 0 : i32
    return %c0_i32, %c0_i32_0 : i32, i32
  }
  func.func @transform_1(%arg0: i32) -> (i32, i32) {
    %c0_i32 = arith.constant 0 : i32
    %c0_i32_0 = arith.constant 0 : i32
    %c0_i32_1 = arith.constant 0 : i32
    return %c0_i32, %c0_i32_0 : i32, i32
  }
  func.func @transform_2(%arg0: i32) -> (i32, i32) {
    %c0_i32 = arith.constant 0 : i32
    %c0_i32_0 = arith.constant 0 : i32
    %c0_i32_1 = arith.constant 0 : i32
    return %c0_i32, %c0_i32_0 : i32, i32
  }
  func.func @transform_3(%arg0: i32) -> (i32, i32) {
    %c0_i32 = arith.constant 0 : i32
    %c0_i32_0 = arith.constant 0 : i32
    %c0_i32_1 = arith.constant 0 : i32
    return %c0_i32, %c0_i32_0 : i32, i32
  }
  func.func @transform_4(%arg0: i32) -> (i32, i32, i32) {
    %c0_i32 = arith.constant 0 : i32
    %c0_i32_0 = arith.constant 0 : i32
    %c0_i32_1 = arith.constant 0 : i32
    %c0_i32_2 = arith.constant 0 : i32
    return %c0_i32, %c0_i32_0, %c0_i32_1 : i32, i32, i32
  }
  func.func @transform_5(%arg0: i32) -> (i32, i32, i32) {
    %c0_i32 = arith.constant 0 : i32
    %c0_i32_0 = arith.constant 0 : i32
    %c0_i32_1 = arith.constant 0 : i32
    %c0_i32_2 = arith.constant 0 : i32
    return %c0_i32, %c0_i32_0, %c0_i32_1 : i32, i32, i32
  }
  func.func @transform_6(%arg0: i32) -> (i32, i32) {
    %c0_i32 = arith.constant 0 : i32
    %c0_i32_0 = arith.constant 0 : i32
    %c0_i32_1 = arith.constant 0 : i32
    return %c0_i32, %c0_i32_0 : i32, i32
  }
  func.func @transform_7(%arg0: i32) -> (i32, i32) {
    %c0_i32 = arith.constant 0 : i32
    %c0_i32_0 = arith.constant 0 : i32
    %c0_i32_1 = arith.constant 0 : i32
    return %c0_i32, %c0_i32_0 : i32, i32
  }
  func.func @transform_8(%arg0: i32) -> (i32, i32) {
    %c0_i32 = arith.constant 0 : i32
    %c0_i32_0 = arith.constant 0 : i32
    %c0_i32_1 = arith.constant 0 : i32
    return %c0_i32, %c0_i32_0 : i32, i32
  }
  func.func @transform_9(%arg0: i32) -> (i32, i32) {
    %c0_i32 = arith.constant 0 : i32
    %c0_i32_0 = arith.constant 0 : i32
    %c0_i32_1 = arith.constant 0 : i32
    return %c0_i32, %c0_i32_0 : i32, i32
  }
  func.func @transform_10(%arg0: i32) -> (i32, i32) {
    %c0_i32 = arith.constant 0 : i32
    %c0_i32_0 = arith.constant 0 : i32
    %c0_i32_1 = arith.constant 0 : i32
    return %c0_i32, %c0_i32_0 : i32, i32
  }
  func.func @transform_11(%arg0: i32) -> (i32, i32) {
    %c0_i32 = arith.constant 0 : i32
    %c0_i32_0 = arith.constant 0 : i32
    %c0_i32_1 = arith.constant 0 : i32
    return %c0_i32, %c0_i32_0 : i32, i32
  }
}

module attributes {stable_mosaic.version = 11 : i64} {
  func.func @_inverted_residual_kernel(%arg0: i32, %arg1: memref<8x64xbf16, #tpu.memory_space<vmem>>, %arg2: memref<64x384xbf16, #tpu.memory_space<vmem>>, %arg3: memref<1x384xf32, #tpu.memory_space<vmem>>, %arg4: memref<1x384xf32, #tpu.memory_space<vmem>>, %arg5: memref<3x8x8xbf16, #tpu.memory_space<vmem>>, %arg6: memref<3x1x384xf32, #tpu.memory_space<vmem>>, %arg7: memref<1x384xf32, #tpu.memory_space<vmem>>, %arg8: memref<1x384xf32, #tpu.memory_space<vmem>>, %arg9: memref<384x128xbf16, #tpu.memory_space<vmem>>, %arg10: memref<1x128xf32, #tpu.memory_space<vmem>>, %arg11: memref<1x128xf32, #tpu.memory_space<vmem>>, %arg12: memref<8x128xbf16, #tpu.memory_space<vmem>>) attributes {dimension_semantics = [#tpu.dimension_semantics<arbitrary>], iteration_bounds = array<i64: 1>, scalar_prefetch = 0 : i64, scratch_operands = 0 : i64, tpu.core_type = #tpu.core_type<tc>, window_params = [{pipeline_mode = #tpu.pipeline_mode<synchronous>, transform_indices = @transform_0, window_bounds = array<i64: 8, 64>}, {pipeline_mode = #tpu.pipeline_mode<synchronous>, transform_indices = @transform_1, window_bounds = array<i64: 64, 384>}, {pipeline_mode = #tpu.pipeline_mode<synchronous>, transform_indices = @transform_2, window_bounds = array<i64: 1, 384>}, {pipeline_mode = #tpu.pipeline_mode<synchronous>, transform_indices = @transform_3, window_bounds = array<i64: 1, 384>}, {pipeline_mode = #tpu.pipeline_mode<synchronous>, transform_indices = @transform_4, window_bounds = array<i64: 3, 8, 8>}, {pipeline_mode = #tpu.pipeline_mode<synchronous>, transform_indices = @transform_5, window_bounds = array<i64: 3, 1, 384>}, {pipeline_mode = #tpu.pipeline_mode<synchronous>, transform_indices = @transform_6, window_bounds = array<i64: 1, 384>}, {pipeline_mode = #tpu.pipeline_mode<synchronous>, transform_indices = @transform_7, window_bounds = array<i64: 1, 384>}, {pipeline_mode = #tpu.pipeline_mode<synchronous>, transform_indices = @transform_8, window_bounds = array<i64: 384, 128>}, {pipeline_mode = #tpu.pipeline_mode<synchronous>, transform_indices = @transform_9, window_bounds = array<i64: 1, 128>}, {pipeline_mode = #tpu.pipeline_mode<synchronous>, transform_indices = @transform_10, window_bounds = array<i64: 1, 128>}, {pipeline_mode = #tpu.pipeline_mode<synchronous>, transform_indices = @transform_11, window_bounds = array<i64: 8, 128>}]} {
    %c0 = arith.constant 0 : index
    %c0_0 = arith.constant 0 : index
    %0 = vector.load %arg1[%c0, %c0_0] : memref<8x64xbf16, #tpu.memory_space<vmem>>, vector<8x64xbf16>
    %c0_1 = arith.constant 0 : index
    %c0_2 = arith.constant 0 : index
    %1 = vector.load %arg2[%c0_1, %c0_2] : memref<64x384xbf16, #tpu.memory_space<vmem>>, vector<64x384xbf16>
    %cst = arith.constant dense<0.000000e+00> : vector<8x384xf32>
    %2 = tpu.matmul %0, %1, %cst {dimension_numbers = #tpu.dot_dimension_numbers<[1], [0], [0], [1], [0, 0, 1, 1], [], []>} : vector<8x64xbf16>, vector<64x384xbf16>, vector<8x384xf32> -> vector<8x384xf32>
    %c0_3 = arith.constant 0 : index
    %c0_4 = arith.constant 0 : index
    %3 = vector.load %arg3[%c0_3, %c0_4] : memref<1x384xf32, #tpu.memory_space<vmem>>, vector<1x384xf32>
    %4 = vector.broadcast %3 : vector<1x384xf32> to vector<8x384xf32>
    %5 = arith.mulf %2, %4 : vector<8x384xf32>
    %c0_5 = arith.constant 0 : index
    %c0_6 = arith.constant 0 : index
    %6 = vector.load %arg4[%c0_5, %c0_6] : memref<1x384xf32, #tpu.memory_space<vmem>>, vector<1x384xf32>
    %7 = vector.broadcast %6 : vector<1x384xf32> to vector<8x384xf32>
    %8 = arith.addf %5, %7 : vector<8x384xf32>
    %cst_7 = arith.constant 0.000000e+00 : f32
    %9 = vector.broadcast %cst_7 : f32 to vector<8x384xf32>
    %10 = arith.maximumf %8, %9 : vector<8x384xf32>
    %cst_8 = arith.constant 6.000000e+00 : f32
    %11 = vector.broadcast %cst_8 : f32 to vector<8x384xf32>
    %12 = arith.minimumf %10, %11 : vector<8x384xf32>
    %13 = arith.truncf %12 : vector<8x384xf32> to vector<8x384xbf16>
    %cst_9 = arith.constant 0.000000e+00 : f32
    %14 = vector.broadcast %cst_9 : f32 to vector<8x384xf32>
    %c0_10 = arith.constant 0 : index
    %c0_11 = arith.constant 0 : index
    %c0_12 = arith.constant 0 : index
    %15 = vector.load %arg5[%c0_10, %c0_11, %c0_12] : memref<3x8x8xbf16, #tpu.memory_space<vmem>>, vector<1x8x8xbf16>
    %16 = vector.shape_cast %15 : vector<1x8x8xbf16> to vector<8x8xbf16>
    %cst_13 = arith.constant dense<0.000000e+00> : vector<8x384xf32>
    %17 = tpu.matmul %16, %13, %cst_13 {dimension_numbers = #tpu.dot_dimension_numbers<[1], [0], [0], [1], [0, 0, 1, 1], [], []>} : vector<8x8xbf16>, vector<8x384xbf16>, vector<8x384xf32> -> vector<8x384xf32>
    %c0_14 = arith.constant 0 : index
    %c0_15 = arith.constant 0 : index
    %c0_16 = arith.constant 0 : index
    %18 = vector.load %arg6[%c0_14, %c0_15, %c0_16] : memref<3x1x384xf32, #tpu.memory_space<vmem>>, vector<1x1x384xf32>
    %19 = vector.shape_cast %18 : vector<1x1x384xf32> to vector<1x384xf32>
    %20 = vector.broadcast %19 : vector<1x384xf32> to vector<8x384xf32>
    %21 = arith.mulf %17, %20 : vector<8x384xf32>
    %22 = arith.addf %14, %21 : vector<8x384xf32>
    %c1 = arith.constant 1 : index
    %c0_17 = arith.constant 0 : index
    %c0_18 = arith.constant 0 : index
    %23 = vector.load %arg5[%c1, %c0_17, %c0_18] : memref<3x8x8xbf16, #tpu.memory_space<vmem>>, vector<1x8x8xbf16>
    %24 = vector.shape_cast %23 : vector<1x8x8xbf16> to vector<8x8xbf16>
    %cst_19 = arith.constant dense<0.000000e+00> : vector<8x384xf32>
    %25 = tpu.matmul %24, %13, %cst_19 {dimension_numbers = #tpu.dot_dimension_numbers<[1], [0], [0], [1], [0, 0, 1, 1], [], []>} : vector<8x8xbf16>, vector<8x384xbf16>, vector<8x384xf32> -> vector<8x384xf32>
    %c1_20 = arith.constant 1 : index
    %c0_21 = arith.constant 0 : index
    %c0_22 = arith.constant 0 : index
    %26 = vector.load %arg6[%c1_20, %c0_21, %c0_22] : memref<3x1x384xf32, #tpu.memory_space<vmem>>, vector<1x1x384xf32>
    %27 = vector.shape_cast %26 : vector<1x1x384xf32> to vector<1x384xf32>
    %28 = vector.broadcast %27 : vector<1x384xf32> to vector<8x384xf32>
    %29 = arith.mulf %25, %28 : vector<8x384xf32>
    %30 = arith.addf %22, %29 : vector<8x384xf32>
    %c2 = arith.constant 2 : index
    %c0_23 = arith.constant 0 : index
    %c0_24 = arith.constant 0 : index
    %31 = vector.load %arg5[%c2, %c0_23, %c0_24] : memref<3x8x8xbf16, #tpu.memory_space<vmem>>, vector<1x8x8xbf16>
    %32 = vector.shape_cast %31 : vector<1x8x8xbf16> to vector<8x8xbf16>
    %cst_25 = arith.constant dense<0.000000e+00> : vector<8x384xf32>
    %33 = tpu.matmul %32, %13, %cst_25 {dimension_numbers = #tpu.dot_dimension_numbers<[1], [0], [0], [1], [0, 0, 1, 1], [], []>} : vector<8x8xbf16>, vector<8x384xbf16>, vector<8x384xf32> -> vector<8x384xf32>
    %c2_26 = arith.constant 2 : index
    %c0_27 = arith.constant 0 : index
    %c0_28 = arith.constant 0 : index
    %34 = vector.load %arg6[%c2_26, %c0_27, %c0_28] : memref<3x1x384xf32, #tpu.memory_space<vmem>>, vector<1x1x384xf32>
    %35 = vector.shape_cast %34 : vector<1x1x384xf32> to vector<1x384xf32>
    %36 = vector.broadcast %35 : vector<1x384xf32> to vector<8x384xf32>
    %37 = arith.mulf %33, %36 : vector<8x384xf32>
    %38 = arith.addf %30, %37 : vector<8x384xf32>
    %c0_29 = arith.constant 0 : index
    %c0_30 = arith.constant 0 : index
    %39 = vector.load %arg7[%c0_29, %c0_30] : memref<1x384xf32, #tpu.memory_space<vmem>>, vector<1x384xf32>
    %40 = vector.broadcast %39 : vector<1x384xf32> to vector<8x384xf32>
    %41 = arith.mulf %38, %40 : vector<8x384xf32>
    %c0_31 = arith.constant 0 : index
    %c0_32 = arith.constant 0 : index
    %42 = vector.load %arg8[%c0_31, %c0_32] : memref<1x384xf32, #tpu.memory_space<vmem>>, vector<1x384xf32>
    %43 = vector.broadcast %42 : vector<1x384xf32> to vector<8x384xf32>
    %44 = arith.addf %41, %43 : vector<8x384xf32>
    %cst_33 = arith.constant 0.000000e+00 : f32
    %45 = vector.broadcast %cst_33 : f32 to vector<8x384xf32>
    %46 = arith.maximumf %44, %45 : vector<8x384xf32>
    %cst_34 = arith.constant 6.000000e+00 : f32
    %47 = vector.broadcast %cst_34 : f32 to vector<8x384xf32>
    %48 = arith.minimumf %46, %47 : vector<8x384xf32>
    %49 = arith.truncf %48 : vector<8x384xf32> to vector<8x384xbf16>
    %c0_35 = arith.constant 0 : index
    %c0_36 = arith.constant 0 : index
    %50 = vector.load %arg9[%c0_35, %c0_36] : memref<384x128xbf16, #tpu.memory_space<vmem>>, vector<384x128xbf16>
    %cst_37 = arith.constant dense<0.000000e+00> : vector<8x128xf32>
    %51 = tpu.matmul %49, %50, %cst_37 {dimension_numbers = #tpu.dot_dimension_numbers<[1], [0], [0], [1], [0, 0, 1, 1], [], []>} : vector<8x384xbf16>, vector<384x128xbf16>, vector<8x128xf32> -> vector<8x128xf32>
    %c0_38 = arith.constant 0 : index
    %c0_39 = arith.constant 0 : index
    %52 = vector.load %arg10[%c0_38, %c0_39] : memref<1x128xf32, #tpu.memory_space<vmem>>, vector<1x128xf32>
    %53 = vector.broadcast %52 : vector<1x128xf32> to vector<8x128xf32>
    %54 = arith.mulf %51, %53 : vector<8x128xf32>
    %c0_40 = arith.constant 0 : index
    %c0_41 = arith.constant 0 : index
    %55 = vector.load %arg11[%c0_40, %c0_41] : memref<1x128xf32, #tpu.memory_space<vmem>>, vector<1x128xf32>
    %56 = vector.broadcast %55 : vector<1x128xf32> to vector<8x128xf32>
    %57 = arith.addf %54, %56 : vector<8x128xf32>
    %58 = arith.truncf %57 : vector<8x128xf32> to vector<8x128xbf16>
    %c0_42 = arith.constant 0 : index
    %c0_43 = arith.constant 0 : index
    %59 = vector.load %arg12[%c0_42, %c0_43] : memref<8x128xbf16, #tpu.memory_space<vmem>>, vector<8x128xbf16>
    tpu.vector_store %arg12[%c0_42, %c0_43], %58 {strides = array<i32>} : memref<8x128xbf16, #tpu.memory_space<vmem>>, vector<8x128xbf16>,
    return
  }
  func.func @transform_0(%arg0: i32) -> (i32, i32) {
    %c0_i32 = arith.constant 0 : i32
    %c0_i32_0 = arith.constant 0 : i32
    %c0_i32_1 = arith.constant 0 : i32
    return %c0_i32, %c0_i32_0 : i32, i32
  }
  func.func @transform_1(%arg0: i32) -> (i32, i32) {
    %c0_i32 = arith.constant 0 : i32
    %c0_i32_0 = arith.constant 0 : i32
    %c0_i32_1 = arith.constant 0 : i32
    return %c0_i32, %c0_i32_0 : i32, i32
  }
  func.func @transform_2(%arg0: i32) -> (i32, i32) {
    %c0_i32 = arith.constant 0 : i32
    %c0_i32_0 = arith.constant 0 : i32
    %c0_i32_1 = arith.constant 0 : i32
    return %c0_i32, %c0_i32_0 : i32, i32
  }
  func.func @transform_3(%arg0: i32) -> (i32, i32) {
    %c0_i32 = arith.constant 0 : i32
    %c0_i32_0 = arith.constant 0 : i32
    %c0_i32_1 = arith.constant 0 : i32
    return %c0_i32, %c0_i32_0 : i32, i32
  }
  func.func @transform_4(%arg0: i32) -> (i32, i32, i32) {
    %c0_i32 = arith.constant 0 : i32
    %c0_i32_0 = arith.constant 0 : i32
    %c0_i32_1 = arith.constant 0 : i32
    %c0_i32_2 = arith.constant 0 : i32
    return %c0_i32, %c0_i32_0, %c0_i32_1 : i32, i32, i32
  }
  func.func @transform_5(%arg0: i32) -> (i32, i32, i32) {
    %c0_i32 = arith.constant 0 : i32
    %c0_i32_0 = arith.constant 0 : i32
    %c0_i32_1 = arith.constant 0 : i32
    %c0_i32_2 = arith.constant 0 : i32
    return %c0_i32, %c0_i32_0, %c0_i32_1 : i32, i32, i32
  }
  func.func @transform_6(%arg0: i32) -> (i32, i32) {
    %c0_i32 = arith.constant 0 : i32
    %c0_i32_0 = arith.constant 0 : i32
    %c0_i32_1 = arith.constant 0 : i32
    return %c0_i32, %c0_i32_0 : i32, i32
  }
  func.func @transform_7(%arg0: i32) -> (i32, i32) {
    %c0_i32 = arith.constant 0 : i32
    %c0_i32_0 = arith.constant 0 : i32
    %c0_i32_1 = arith.constant 0 : i32
    return %c0_i32, %c0_i32_0 : i32, i32
  }
  func.func @transform_8(%arg0: i32) -> (i32, i32) {
    %c0_i32 = arith.constant 0 : i32
    %c0_i32_0 = arith.constant 0 : i32
    %c0_i32_1 = arith.constant 0 : i32
    return %c0_i32, %c0_i32_0 : i32, i32
  }
  func.func @transform_9(%arg0: i32) -> (i32, i32) {
    %c0_i32 = arith.constant 0 : i32
    %c0_i32_0 = arith.constant 0 : i32
    %c0_i32_1 = arith.constant 0 : i32
    return %c0_i32, %c0_i32_0 : i32, i32
  }
  func.func @transform_10(%arg0: i32) -> (i32, i32) {
    %c0_i32 = arith.constant 0 : i32
    %c0_i32_0 = arith.constant 0 : i32
    %c0_i32_1 = arith.constant 0 : i32
    return %c0_i32, %c0_i32_0 : i32, i32
  }
  func.func @transform_11(%arg0: i32) -> (i32, i32) {
    %c0_i32 = arith.constant 0 : i32
    %c0_i32_0 = arith.constant 0 : i32
    %c0_i32_1 = arith.constant 0 : i32
    return %c0_i32, %c0_i32_0 : i32, i32
  }
}

</mosaic_0001>

<llo_original>
// kernel: _lambda_.9
$region0: #{_lambda_.9}
  #allocation0 [shape = 'u32[]', space=smem, size = 0x4, offset = 0x4, fixed_abs, tag = 'smem constant byte address 0x4 - core index']
  #allocation1 [shape = 'u32[144,128]{1,0:T(1,128)}', space=vmem, size = 0x12000, scoped, tag = 'internal scratch']
  %s0 = inlined_call_operand.vmem [shape: bf16[32,16], index: 0, kind: input, shape index: {}]
  %s1 = inlined_call_operand.vmem [shape: bf16[16,96], index: 1, kind: input, shape index: {}]
  %s2 = inlined_call_operand.vmem [shape: f32[1,96], index: 2, kind: input, shape index: {}, may-alias: {2,6}]
  %s3 = inlined_call_operand.vmem [shape: f32[1,96], index: 3, kind: input, shape index: {}, may-alias: {3,7}]
  %s4 = inlined_call_operand.vmem [shape: bf16[3,16,32], index: 4, kind: input, shape index: {}]
  %s5 = inlined_call_operand.vmem [shape: f32[3,1,96], index: 5, kind: input, shape index: {}]
  %s6 = inlined_call_operand.vmem [shape: f32[1,96], index: 6, kind: input, shape index: {}, may-alias: {2,6}]
  %s7 = inlined_call_operand.vmem [shape: f32[1,96], index: 7, kind: input, shape index: {}, may-alias: {3,7}]
  %s8 = inlined_call_operand.vmem [shape: bf16[96,32], index: 8, kind: input, shape index: {}]
  %s9 = inlined_call_operand.vmem [shape: f32[1,32], index: 9, kind: input, shape index: {}]
  %s10 = inlined_call_operand.vmem [shape: f32[1,32], index: 10, kind: input, shape index: {}]
  %s11 = inlined_call_operand.vmem [shape: bf16[16,32], index: 11, kind: output, shape index: {}]
  %s12 = sld [smem:[#allocation0]]
  $region54: #{_lambda_.9} parent=0
    _
  %s14 = ssub.s32 1, %s12
  %s15 = scalar_select 0, %s14, %s12
  // Predicated region
  $region2: #{_lambda_.9} parent=0 // pred_check
    _
  $region3: #{_lambda_.9} parent=0 // pred_check_branch
    %17 = sbr.rel (0) target = $region5
  $region4: #{_lambda_.9} parent=0 // pred_region
    _
  $region5: #{_lambda_.9} parent=0 // pred_fallthru
    _
  // Predicated region
  $region6: #{_lambda_.9} parent=0 // pred_check
    _
  $region7: #{_lambda_.9} parent=0 // pred_check_branch
    %19 = sbr.rel (0) target = $region9
  $region8: #{_lambda_.9} parent=0 // pred_region
    _
  $region9: #{_lambda_.9} parent=0 // pred_fallthru
    _
  // Predicated region
  $region10: #{_lambda_.9} parent=0 // pred_check
    _
  $region11: #{_lambda_.9} parent=0 // pred_check_branch
    %21 = sbr.rel (0) target = $region13
  $region12: #{_lambda_.9} parent=0 // pred_region
    _
  $region13: #{_lambda_.9} parent=0 // pred_fallthru
    _
  // Predicated region
  $region14: #{_lambda_.9} parent=0 // pred_check
    _
  $region15: #{_lambda_.9} parent=0 // pred_check_branch
    %23 = sbr.rel (0) target = $region17
  $region16: #{_lambda_.9} parent=0 // pred_region
    _
  $region17: #{_lambda_.9} parent=0 // pred_fallthru
    _
  // Predicated region
  $region18: #{_lambda_.9} parent=0 // pred_check
    _
  $region19: #{_lambda_.9} parent=0 // pred_check_branch
    %25 = sbr.rel (0) target = $region21
  $region20: #{_lambda_.9} parent=0 // pred_region
    _
  $region21: #{_lambda_.9} parent=0 // pred_fallthru
    _
  // Predicated region
  $region22: #{_lambda_.9} parent=0 // pred_check
    _
  $region23: #{_lambda_.9} parent=0 // pred_check_branch
    %27 = sbr.rel (0) target = $region25
  $region24: #{_lambda_.9} parent=0 // pred_region
    _
  $region25: #{_lambda_.9} parent=0 // pred_fallthru
    _
  // Predicated region
  $region26: #{_lambda_.9} parent=0 // pred_check
    _
  $region27: #{_lambda_.9} parent=0 // pred_check_branch
    %29 = sbr.rel (0) target = $region29
  $region28: #{_lambda_.9} parent=0 // pred_region
    _
  $region29: #{_lambda_.9} parent=0 // pred_fallthru
    _
  // Predicated region
  $region30: #{_lambda_.9} parent=0 // pred_check
    _
  $region31: #{_lambda_.9} parent=0 // pred_check_branch
    %31 = sbr.rel (0) target = $region33
  $region32: #{_lambda_.9} parent=0 // pred_region
    _
  $region33: #{_lambda_.9} parent=0 // pred_fallthru
    _
  // Predicated region
  $region34: #{_lambda_.9} parent=0 // pred_check
    _
  $region35: #{_lambda_.9} parent=0 // pred_check_branch
    %33 = sbr.rel (0) target = $region37
  $region36: #{_lambda_.9} parent=0 // pred_region
    _
  $region37: #{_lambda_.9} parent=0 // pred_fallthru
    _
  // Predicated region
  $region38: #{_lambda_.9} parent=0 // pred_check
    _
  $region39: #{_lambda_.9} parent=0 // pred_check_branch
    %35 = sbr.rel (0) target = $region41
  $region40: #{_lambda_.9} parent=0 // pred_region
    _
  $region41: #{_lambda_.9} parent=0 // pred_fallthru
    _
  // Predicated region
  $region42: #{_lambda_.9} parent=0 // pred_check
    _
  $region43: #{_lambda_.9} parent=0 // pred_check_branch
    %37 = sbr.rel (0) target = $region45
  $region44: #{_lambda_.9} parent=0 // pred_region
    _
  $region45: #{_lambda_.9} parent=0 // pred_fallthru
    _
  %v39 = vld [vmem:[%s0] sm:$0xf]
  %v40 = vld [vmem:[%s0 + $0x4] sm:$0xf]
  %v41 = vld [vmem:[%s0 + $0x8] sm:$0xf]
  %v42 = vld [vmem:[%s0 + $0xc] sm:$0xf]
  %v43 = vld [vmem:[%s1] sm:$0xf]
  %v44 = vld [vmem:[%s1 + $0x4] sm:$0xf]
  %v49 = vunpack.c.l.b16 %v39
  %v50 = vunpack.c.l.b16 %v40
  %v51 = vunpack.c.l.b16 %v41
  %v52 = vunpack.c.l.b16 %v42
  %v53 = vpack.c.b16 %v50, %v49
  %v54 = vpack.c.b16 %v52, %v51
  %v57 = vunpack.c.l.b16 %v43
  %v58 = vunpack.c.l.b16 %v44
  %v59 = vpack.c.b16 %v58, %v57
  %vm61 = vcmask 130048
  %v63 = vsel %vm61, %v53, 0
  %v66 = vsel %vm61, %v54, 0
  %68 = vmatprep.subr.bf16.mxu0 0
  %69 = vmatpush1.bf16.msra.mxu0 %v59
  %70 = vmatprep.subr.bf16.mxu0 0
  %71 = vmatpush1.bf16.msra.mxu0 0
  %72 = vmatprep.subr.bf16.mxu0 0
  %73 = vmatpush1.bf16.msra.mxu0 0
  %74 = vmatprep.subr.bf16.mxu0 0
  %75 = vmatpush1.bf16.msra.mxu0 0
  %76 = vmatprep.subr.bf16.mxu0 0
  %77 = vmatpush1.bf16.msra.mxu0 0
  %78 = vmatprep.subr.bf16.mxu0 0
  %79 = vmatpush1.bf16.msra.mxu0 0
  %80 = vmatprep.subr.bf16.mxu0 0
  %81 = vmatpush1.bf16.msra.mxu0 0
  %82 = vmatprep.subr.bf16.mxu0 0
  %83 = vmatpush1.bf16.msra.mxu0 0
  %84 = vmatprep.subr.bf16.mxu0 0
  %85 = vmatpush1.bf16.msra.mxu0 0
  %86 = vmatprep.subr.bf16.mxu0 0
  %87 = vmatpush1.bf16.msra.mxu0 0
  %88 = vmatprep.subr.bf16.mxu0 0
  %89 = vmatpush1.bf16.msra.mxu0 0
  %90 = vmatprep.subr.bf16.mxu0 0
  %91 = vmatpush1.bf16.msra.mxu0 0
  %92 = vmatprep.subr.bf16.mxu0 0
  %93 = vmatpush1.bf16.msra.mxu0 0
  %94 = vmatprep.subr.bf16.mxu0 0
  %95 = vmatpush1.bf16.msra.mxu0 0
  %96 = vmatprep.subr.bf16.mxu0 0
  %97 = vmatpush1.bf16.msra.mxu0 0
  %98 = vmatprep.subr.bf16.mxu0 0
  %99 = vmatpush1.bf16.msra.mxu0 0
  %100 = vmatprep.mubr.bf16.mxu0 0
  %101 = vmatmul.mubr.bf16.gmra.mrb[0].mxu0 %v63
  %v102 = vpop.f32.mrb[0].mxu0
  %v103 = vadd.f32 0.0, %v102
  %v104 = vpop.f32.mrb[0].mxu0
  %v105 = vpop.f32.mrb[0].mxu0
  %v106 = vadd.f32 0.0, %v105
  %v107 = vpop.f32.mrb[0].mxu0
  %108 = vmatprep.mubr.bf16.mxu0 0
  %109 = vmatmul.mubr.bf16.gmra.mrb[0].mxu0 %v66
  %v110 = vpop.f32.mrb[0].mxu0
  %v111 = vadd.f32 0.0, %v110
  %v112 = vpop.f32.mrb[0].mxu0
  %v113 = vpop.f32.mrb[0].mxu0
  %v114 = vadd.f32 0.0, %v113
  %v115 = vpop.f32.mrb[0].mxu0
  %116 = vdwg.mxu0
  %v117 = vld [vmem:[%s2] sm:$0x1]
  %v119 = vlaneseq
  %v120 = vshrl.u32 %v119, 7
  %v121 = vsub.s32 0, %v120
  %v122 = vrot.slane %v117, %v121
  %v124 = vmul.f32 %v103, %v122
  %v125 = vmul.f32 %v106, %v122
  %v126 = vmul.f32 %v111, %v122
  %v127 = vmul.f32 %v114, %v122
  %v128 = vld [vmem:[%s3] sm:$0x1]
  %v130 = vlaneseq
  %v131 = vshrl.u32 %v130, 7
  %v132 = vsub.s32 0, %v131
  %v133 = vrot.slane %v128, %v132
  %v135 = vadd.f32 %v124, %v133
  %v136 = vadd.f32 %v125, %v133
  %v137 = vadd.f32 %v126, %v133
  %v138 = vadd.f32 %v127, %v133
  %v139 = vmax.f32 %v135, 0.0
  %v140 = vmax.f32 %v136, 0.0
  %v141 = vmax.f32 %v137, 0.0
  %v142 = vmax.f32 %v138, 0.0
  %v143 = vmin.f32 %v139, 6.0
  %v144 = vmin.f32 %v140, 6.0
  %v145 = vmin.f32 %v141, 6.0
  %v146 = vmin.f32 %v142, 6.0
  %v147 = vpack.c.bf16 %v144, %v143
  %v148 = vpack.c.bf16 %v146, %v145
  %v149 = vld [vmem:[%s4] sm:$0xf]
  %v150 = vld [vmem:[%s4 + $0x4] sm:$0xf]
  %v153 = vunpack.c.l.b16 %v149
  %v154 = vunpack.c.l.b16 %v150
  %v155 = vpack.c.b16 %v154, %v153
  %vm156 = vcmask 261120
  %v158 = vsel %vm156, %v155, 0
  %160 = vmatprep.subr.bf16.mxu0 0
  %161 = vmatpush1.bf16.msra.mxu0 %v147
  %162 = vmatprep.subr.bf16.mxu0 0
  %163 = vmatpush1.bf16.msra.mxu0 %v148
  %164 = vmatprep.subr.bf16.mxu0 0
  %165 = vmatpush1.bf16.msra.mxu0 0
  %166 = vmatprep.subr.bf16.mxu0 0
  %167 = vmatpush1.bf16.msra.mxu0 0
  %168 = vmatprep.subr.bf16.mxu0 0
  %169 = vmatpush1.bf16.msra.mxu0 0
  %170 = vmatprep.subr.bf16.mxu0 0
  %171 = vmatpush1.bf16.msra.mxu0 0
  %172 = vmatprep.subr.bf16.mxu0 0
  %173 = vmatpush1.bf16.msra.mxu0 0
  %174 = vmatprep.subr.bf16.mxu0 0
  %175 = vmatpush1.bf16.msra.mxu0 0
  %176 = vmatprep.subr.bf16.mxu0 0
  %177 = vmatpush1.bf16.msra.mxu0 0
  %178 = vmatprep.subr.bf16.mxu0 0
  %179 = vmatpush1.bf16.msra.mxu0 0
  %180 = vmatprep.subr.bf16.mxu0 0
  %181 = vmatpush1.bf16.msra.mxu0 0
  %182 = vmatprep.subr.bf16.mxu0 0
  %183 = vmatpush1.bf16.msra.mxu0 0
  %184 = vmatprep.subr.bf16.mxu0 0
  %185 = vmatpush1.bf16.msra.mxu0 0
  %186 = vmatprep.subr.bf16.mxu0 0
  %187 = vmatpush1.bf16.msra.mxu0 0
  %188 = vmatprep.subr.bf16.mxu0 0
  %189 = vmatpush1.bf16.msra.mxu0 0
  %190 = vmatprep.subr.bf16.mxu0 0
  %191 = vmatpush1.bf16.msra.mxu0 0
  %192 = vmatprep.mubr.bf16.mxu0 0
  %193 = vmatmul.mubr.bf16.gmra.mrb[0].mxu0 %v158
  %v194 = vpop.f32.mrb[0].mxu0
  %v195 = vadd.f32 0.0, %v194
  %v196 = vpop.f32.mrb[0].mxu0
  %v197 = vpop.f32.mrb[0].mxu0
  %v198 = vadd.f32 0.0, %v197
  %v199 = vpop.f32.mrb[0].mxu0
  %200 = vdwg.mxu0
  %v201 = vld [vmem:[%s5] sm:$0x1]
  %v203 = vlaneseq
  %v204 = vshrl.u32 %v203, 7
  %v205 = vsub.s32 0, %v204
  %v206 = vrot.slane %v201, %v205
  %v208 = vmul.f32 %v195, %v206
  %v209 = vmul.f32 %v198, %v206
  %v210 = vadd.f32 %v208, 0.0
  %v211 = vadd.f32 %v209, 0.0
  %s212 = scalar_lea.vmem %s4, 8
  %v213 = vld [vmem:[%s212] sm:$0xf]
  %v214 = vld [vmem:[%s212 + $0x4] sm:$0xf]
  %v217 = vunpack.c.l.b16 %v213
  %v218 = vunpack.c.l.b16 %v214
  %v219 = vpack.c.b16 %v218, %v217
  %v221 = vsel %vm156, %v219, 0
  %223 = vmatprep.subr.bf16.mxu0 0
  %224 = vmatpush1.bf16.msra.mxu0 %v147
  %225 = vmatprep.subr.bf16.mxu0 0
  %226 = vmatpush1.bf16.msra.mxu0 %v148
  %227 = vmatprep.subr.bf16.mxu0 0
  %228 = vmatpush1.bf16.msra.mxu0 0
  %229 = vmatprep.subr.bf16.mxu0 0
  %230 = vmatpush1.bf16.msra.mxu0 0
  %231 = vmatprep.subr.bf16.mxu0 0
  %232 = vmatpush1.bf16.msra.mxu0 0
  %233 = vmatprep.subr.bf16.mxu0 0
  %234 = vmatpush1.bf16.msra.mxu0 0
  %235 = vmatprep.subr.bf16.mxu0 0
  %236 = vmatpush1.bf16.msra.mxu0 0
  %237 = vmatprep.subr.bf16.mxu0 0
  %238 = vmatpush1.bf16.msra.mxu0 0
  %239 = vmatprep.subr.bf16.mxu0 0
  %240 = vmatpush1.bf16.msra.mxu0 0
  %241 = vmatprep.subr.bf16.mxu0 0
  %242 = vmatpush1.bf16.msra.mxu0 0
  %243 = vmatprep.subr.bf16.mxu0 0
  %244 = vmatpush1.bf16.msra.mxu0 0
  %245 = vmatprep.subr.bf16.mxu0 0
  %246 = vmatpush1.bf16.msra.mxu0 0
  %247 = vmatprep.subr.bf16.mxu0 0
  %248 = vmatpush1.bf16.msra.mxu0 0
  %249 = vmatprep.subr.bf16.mxu0 0
  %250 = vmatpush1.bf16.msra.mxu0 0
  %251 = vmatprep.subr.bf16.mxu0 0
  %252 = vmatpush1.bf16.msra.mxu0 0
  %253 = vmatprep.subr.bf16.mxu0 0
  %254 = vmatpush1.bf16.msra.mxu0 0
  %255 = vmatprep.mubr.bf16.mxu0 0
  %256 = vmatmul.mubr.bf16.gmra.mrb[0].mxu0 %v221
  %v257 = vpop.f32.mrb[0].mxu0
  %v258 = vadd.f32 0.0, %v257
  %v259 = vpop.f32.mrb[0].mxu0
  %v260 = vpop.f32.mrb[0].mxu0
  %v261 = vadd.f32 0.0, %v260
  %v262 = vpop.f32.mrb[0].mxu0
  %263 = vdwg.mxu0
  %s264 = scalar_lea.vmem %s5, 1
  %v265 = vld [vmem:[%s264] sm:$0x1]
  %v267 = vlaneseq
  %v268 = vshrl.u32 %v267, 7
  %v269 = vsub.s32 0, %v268
  %v270 = vrot.slane %v265, %v269
  %v272 = vmul.f32 %v258, %v270
  %v273 = vmul.f32 %v261, %v270
  %v274 = vadd.f32 %v210, %v272
  %v275 = vadd.f32 %v211, %v273
  %s276 = scalar_lea.vmem %s4, 16
  %v277 = vld [vmem:[%s276] sm:$0xf]
  %v278 = vld [vmem:[%s276 + $0x4] sm:$0xf]
  %v281 = vunpack.c.l.b16 %v277
  %v282 = vunpack.c.l.b16 %v278
  %v283 = vpack.c.b16 %v282, %v281
  %v285 = vsel %vm156, %v283, 0
  %287 = vmatprep.subr.bf16.mxu0 0
  %288 = vmatpush1.bf16.msra.mxu0 %v147
  %289 = vmatprep.subr.bf16.mxu0 0
  %290 = vmatpush1.bf16.msra.mxu0 %v148
  %291 = vmatprep.subr.bf16.mxu0 0
  %292 = vmatpush1.bf16.msra.mxu0 0
  %293 = vmatprep.subr.bf16.mxu0 0
  %294 = vmatpush1.bf16.msra.mxu0 0
  %295 = vmatprep.subr.bf16.mxu0 0
  %296 = vmatpush1.bf16.msra.mxu0 0
  %297 = vmatprep.subr.bf16.mxu0 0
  %298 = vmatpush1.bf16.msra.mxu0 0
  %299 = vmatprep.subr.bf16.mxu0 0
  %300 = vmatpush1.bf16.msra.mxu0 0
  %301 = vmatprep.subr.bf16.mxu0 0
  %302 = vmatpush1.bf16.msra.mxu0 0
  %303 = vmatprep.subr.bf16.mxu0 0
  %304 = vmatpush1.bf16.msra.mxu0 0
  %305 = vmatprep.subr.bf16.mxu0 0
  %306 = vmatpush1.bf16.msra.mxu0 0
  %307 = vmatprep.subr.bf16.mxu0 0
  %308 = vmatpush1.bf16.msra.mxu0 0
  %309 = vmatprep.subr.bf16.mxu0 0
  %310 = vmatpush1.bf16.msra.mxu0 0
  %311 = vmatprep.subr.bf16.mxu0 0
  %312 = vmatpush1.bf16.msra.mxu0 0
  %313 = vmatprep.subr.bf16.mxu0 0
  %314 = vmatpush1.bf16.msra.mxu0 0
  %315 = vmatprep.subr.bf16.mxu0 0
  %316 = vmatpush1.bf16.msra.mxu0 0
  %317 = vmatprep.subr.bf16.mxu0 0
  %318 = vmatpush1.bf16.msra.mxu0 0
  %319 = vmatprep.mubr.bf16.mxu0 0
  %320 = vmatmul.mubr.bf16.gmra.mrb[0].mxu0 %v285
  %v321 = vpop.f32.mrb[0].mxu0
  %v322 = vadd.f32 0.0, %v321
  %v323 = vpop.f32.mrb[0].mxu0
  %v324 = vpop.f32.mrb[0].mxu0
  %v325 = vadd.f32 0.0, %v324
  %v326 = vpop.f32.mrb[0].mxu0
  %327 = vdwg.mxu0
  %s328 = scalar_lea.vmem %s5, 2
  %v329 = vld [vmem:[%s328] sm:$0x1]
  %v331 = vlaneseq
  %v332 = vshrl.u32 %v331, 7
  %v333 = vsub.s32 0, %v332
  %v334 = vrot.slane %v329, %v333
  %v336 = vmul.f32 %v322, %v334
  %v337 = vmul.f32 %v325, %v334
  %v338 = vadd.f32 %v274, %v336
  %v339 = vadd.f32 %v275, %v337
  %v340 = vld [vmem:[%s6] sm:$0x1]
  %v342 = vlaneseq
  %v343 = vshrl.u32 %v342, 7
  %v344 = vsub.s32 0, %v343
  %v345 = vrot.slane %v340, %v344
  %v347 = vmul.f32 %v338, %v345
  %v348 = vmul.f32 %v339, %v345
  %v349 = vld [vmem:[%s7] sm:$0x1]
  %v351 = vlaneseq
  %v352 = vshrl.u32 %v351, 7
  %v353 = vsub.s32 0, %v352
  %v354 = vrot.slane %v349, %v353
  %v356 = vadd.f32 %v347, %v354
  %v357 = vadd.f32 %v348, %v354
  %v358 = vmax.f32 %v356, 0.0
  %v359 = vmax.f32 %v357, 0.0
  %v360 = vmin.f32 %v358, 6.0
  %v361 = vmin.f32 %v359, 6.0
  %v362 = vpack.c.bf16 %v361, %v360
  %v363 = vld [vmem:[%s8] sm:$0xf]
  %v364 = vld [vmem:[%s8 + $0x4] sm:$0xf]
  %v365 = vld [vmem:[%s8 + $0x8] sm:$0xf]
  %v366 = vld [vmem:[%s8 + $0xc] sm:$0xf]
  %v367 = vld [vmem:[%s8 + $0x10] sm:$0xf]
  %v368 = vld [vmem:[%s8 + $0x14] sm:$0xf]
  %v369 = vld [vmem:[%s8 + $0x18] sm:$0xf]
  %v370 = vld [vmem:[%s8 + $0x1c] sm:$0xf]
  %v371 = vld [vmem:[%s8 + $0x20] sm:$0xf]
  %v372 = vld [vmem:[%s8 + $0x24] sm:$0xf]
  %v373 = vld [vmem:[%s8 + $0x28] sm:$0xf]
  %v374 = vld [vmem:[%s8 + $0x2c] sm:$0xf]
  %v387 = vunpack.c.l.b16 %v363
  %v388 = vunpack.c.l.b16 %v364
  %v389 = vunpack.c.l.b16 %v365
  %v390 = vunpack.c.l.b16 %v366
  %v391 = vunpack.c.l.b16 %v367
  %v392 = vunpack.c.l.b16 %v368
  %v393 = vunpack.c.l.b16 %v369
  %v394 = vunpack.c.l.b16 %v370
  %v395 = vunpack.c.l.b16 %v371
  %v396 = vunpack.c.l.b16 %v372
  %v397 = vunpack.c.l.b16 %v373
  %v398 = vunpack.c.l.b16 %v374
  %v399 = vpack.c.b16 %v388, %v387
  %v400 = vpack.c.b16 %v390, %v389
  %v401 = vpack.c.b16 %v392, %v391
  %v402 = vpack.c.b16 %v394, %v393
  %v403 = vpack.c.b16 %v396, %v395
  %v404 = vpack.c.b16 %v398, %v397
  %vm411 = vcmask 785408
  %v413 = vsel %vm411, %v362, 0
  %415 = vmatprep.subr.bf16.mxu0 0
  %416 = vmatpush1.bf16.msra.mxu0 %v399
  %417 = vmatprep.subr.bf16.mxu0 0
  %418 = vmatpush1.bf16.msra.mxu0 %v400
  %419 = vmatprep.subr.bf16.mxu0 0
  %420 = vmatpush1.bf16.msra.mxu0 %v401
  %421 = vmatprep.subr.bf16.mxu0 0
  %422 = vmatpush1.bf16.msra.mxu0 %v402
  %423 = vmatprep.subr.bf16.mxu0 0
  %424 = vmatpush1.bf16.msra.mxu0 %v403
  %425 = vmatprep.subr.bf16.mxu0 0
  %426 = vmatpush1.bf16.msra.mxu0 %v404
  %427 = vmatprep.subr.bf16.mxu0 0
  %428 = vmatpush1.bf16.msra.mxu0 0
  %429 = vmatprep.subr.bf16.mxu0 0
  %430 = vmatpush1.bf16.msra.mxu0 0
  %431 = vmatprep.subr.bf16.mxu0 0
  %432 = vmatpush1.bf16.msra.mxu0 0
  %433 = vmatprep.subr.bf16.mxu0 0
  %434 = vmatpush1.bf16.msra.mxu0 0
  %435 = vmatprep.subr.bf16.mxu0 0
  %436 = vmatpush1.bf16.msra.mxu0 0
  %437 = vmatprep.subr.bf16.mxu0 0
  %438 = vmatpush1.bf16.msra.mxu0 0
  %439 = vmatprep.subr.bf16.mxu0 0
  %440 = vmatpush1.bf16.msra.mxu0 0
  %441 = vmatprep.subr.bf16.mxu0 0
  %442 = vmatpush1.bf16.msra.mxu0 0
  %443 = vmatprep.subr.bf16.mxu0 0
  %444 = vmatpush1.bf16.msra.mxu0 0
  %445 = vmatprep.subr.bf16.mxu0 0
  %446 = vmatpush1.bf16.msra.mxu0 0
  %447 = vmatprep.mubr.bf16.mxu0 0
  %448 = vmatmul.mubr.bf16.gmra.mrb[0].mxu0 %v413
  %v449 = vpop.f32.mrb[0].mxu0
  %v450 = vadd.f32 0.0, %v449
  %v451 = vpop.f32.mrb[0].mxu0
  %v452 = vpop.f32.mrb[0].mxu0
  %v453 = vadd.f32 0.0, %v452
  %v454 = vpop.f32.mrb[0].mxu0
  %455 = vdwg.mxu0
  %v456 = vld [vmem:[%s9] sm:$0x1]
  %v458 = vlaneseq
  %v459 = vshrl.u32 %v458, 7
  %v460 = vsub.s32 0, %v459
  %v461 = vrot.slane %v456, %v460
  %v463 = vmul.f32 %v450, %v461
  %v464 = vmul.f32 %v453, %v461
  %v465 = vld [vmem:[%s10] sm:$0x1]
  %v467 = vlaneseq
  %v468 = vshrl.u32 %v467, 7
  %v469 = vsub.s32 0, %v468
  %v470 = vrot.slane %v465, %v469
  %v472 = vadd.f32 %v463, %v470
  %v473 = vadd.f32 %v464, %v470
  %v474 = vpack.c.bf16 %v473, %v472
  %v476 = vunpack.c.l.b16 %v474
  %v477 = vunpack.c.h.b16 %v474
  %v478 = vpack.c.b16 %v476, %v476
  %v479 = vpack.c.b16 %v477, %v477
  %vm482 = vcmask 257024
  %483 = vst.msk [vmem:[%s11] sm:$0xf] %vm482, %v478
  %484 = vst.msk [vmem:[%s11 + $0x4] sm:$0xf] %vm482, %v479
  // Predicated region
  $region46: #{_lambda_.9} parent=0 // pred_check
    _
  $region47: #{_lambda_.9} parent=0 // pred_check_branch
    %486 = sbr.rel (0) target = $region49
  $region48: #{_lambda_.9} parent=0 // pred_region
    _
  $region49: #{_lambda_.9} parent=0 // pred_fallthru
    _
  // Predicated region
  $region50: #{_lambda_.9} parent=0 // pred_check
    _
  $region51: #{_lambda_.9} parent=0 // pred_check_branch
    %488 = sbr.rel (0) target = $region53
  $region52: #{_lambda_.9} parent=0 // pred_region
    _
  $region53: #{_lambda_.9} parent=0 // pred_fallthru
    _

// kernel: _lambda_.8
$region0: #{_lambda_.8}
  #allocation0 [shape = 'u32[]', space=smem, size = 0x4, offset = 0x4, fixed_abs, tag = 'smem constant byte address 0x4 - core index']
  #allocation1 [shape = 'u32[144,128]{1,0:T(1,128)}', space=vmem, size = 0x12000, scoped, tag = 'internal scratch']
  %s0 = inlined_call_operand.vmem [shape: bf16[64,32], index: 0, kind: input, shape index: {}]
  %s1 = inlined_call_operand.vmem [shape: bf16[3,32,64], index: 1, kind: input, shape index: {}]
  %s2 = inlined_call_operand.vmem [shape: f32[3,1,32], index: 2, kind: input, shape index: {}]
  %s3 = inlined_call_operand.vmem [shape: f32[1,32], index: 3, kind: input, shape index: {}]
  %s4 = inlined_call_operand.vmem [shape: f32[1,32], index: 4, kind: input, shape index: {}]
  %s5 = inlined_call_operand.vmem [shape: bf16[32,16], index: 5, kind: input, shape index: {}]
  %s6 = inlined_call_operand.vmem [shape: f32[1,16], index: 6, kind: input, shape index: {}]
  %s7 = inlined_call_operand.vmem [shape: f32[1,16], index: 7, kind: input, shape index: {}]
  %s8 = inlined_call_operand.vmem [shape: bf16[32,16], index: 8, kind: output, shape index: {}]
  %s9 = sld [smem:[#allocation0]]
  $region42: #{_lambda_.8} parent=0
    _
  %s11 = ssub.s32 1, %s9
  %s12 = scalar_select 0, %s11, %s9
  // Predicated region
  $region2: #{_lambda_.8} parent=0 // pred_check
    _
  $region3: #{_lambda_.8} parent=0 // pred_check_branch
    %14 = sbr.rel (0) target = $region5
  $region4: #{_lambda_.8} parent=0 // pred_region
    _
  $region5: #{_lambda_.8} parent=0 // pred_fallthru
    _
  // Predicated region
  $region6: #{_lambda_.8} parent=0 // pred_check
    _
  $region7: #{_lambda_.8} parent=0 // pred_check_branch
    %16 = sbr.rel (0) target = $region9
  $region8: #{_lambda_.8} parent=0 // pred_region
    _
  $region9: #{_lambda_.8} parent=0 // pred_fallthru
    _
  // Predicated region
  $region10: #{_lambda_.8} parent=0 // pred_check
    _
  $region11: #{_lambda_.8} parent=0 // pred_check_branch
    %18 = sbr.rel (0) target = $region13
  $region12: #{_lambda_.8} parent=0 // pred_region
    _
  $region13: #{_lambda_.8} parent=0 // pred_fallthru
    _
  // Predicated region
  $region14: #{_lambda_.8} parent=0 // pred_check
    _
  $region15: #{_lambda_.8} parent=0 // pred_check_branch
    %20 = sbr.rel (0) target = $region17
  $region16: #{_lambda_.8} parent=0 // pred_region
    _
  $region17: #{_lambda_.8} parent=0 // pred_fallthru
    _
  // Predicated region
  $region18: #{_lambda_.8} parent=0 // pred_check
    _
  $region19: #{_lambda_.8} parent=0 // pred_check_branch
    %22 = sbr.rel (0) target = $region21
  $region20: #{_lambda_.8} parent=0 // pred_region
    _
  $region21: #{_lambda_.8} parent=0 // pred_fallthru
    _
  // Predicated region
  $region22: #{_lambda_.8} parent=0 // pred_check
    _
  $region23: #{_lambda_.8} parent=0 // pred_check_branch
    %24 = sbr.rel (0) target = $region25
  $region24: #{_lambda_.8} parent=0 // pred_region
    _
  $region25: #{_lambda_.8} parent=0 // pred_fallthru
    _
  // Predicated region
  $region26: #{_lambda_.8} parent=0 // pred_check
    _
  $region27: #{_lambda_.8} parent=0 // pred_check_branch
    %26 = sbr.rel (0) target = $region29
  $region28: #{_lambda_.8} parent=0 // pred_region
    _
  $region29: #{_lambda_.8} parent=0 // pred_fallthru
    _
  // Predicated region
  $region30: #{_lambda_.8} parent=0 // pred_check
    _
  $region31: #{_lambda_.8} parent=0 // pred_check_branch
    %28 = sbr.rel (0) target = $region33
  $region32: #{_lambda_.8} parent=0 // pred_region
    _
  $region33: #{_lambda_.8} parent=0 // pred_fallthru
    _
  %v30 = vld [vmem:[%s0] sm:$0xf]
  %v31 = vld [vmem:[%s0 + $0x4] sm:$0xf]
  %v32 = vld [vmem:[%s0 + $0x8] sm:$0xf]
  %v33 = vld [vmem:[%s0 + $0xc] sm:$0xf]
  %v34 = vld [vmem:[%s0 + $0x10] sm:$0xf]
  %v35 = vld [vmem:[%s0 + $0x14] sm:$0xf]
  %v36 = vld [vmem:[%s0 + $0x18] sm:$0xf]
  %v37 = vld [vmem:[%s0 + $0x1c] sm:$0xf]
  %v38 = vld [vmem:[%s1] sm:$0xf]
  %v39 = vld [vmem:[%s1 + $0x4] sm:$0xf]
  %v40 = vld [vmem:[%s1 + $0x8] sm:$0xf]
  %v41 = vld [vmem:[%s1 + $0xc] sm:$0xf]
  %v46 = vunpack.c.l.b16 %v38
  %v47 = vunpack.c.l.b16 %v39
  %v48 = vunpack.c.l.b16 %v40
  %v49 = vunpack.c.l.b16 %v41
  %v50 = vpack.c.b16 %v47, %v46
  %v51 = vpack.c.b16 %v49, %v48
  %v60 = vunpack.c.l.b16 %v30
  %v61 = vunpack.c.l.b16 %v31
  %v62 = vunpack.c.l.b16 %v32
  %v63 = vunpack.c.l.b16 %v33
  %v64 = vunpack.c.l.b16 %v34
  %v65 = vunpack.c.l.b16 %v35
  %v66 = vunpack.c.l.b16 %v36
  %v67 = vunpack.c.l.b16 %v37
  %v68 = vpack.c.b16 %v61, %v60
  %v69 = vpack.c.b16 %v63, %v62
  %v70 = vpack.c.b16 %v65, %v64
  %v71 = vpack.c.b16 %v67, %v66
  %vm76 = vcmask 523264
  %v78 = vsel %vm76, %v50, 0
  %v81 = vsel %vm76, %v51, 0
  %83 = vmatprep.subr.bf16.mxu0 0
  %84 = vmatpush1.bf16.msra.mxu0 %v68
  %85 = vmatprep.subr.bf16.mxu0 0
  %86 = vmatpush1.bf16.msra.mxu0 %v69
  %87 = vmatprep.subr.bf16.mxu0 0
  %88 = vmatpush1.bf16.msra.mxu0 %v70
  %89 = vmatprep.subr.bf16.mxu0 0
  %90 = vmatpush1.bf16.msra.mxu0 %v71
  %91 = vmatprep.subr.bf16.mxu0 0
  %92 = vmatpush1.bf16.msra.mxu0 0
  %93 = vmatprep.subr.bf16.mxu0 0
  %94 = vmatpush1.bf16.msra.mxu0 0
  %95 = vmatprep.subr.bf16.mxu0 0
  %96 = vmatpush1.bf16.msra.mxu0 0
  %97 = vmatprep.subr.bf16.mxu0 0
  %98 = vmatpush1.bf16.msra.mxu0 0
  %99 = vmatprep.subr.bf16.mxu0 0
  %100 = vmatpush1.bf16.msra.mxu0 0
  %101 = vmatprep.subr.bf16.mxu0 0
  %102 = vmatpush1.bf16.msra.mxu0 0
  %103 = vmatprep.subr.bf16.mxu0 0
  %104 = vmatpush1.bf16.msra.mxu0 0
  %105 = vmatprep.subr.bf16.mxu0 0
  %106 = vmatpush1.bf16.msra.mxu0 0
  %107 = vmatprep.subr.bf16.mxu0 0
  %108 = vmatpush1.bf16.msra.mxu0 0
  %109 = vmatprep.subr.bf16.mxu0 0
  %110 = vmatpush1.bf16.msra.mxu0 0
  %111 = vmatprep.subr.bf16.mxu0 0
  %112 = vmatpush1.bf16.msra.mxu0 0
  %113 = vmatprep.subr.bf16.mxu0 0
  %114 = vmatpush1.bf16.msra.mxu0 0
  %115 = vmatprep.mubr.bf16.mxu0 0
  %116 = vmatmul.mubr.bf16.gmra.mrb[0].mxu0 %v78
  %v117 = vpop.f32.mrb[0].mxu0
  %v118 = vadd.f32 0.0, %v117
  %v119 = vpop.f32.mrb[0].mxu0
  %v120 = vpop.f32.mrb[0].mxu0
  %v121 = vadd.f32 0.0, %v120
  %v122 = vpop.f32.mrb[0].mxu0
  %123 = vmatprep.mubr.bf16.mxu0 0
  %124 = vmatmul.mubr.bf16.gmra.mrb[0].mxu0 %v81
  %v125 = vpop.f32.mrb[0].mxu0
  %v126 = vadd.f32 0.0, %v125
  %v127 = vpop.f32.mrb[0].mxu0
  %v128 = vpop.f32.mrb[0].mxu0
  %v129 = vadd.f32 0.0, %v128
  %v130 = vpop.f32.mrb[0].mxu0
  %131 = vdwg.mxu0
  %v132 = vld [vmem:[%s2] sm:$0x1]
  %v134 = vlaneseq
  %v135 = vshrl.u32 %v134, 7
  %v136 = vsub.s32 0, %v135
  %v137 = vrot.slane %v132, %v136
  %v139 = vmul.f32 %v118, %v137
  %v140 = vmul.f32 %v121, %v137
  %v141 = vmul.f32 %v126, %v137
  %v142 = vmul.f32 %v129, %v137
  %v143 = vadd.f32 %v139, 0.0
  %v144 = vadd.f32 %v140, 0.0
  %v145 = vadd.f32 %v141, 0.0
  %v146 = vadd.f32 %v142, 0.0
  %s147 = scalar_lea.vmem %s1, 16
  %v148 = vld [vmem:[%s147] sm:$0xf]
  %v149 = vld [vmem:[%s147 + $0x4] sm:$0xf]
  %v150 = vld [vmem:[%s147 + $0x8] sm:$0xf]
  %v151 = vld [vmem:[%s147 + $0xc] sm:$0xf]
  %v156 = vunpack.c.l.b16 %v148
  %v157 = vunpack.c.l.b16 %v149
  %v158 = vunpack.c.l.b16 %v150
  %v159 = vunpack.c.l.b16 %v151
  %v160 = vpack.c.b16 %v157, %v156
  %v161 = vpack.c.b16 %v159, %v158
  %v163 = vsel %vm76, %v160, 0
  %v166 = vsel %vm76, %v161, 0
  %168 = vmatprep.subr.bf16.mxu0 0
  %169 = vmatpush1.bf16.msra.mxu0 %v68
  %170 = vmatprep.subr.bf16.mxu0 0
  %171 = vmatpush1.bf16.msra.mxu0 %v69
  %172 = vmatprep.subr.bf16.mxu0 0
  %173 = vmatpush1.bf16.msra.mxu0 %v70
  %174 = vmatprep.subr.bf16.mxu0 0
  %175 = vmatpush1.bf16.msra.mxu0 %v71
  %176 = vmatprep.subr.bf16.mxu0 0
  %177 = vmatpush1.bf16.msra.mxu0 0
  %178 = vmatprep.subr.bf16.mxu0 0
  %179 = vmatpush1.bf16.msra.mxu0 0
  %180 = vmatprep.subr.bf16.mxu0 0
  %181 = vmatpush1.bf16.msra.mxu0 0
  %182 = vmatprep.subr.bf16.mxu0 0
  %183 = vmatpush1.bf16.msra.mxu0 0
  %184 = vmatprep.subr.bf16.mxu0 0
  %185 = vmatpush1.bf16.msra.mxu0 0
  %186 = vmatprep.subr.bf16.mxu0 0
  %187 = vmatpush1.bf16.msra.mxu0 0
  %188 = vmatprep.subr.bf16.mxu0 0
  %189 = vmatpush1.bf16.msra.mxu0 0
  %190 = vmatprep.subr.bf16.mxu0 0
  %191 = vmatpush1.bf16.msra.mxu0 0
  %192 = vmatprep.subr.bf16.mxu0 0
  %193 = vmatpush1.bf16.msra.mxu0 0
  %194 = vmatprep.subr.bf16.mxu0 0
  %195 = vmatpush1.bf16.msra.mxu0 0
  %196 = vmatprep.subr.bf16.mxu0 0
  %197 = vmatpush1.bf16.msra.mxu0 0
  %198 = vmatprep.subr.bf16.mxu0 0
  %199 = vmatpush1.bf16.msra.mxu0 0
  %200 = vmatprep.mubr.bf16.mxu0 0
  %201 = vmatmul.mubr.bf16.gmra.mrb[0].mxu0 %v163
  %v202 = vpop.f32.mrb[0].mxu0
  %v203 = vadd.f32 0.0, %v202
  %v204 = vpop.f32.mrb[0].mxu0
  %v205 = vpop.f32.mrb[0].mxu0
  %v206 = vadd.f32 0.0, %v205
  %v207 = vpop.f32.mrb[0].mxu0
  %208 = vmatprep.mubr.bf16.mxu0 0
  %209 = vmatmul.mubr.bf16.gmra.mrb[0].mxu0 %v166
  %v210 = vpop.f32.mrb[0].mxu0
  %v211 = vadd.f32 0.0, %v210
  %v212 = vpop.f32.mrb[0].mxu0
  %v213 = vpop.f32.mrb[0].mxu0
  %v214 = vadd.f32 0.0, %v213
  %v215 = vpop.f32.mrb[0].mxu0
  %216 = vdwg.mxu0
  %s217 = scalar_lea.vmem %s2, 1
  %v218 = vld [vmem:[%s217] sm:$0x1]
  %v220 = vlaneseq
  %v221 = vshrl.u32 %v220, 7
  %v222 = vsub.s32 0, %v221
  %v223 = vrot.slane %v218, %v222
  %v225 = vmul.f32 %v203, %v223
  %v226 = vmul.f32 %v206, %v223
  %v227 = vmul.f32 %v211, %v223
  %v228 = vmul.f32 %v214, %v223
  %v229 = vadd.f32 %v143, %v225
  %v230 = vadd.f32 %v144, %v226
  %v231 = vadd.f32 %v145, %v227
  %v232 = vadd.f32 %v146, %v228
  %s233 = scalar_lea.vmem %s1, 32
  %v234 = vld [vmem:[%s233] sm:$0xf]
  %v235 = vld [vmem:[%s233 + $0x4] sm:$0xf]
  %v236 = vld [vmem:[%s233 + $0x8] sm:$0xf]
  %v237 = vld [vmem:[%s233 + $0xc] sm:$0xf]
  %v242 = vunpack.c.l.b16 %v234
  %v243 = vunpack.c.l.b16 %v235
  %v244 = vunpack.c.l.b16 %v236
  %v245 = vunpack.c.l.b16 %v237
  %v246 = vpack.c.b16 %v243, %v242
  %v247 = vpack.c.b16 %v245, %v244
  %v249 = vsel %vm76, %v246, 0
  %v252 = vsel %vm76, %v247, 0
  %254 = vmatprep.subr.bf16.mxu0 0
  %255 = vmatpush1.bf16.msra.mxu0 %v68
  %256 = vmatprep.subr.bf16.mxu0 0
  %257 = vmatpush1.bf16.msra.mxu0 %v69
  %258 = vmatprep.subr.bf16.mxu0 0
  %259 = vmatpush1.bf16.msra.mxu0 %v70
  %260 = vmatprep.subr.bf16.mxu0 0
  %261 = vmatpush1.bf16.msra.mxu0 %v71
  %262 = vmatprep.subr.bf16.mxu0 0
  %263 = vmatpush1.bf16.msra.mxu0 0
  %264 = vmatprep.subr.bf16.mxu0 0
  %265 = vmatpush1.bf16.msra.mxu0 0
  %266 = vmatprep.subr.bf16.mxu0 0
  %267 = vmatpush1.bf16.msra.mxu0 0
  %268 = vmatprep.subr.bf16.mxu0 0
  %269 = vmatpush1.bf16.msra.mxu0 0
  %270 = vmatprep.subr.bf16.mxu0 0
  %271 = vmatpush1.bf16.msra.mxu0 0
  %272 = vmatprep.subr.bf16.mxu0 0
  %273 = vmatpush1.bf16.msra.mxu0 0
  %274 = vmatprep.subr.bf16.mxu0 0
  %275 = vmatpush1.bf16.msra.mxu0 0
  %276 = vmatprep.subr.bf16.mxu0 0
  %277 = vmatpush1.bf16.msra.mxu0 0
  %278 = vmatprep.subr.bf16.mxu0 0
  %279 = vmatpush1.bf16.msra.mxu0 0
  %280 = vmatprep.subr.bf16.mxu0 0
  %281 = vmatpush1.bf16.msra.mxu0 0
  %282 = vmatprep.subr.bf16.mxu0 0
  %283 = vmatpush1.bf16.msra.mxu0 0
  %284 = vmatprep.subr.bf16.mxu0 0
  %285 = vmatpush1.bf16.msra.mxu0 0
  %286 = vmatprep.mubr.bf16.mxu0 0
  %287 = vmatmul.mubr.bf16.gmra.mrb[0].mxu0 %v249
  %v288 = vpop.f32.mrb[0].mxu0
  %v289 = vadd.f32 0.0, %v288
  %v290 = vpop.f32.mrb[0].mxu0
  %v291 = vpop.f32.mrb[0].mxu0
  %v292 = vadd.f32 0.0, %v291
  %v293 = vpop.f32.mrb[0].mxu0
  %294 = vmatprep.mubr.bf16.mxu0 0
  %295 = vmatmul.mubr.bf16.gmra.mrb[0].mxu0 %v252
  %v296 = vpop.f32.mrb[0].mxu0
  %v297 = vadd.f32 0.0, %v296
  %v298 = vpop.f32.mrb[0].mxu0
  %v299 = vpop.f32.mrb[0].mxu0
  %v300 = vadd.f32 0.0, %v299
  %v301 = vpop.f32.mrb[0].mxu0
  %302 = vdwg.mxu0
  %s303 = scalar_lea.vmem %s2, 2
  %v304 = vld [vmem:[%s303] sm:$0x1]
  %v306 = vlaneseq
  %v307 = vshrl.u32 %v306, 7
  %v308 = vsub.s32 0, %v307
  %v309 = vrot.slane %v304, %v308
  %v311 = vmul.f32 %v289, %v309
  %v312 = vmul.f32 %v292, %v309
  %v313 = vmul.f32 %v297, %v309
  %v314 = vmul.f32 %v300, %v309
  %v315 = vadd.f32 %v229, %v311
  %v316 = vadd.f32 %v230, %v312
  %v317 = vadd.f32 %v231, %v313
  %v318 = vadd.f32 %v232, %v314
  %v319 = vld [vmem:[%s3] sm:$0x1]
  %v321 = vlaneseq
  %v322 = vshrl.u32 %v321, 7
  %v323 = vsub.s32 0, %v322
  %v324 = vrot.slane %v319, %v323
  %v326 = vmul.f32 %v315, %v324
  %v327 = vmul.f32 %v316, %v324
  %v328 = vmul.f32 %v317, %v324
  %v329 = vmul.f32 %v318, %v324
  %v330 = vld [vmem:[%s4] sm:$0x1]
  %v332 = vlaneseq
  %v333 = vshrl.u32 %v332, 7
  %v334 = vsub.s32 0, %v333
  %v335 = vrot.slane %v330, %v334
  %v337 = vadd.f32 %v326, %v335
  %v338 = vadd.f32 %v327, %v335
  %v339 = vadd.f32 %v328, %v335
  %v340 = vadd.f32 %v329, %v335
  %v341 = vmax.f32 %v337, 0.0
  %v342 = vmax.f32 %v338, 0.0
  %v343 = vmax.f32 %v339, 0.0
  %v344 = vmax.f32 %v340, 0.0
  %v345 = vmin.f32 %v341, 6.0
  %v346 = vmin.f32 %v342, 6.0
  %v347 = vmin.f32 %v343, 6.0
  %v348 = vmin.f32 %v344, 6.0
  %v349 = vpack.c.bf16 %v346, %v345
  %v350 = vpack.c.bf16 %v348, %v347
  %v351 = vld [vmem:[%s5] sm:$0xf]
  %v352 = vld [vmem:[%s5 + $0x4] sm:$0xf]
  %v353 = vld [vmem:[%s5 + $0x8] sm:$0xf]
  %v354 = vld [vmem:[%s5 + $0xc] sm:$0xf]
  %v359 = vunpack.c.l.b16 %v351
  %v360 = vunpack.c.l.b16 %v352
  %v361 = vunpack.c.l.b16 %v353
  %v362 = vunpack.c.l.b16 %v354
  %v363 = vpack.c.b16 %v360, %v359
  %v364 = vpack.c.b16 %v362, %v361
  %vm367 = vcmask 261120
  %v369 = vsel %vm367, %v349, 0
  %v372 = vsel %vm367, %v350, 0
  %374 = vmatprep.subr.bf16.mxu0 0
  %375 = vmatpush1.bf16.msra.mxu0 %v363
  %376 = vmatprep.subr.bf16.mxu0 0
  %377 = vmatpush1.bf16.msra.mxu0 %v364
  %378 = vmatprep.subr.bf16.mxu0 0
  %379 = vmatpush1.bf16.msra.mxu0 0
  %380 = vmatprep.subr.bf16.mxu0 0
  %381 = vmatpush1.bf16.msra.mxu0 0
  %382 = vmatprep.subr.bf16.mxu0 0
  %383 = vmatpush1.bf16.msra.mxu0 0
  %384 = vmatprep.subr.bf16.mxu0 0
  %385 = vmatpush1.bf16.msra.mxu0 0
  %386 = vmatprep.subr.bf16.mxu0 0
  %387 = vmatpush1.bf16.msra.mxu0 0
  %388 = vmatprep.subr.bf16.mxu0 0
  %389 = vmatpush1.bf16.msra.mxu0 0
  %390 = vmatprep.subr.bf16.mxu0 0
  %391 = vmatpush1.bf16.msra.mxu0 0
  %392 = vmatprep.subr.bf16.mxu0 0
  %393 = vmatpush1.bf16.msra.mxu0 0
  %394 = vmatprep.subr.bf16.mxu0 0
  %395 = vmatpush1.bf16.msra.mxu0 0
  %396 = vmatprep.subr.bf16.mxu0 0
  %397 = vmatpush1.bf16.msra.mxu0 0
  %398 = vmatprep.subr.bf16.mxu0 0
  %399 = vmatpush1.bf16.msra.mxu0 0
  %400 = vmatprep.subr.bf16.mxu0 0
  %401 = vmatpush1.bf16.msra.mxu0 0
  %402 = vmatprep.subr.bf16.mxu0 0
  %403 = vmatpush1.bf16.msra.mxu0 0
  %404 = vmatprep.subr.bf16.mxu0 0
  %405 = vmatpush1.bf16.msra.mxu0 0
  %406 = vmatprep.mubr.bf16.mxu0 0
  %407 = vmatmul.mubr.bf16.gmra.mrb[0].mxu0 %v369
  %v408 = vpop.f32.mrb[0].mxu0
  %v409 = vadd.f32 0.0, %v408
  %v410 = vpop.f32.mrb[0].mxu0
  %v411 = vpop.f32.mrb[0].mxu0
  %v412 = vadd.f32 0.0, %v411
  %v413 = vpop.f32.mrb[0].mxu0
  %414 = vmatprep.mubr.bf16.mxu0 0
  %415 = vmatmul.mubr.bf16.gmra.mrb[0].mxu0 %v372
  %v416 = vpop.f32.mrb[0].mxu0
  %v417 = vadd.f32 0.0, %v416
  %v418 = vpop.f32.mrb[0].mxu0
  %v419 = vpop.f32.mrb[0].mxu0
  %v420 = vadd.f32 0.0, %v419
  %v421 = vpop.f32.mrb[0].mxu0
  %422 = vdwg.mxu0
  %v423 = vld [vmem:[%s6] sm:$0x1]
  %v425 = vlaneseq
  %v426 = vshrl.u32 %v425, 7
  %v427 = vsub.s32 0, %v426
  %v428 = vrot.slane %v423, %v427
  %v430 = vmul.f32 %v409, %v428
  %v431 = vmul.f32 %v412, %v428
  %v432 = vmul.f32 %v417, %v428
  %v433 = vmul.f32 %v420, %v428
  %v434 = vld [vmem:[%s7] sm:$0x1]
  %v436 = vlaneseq
  %v437 = vshrl.u32 %v436, 7
  %v438 = vsub.s32 0, %v437
  %v439 = vrot.slane %v434, %v438
  %v441 = vadd.f32 %v430, %v439
  %v442 = vadd.f32 %v431, %v439
  %v443 = vadd.f32 %v432, %v439
  %v444 = vadd.f32 %v433, %v439
  %v445 = vpack.c.bf16 %v442, %v441
  %v446 = vpack.c.bf16 %v444, %v443
  %v449 = vunpack.c.l.b16 %v445
  %v450 = vunpack.c.h.b16 %v445
  %v451 = vunpack.c.l.b16 %v446
  %v452 = vunpack.c.h.b16 %v446
  %v453 = vpack.c.b16 %v449, %v449
  %v454 = vpack.c.b16 %v450, %v450
  %v455 = vpack.c.b16 %v451, %v451
  %v456 = vpack.c.b16 %v452, %v452
  %vm461 = vcmask 125952
  %462 = vst.msk [vmem:[%s8] sm:$0xf] %vm461, %v453
  %463 = vst.msk [vmem:[%s8 + $0x4] sm:$0xf] %vm461, %v454
  %464 = vst.msk [vmem:[%s8 + $0x8] sm:$0xf] %vm461, %v455
  %465 = vst.msk [vmem:[%s8 + $0xc] sm:$0xf] %vm461, %v456
  // Predicated region
  $region34: #{_lambda_.8} parent=0 // pred_check
    _
  $region35: #{_lambda_.8} parent=0 // pred_check_branch
    %467 = sbr.rel (0) target = $region37
  $region36: #{_lambda_.8} parent=0 // pred_region
    _
  $region37: #{_lambda_.8} parent=0 // pred_fallthru
    _
  // Predicated region
  $region38: #{_lambda_.8} parent=0 // pred_check
    _
  $region39: #{_lambda_.8} parent=0 // pred_check_branch
    %469 = sbr.rel (0) target = $region41
  $region40: #{_lambda_.8} parent=0 // pred_region
    _
  $region41: #{_lambda_.8} parent=0 // pred_fallthru
    _

// kernel: _lambda_.10
$region0: #{_lambda_.10}
  #allocation0 [shape = 'u32[]', space=smem, size = 0x4, offset = 0x4, fixed_abs, tag = 'smem constant byte address 0x4 - core index']
  #allocation1 [shape = 'u32[144,128]{1,0:T(1,128)}', space=vmem, size = 0x12000, scoped, tag = 'internal scratch']
  %s0 = inlined_call_operand.vmem [shape: bf16[16,32], index: 0, kind: input, shape index: {}]
  %s1 = inlined_call_operand.vmem [shape: bf16[32,192], index: 1, kind: input, shape index: {}]
  %s2 = inlined_call_operand.vmem [shape: f32[1,192], index: 2, kind: input, shape index: {}, may-alias: {2,6}]
  %s3 = inlined_call_operand.vmem [shape: f32[1,192], index: 3, kind: input, shape index: {}, may-alias: {3,7}]
  %s4 = inlined_call_operand.vmem [shape: bf16[3,16,16], index: 4, kind: input, shape index: {}]
  %s5 = inlined_call_operand.vmem [shape: f32[3,1,192], index: 5, kind: input, shape index: {}]
  %s6 = inlined_call_operand.vmem [shape: f32[1,192], index: 6, kind: input, shape index: {}, may-alias: {2,6}]
  %s7 = inlined_call_operand.vmem [shape: f32[1,192], index: 7, kind: input, shape index: {}, may-alias: {3,7}]
  %s8 = inlined_call_operand.vmem [shape: bf16[192,32], index: 8, kind: input, shape index: {}]
  %s9 = inlined_call_operand.vmem [shape: f32[1,32], index: 9, kind: input, shape index: {}]
  %s10 = inlined_call_operand.vmem [shape: f32[1,32], index: 10, kind: input, shape index: {}]
  %s11 = inlined_call_operand.vmem [shape: bf16[16,32], index: 11, kind: output, shape index: {}]
  %s12 = sld [smem:[#allocation0]]
  $region54: #{_lambda_.10} parent=0
    _
  %s14 = ssub.s32 1, %s12
  %s15 = scalar_select 0, %s14, %s12
  // Predicated region
  $region2: #{_lambda_.10} parent=0 // pred_check
    _
  $region3: #{_lambda_.10} parent=0 // pred_check_branch
    %17 = sbr.rel (0) target = $region5
  $region4: #{_lambda_.10} parent=0 // pred_region
    _
  $region5: #{_lambda_.10} parent=0 // pred_fallthru
    _
  // Predicated region
  $region6: #{_lambda_.10} parent=0 // pred_check
    _
  $region7: #{_lambda_.10} parent=0 // pred_check_branch
    %19 = sbr.rel (0) target = $region9
  $region8: #{_lambda_.10} parent=0 // pred_region
    _
  $region9: #{_lambda_.10} parent=0 // pred_fallthru
    _
  // Predicated region
  $region10: #{_lambda_.10} parent=0 // pred_check
    _
  $region11: #{_lambda_.10} parent=0 // pred_check_branch
    %21 = sbr.rel (0) target = $region13
  $region12: #{_lambda_.10} parent=0 // pred_region
    _
  $region13: #{_lambda_.10} parent=0 // pred_fallthru
    _
  // Predicated region
  $region14: #{_lambda_.10} parent=0 // pred_check
    _
  $region15: #{_lambda_.10} parent=0 // pred_check_branch
    %23 = sbr.rel (0) target = $region17
  $region16: #{_lambda_.10} parent=0 // pred_region
    _
  $region17: #{_lambda_.10} parent=0 // pred_fallthru
    _
  // Predicated region
  $region18: #{_lambda_.10} parent=0 // pred_check
    _
  $region19: #{_lambda_.10} parent=0 // pred_check_branch
    %25 = sbr.rel (0) target = $region21
  $region20: #{_lambda_.10} parent=0 // pred_region
    _
  $region21: #{_lambda_.10} parent=0 // pred_fallthru
    _
  // Predicated region
  $region22: #{_lambda_.10} parent=0 // pred_check
    _
  $region23: #{_lambda_.10} parent=0 // pred_check_branch
    %27 = sbr.rel (0) target = $region25
  $region24: #{_lambda_.10} parent=0 // pred_region
    _
  $region25: #{_lambda_.10} parent=0 // pred_fallthru
    _
  // Predicated region
  $region26: #{_lambda_.10} parent=0 // pred_check
    _
  $region27: #{_lambda_.10} parent=0 // pred_check_branch
    %29 = sbr.rel (0) target = $region29
  $region28: #{_lambda_.10} parent=0 // pred_region
    _
  $region29: #{_lambda_.10} parent=0 // pred_fallthru
    _
  // Predicated region
  $region30: #{_lambda_.10} parent=0 // pred_check
    _
  $region31: #{_lambda_.10} parent=0 // pred_check_branch
    %31 = sbr.rel (0) target = $region33
  $region32: #{_lambda_.10} parent=0 // pred_region
    _
  $region33: #{_lambda_.10} parent=0 // pred_fallthru
    _
  // Predicated region
  $region34: #{_lambda_.10} parent=0 // pred_check
    _
  $region35: #{_lambda_.10} parent=0 // pred_check_branch
    %33 = sbr.rel (0) target = $region37
  $region36: #{_lambda_.10} parent=0 // pred_region
    _
  $region37: #{_lambda_.10} parent=0 // pred_fallthru
    _
  // Predicated region
  $region38: #{_lambda_.10} parent=0 // pred_check
    _
  $region39: #{_lambda_.10} parent=0 // pred_check_branch
    %35 = sbr.rel (0) target = $region41
  $region40: #{_lambda_.10} parent=0 // pred_region
    _
  $region41: #{_lambda_.10} parent=0 // pred_fallthru
    _
  // Predicated region
  $region42: #{_lambda_.10} parent=0 // pred_check
    _
  $region43: #{_lambda_.10} parent=0 // pred_check_branch
    %37 = sbr.rel (0) target = $region45
  $region44: #{_lambda_.10} parent=0 // pred_region
    _
  $region45: #{_lambda_.10} parent=0 // pred_fallthru
    _
  %v39 = vld [vmem:[%s0] sm:$0xf]
  %v40 = vld [vmem:[%s0 + $0x4] sm:$0xf]
  %v41 = vld [vmem:[%s1] sm:$0xff]
  %v42 = vld [vmem:[%s1 + $0x8] sm:$0xff]
  %v43 = vld [vmem:[%s1 + $0x10] sm:$0xff]
  %v44 = vld [vmem:[%s1 + $0x18] sm:$0xff]
  %v47 = vunpack.c.l.b16 %v39
  %v48 = vunpack.c.l.b16 %v40
  %v49 = vpack.c.b16 %v48, %v47
  %v54 = vunpack.c.l.b16 %v41
  %v55 = vunpack.c.h.b16 %v41
  %v56 = vunpack.c.l.b16 %v42
  %v57 = vunpack.c.h.b16 %v42
  %v58 = vunpack.c.l.b16 %v43
  %v59 = vunpack.c.h.b16 %v43
  %v60 = vunpack.c.l.b16 %v44
  %v61 = vunpack.c.h.b16 %v44
  %v62 = vpack.c.b16 %v56, %v54
  %v63 = vpack.c.b16 %v57, %v55
  %v64 = vpack.c.b16 %v60, %v58
  %v65 = vpack.c.b16 %v61, %v59
  %vm70 = vcmask 261120
  %v72 = vsel %vm70, %v49, 0
  %74 = vmatprep.subr.bf16.mxu0 %v63
  %75 = vmatpush1.bf16.msra.mxu0 %v62
  %76 = vmatprep.subr.bf16.mxu0 %v65
  %77 = vmatpush1.bf16.msra.mxu0 %v64
  %78 = vmatprep.subr.bf16.mxu0 0
  %79 = vmatpush1.bf16.msra.mxu0 0
  %80 = vmatprep.subr.bf16.mxu0 0
  %81 = vmatpush1.bf16.msra.mxu0 0
  %82 = vmatprep.subr.bf16.mxu0 0
  %83 = vmatpush1.bf16.msra.mxu0 0
  %84 = vmatprep.subr.bf16.mxu0 0
  %85 = vmatpush1.bf16.msra.mxu0 0
  %86 = vmatprep.subr.bf16.mxu0 0
  %87 = vmatpush1.bf16.msra.mxu0 0
  %88 = vmatprep.subr.bf16.mxu0 0
  %89 = vmatpush1.bf16.msra.mxu0 0
  %90 = vmatprep.subr.bf16.mxu0 0
  %91 = vmatpush1.bf16.msra.mxu0 0
  %92 = vmatprep.subr.bf16.mxu0 0
  %93 = vmatpush1.bf16.msra.mxu0 0
  %94 = vmatprep.subr.bf16.mxu0 0
  %95 = vmatpush1.bf16.msra.mxu0 0
  %96 = vmatprep.subr.bf16.mxu0 0
  %97 = vmatpush1.bf16.msra.mxu0 0
  %98 = vmatprep.subr.bf16.mxu0 0
  %99 = vmatpush1.bf16.msra.mxu0 0
  %100 = vmatprep.subr.bf16.mxu0 0
  %101 = vmatpush1.bf16.msra.mxu0 0
  %102 = vmatprep.subr.bf16.mxu0 0
  %103 = vmatpush1.bf16.msra.mxu0 0
  %104 = vmatprep.subr.bf16.mxu0 0
  %105 = vmatpush1.bf16.msra.mxu0 0
  %106 = vmatprep.mubr.bf16.mxu0 0
  %107 = vmatmul.mubr.bf16.gmra.mrb[0].mxu0 %v72
  %v108 = vpop.f32.mrb[0].mxu0
  %v109 = vadd.f32 0.0, %v108
  %v110 = vpop.f32.mrb[0].mxu0
  %v111 = vadd.f32 0.0, %v110
  %v112 = vpop.f32.mrb[0].mxu0
  %v113 = vadd.f32 0.0, %v112
  %v114 = vpop.f32.mrb[0].mxu0
  %v115 = vadd.f32 0.0, %v114
  %116 = vdwg.mxu0
  %v117 = vld [vmem:[%s2] sm:$0x3]
  %v119 = vlaneseq
  %v120 = vshrl.u32 %v119, 7
  %v121 = vsub.s32 0, %v120
  %v122 = vrot.slane %v117, %v121
  %v123 = vlaneseq
  %v124 = vshrl.u32 %v123, 7
  %v125 = vsub.s32 1, %v124
  %v126 = vrot.slane %v117, %v125
  %v129 = vmul.f32 %v109, %v122
  %v130 = vmul.f32 %v111, %v126
  %v131 = vmul.f32 %v113, %v122
  %v132 = vmul.f32 %v115, %v126
  %v133 = vld [vmem:[%s3] sm:$0x3]
  %v135 = vlaneseq
  %v136 = vshrl.u32 %v135, 7
  %v137 = vsub.s32 0, %v136
  %v138 = vrot.slane %v133, %v137
  %v139 = vlaneseq
  %v140 = vshrl.u32 %v139, 7
  %v141 = vsub.s32 1, %v140
  %v142 = vrot.slane %v133, %v141
  %v145 = vadd.f32 %v129, %v138
  %v146 = vadd.f32 %v130, %v142
  %v147 = vadd.f32 %v131, %v138
  %v148 = vadd.f32 %v132, %v142
  %v149 = vmax.f32 %v145, 0.0
  %v150 = vmax.f32 %v146, 0.0
  %v151 = vmax.f32 %v147, 0.0
  %v152 = vmax.f32 %v148, 0.0
  %v153 = vmin.f32 %v149, 6.0
  %v154 = vmin.f32 %v150, 6.0
  %v155 = vmin.f32 %v151, 6.0
  %v156 = vmin.f32 %v152, 6.0
  %v157 = vpack.c.bf16 %v155, %v153
  %v158 = vpack.c.bf16 %v156, %v154
  %v159 = vld [vmem:[%s4] sm:$0xf]
  %v160 = vld [vmem:[%s4 + $0x4] sm:$0xf]
  %v163 = vunpack.c.l.b16 %v159
  %v164 = vunpack.c.l.b16 %v160
  %v165 = vpack.c.b16 %v164, %v163
  %vm166 = vcmask 130048
  %v168 = vsel %vm166, %v165, 0
  %170 = vmatprep.subr.bf16.mxu0 %v158
  %171 = vmatpush1.bf16.msra.mxu0 %v157
  %172 = vmatprep.subr.bf16.mxu0 0
  %173 = vmatpush1.bf16.msra.mxu0 0
  %174 = vmatprep.subr.bf16.mxu0 0
  %175 = vmatpush1.bf16.msra.mxu0 0
  %176 = vmatprep.subr.bf16.mxu0 0
  %177 = vmatpush1.bf16.msra.mxu0 0
  %178 = vmatprep.subr.bf16.mxu0 0
  %179 = vmatpush1.bf16.msra.mxu0 0
  %180 = vmatprep.subr.bf16.mxu0 0
  %181 = vmatpush1.bf16.msra.mxu0 0
  %182 = vmatprep.subr.bf16.mxu0 0
  %183 = vmatpush1.bf16.msra.mxu0 0
  %184 = vmatprep.subr.bf16.mxu0 0
  %185 = vmatpush1.bf16.msra.mxu0 0
  %186 = vmatprep.subr.bf16.mxu0 0
  %187 = vmatpush1.bf16.msra.mxu0 0
  %188 = vmatprep.subr.bf16.mxu0 0
  %189 = vmatpush1.bf16.msra.mxu0 0
  %190 = vmatprep.subr.bf16.mxu0 0
  %191 = vmatpush1.bf16.msra.mxu0 0
  %192 = vmatprep.subr.bf16.mxu0 0
  %193 = vmatpush1.bf16.msra.mxu0 0
  %194 = vmatprep.subr.bf16.mxu0 0
  %195 = vmatpush1.bf16.msra.mxu0 0
  %196 = vmatprep.subr.bf16.mxu0 0
  %197 = vmatpush1.bf16.msra.mxu0 0
  %198 = vmatprep.subr.bf16.mxu0 0
  %199 = vmatpush1.bf16.msra.mxu0 0
  %200 = vmatprep.subr.bf16.mxu0 0
  %201 = vmatpush1.bf16.msra.mxu0 0
  %202 = vmatprep.mubr.bf16.mxu0 0
  %203 = vmatmul.mubr.bf16.gmra.mrb[0].mxu0 %v168
  %v204 = vpop.f32.mrb[0].mxu0
  %v205 = vadd.f32 0.0, %v204
  %v206 = vpop.f32.mrb[0].mxu0
  %v207 = vadd.f32 0.0, %v206
  %v208 = vpop.f32.mrb[0].mxu0
  %v209 = vadd.f32 0.0, %v208
  %v210 = vpop.f32.mrb[0].mxu0
  %v211 = vadd.f32 0.0, %v210
  %212 = vdwg.mxu0
  %v213 = vld [vmem:[%s5] sm:$0x3]
  %v215 = vlaneseq
  %v216 = vshrl.u32 %v215, 7
  %v217 = vsub.s32 0, %v216
  %v218 = vrot.slane %v213, %v217
  %v219 = vlaneseq
  %v220 = vshrl.u32 %v219, 7
  %v221 = vsub.s32 1, %v220
  %v222 = vrot.slane %v213, %v221
  %v225 = vmul.f32 %v205, %v218
  %v226 = vmul.f32 %v207, %v222
  %v227 = vmul.f32 %v209, %v218
  %v228 = vmul.f32 %v211, %v222
  %v229 = vadd.f32 %v225, 0.0
  %v230 = vadd.f32 %v226, 0.0
  %v231 = vadd.f32 %v227, 0.0
  %v232 = vadd.f32 %v228, 0.0
  %s233 = scalar_lea.vmem %s4, 8
  %v234 = vld [vmem:[%s233] sm:$0xf]
  %v235 = vld [vmem:[%s233 + $0x4] sm:$0xf]
  %v238 = vunpack.c.l.b16 %v234
  %v239 = vunpack.c.l.b16 %v235
  %v240 = vpack.c.b16 %v239, %v238
  %v242 = vsel %vm166, %v240, 0
  %244 = vmatprep.subr.bf16.mxu0 %v158
  %245 = vmatpush1.bf16.msra.mxu0 %v157
  %246 = vmatprep.subr.bf16.mxu0 0
  %247 = vmatpush1.bf16.msra.mxu0 0
  %248 = vmatprep.subr.bf16.mxu0 0
  %249 = vmatpush1.bf16.msra.mxu0 0
  %250 = vmatprep.subr.bf16.mxu0 0
  %251 = vmatpush1.bf16.msra.mxu0 0
  %252 = vmatprep.subr.bf16.mxu0 0
  %253 = vmatpush1.bf16.msra.mxu0 0
  %254 = vmatprep.subr.bf16.mxu0 0
  %255 = vmatpush1.bf16.msra.mxu0 0
  %256 = vmatprep.subr.bf16.mxu0 0
  %257 = vmatpush1.bf16.msra.mxu0 0
  %258 = vmatprep.subr.bf16.mxu0 0
  %259 = vmatpush1.bf16.msra.mxu0 0
  %260 = vmatprep.subr.bf16.mxu0 0
  %261 = vmatpush1.bf16.msra.mxu0 0
  %262 = vmatprep.subr.bf16.mxu0 0
  %263 = vmatpush1.bf16.msra.mxu0 0
  %264 = vmatprep.subr.bf16.mxu0 0
  %265 = vmatpush1.bf16.msra.mxu0 0
  %266 = vmatprep.subr.bf16.mxu0 0
  %267 = vmatpush1.bf16.msra.mxu0 0
  %268 = vmatprep.subr.bf16.mxu0 0
  %269 = vmatpush1.bf16.msra.mxu0 0
  %270 = vmatprep.subr.bf16.mxu0 0
  %271 = vmatpush1.bf16.msra.mxu0 0
  %272 = vmatprep.subr.bf16.mxu0 0
  %273 = vmatpush1.bf16.msra.mxu0 0
  %274 = vmatprep.subr.bf16.mxu0 0
  %275 = vmatpush1.bf16.msra.mxu0 0
  %276 = vmatprep.mubr.bf16.mxu0 0
  %277 = vmatmul.mubr.bf16.gmra.mrb[0].mxu0 %v242
  %v278 = vpop.f32.mrb[0].mxu0
  %v279 = vadd.f32 0.0, %v278
  %v280 = vpop.f32.mrb[0].mxu0
  %v281 = vadd.f32 0.0, %v280
  %v282 = vpop.f32.mrb[0].mxu0
  %v283 = vadd.f32 0.0, %v282
  %v284 = vpop.f32.mrb[0].mxu0
  %v285 = vadd.f32 0.0, %v284
  %286 = vdwg.mxu0
  %s287 = scalar_lea.vmem %s5, 2
  %v288 = vld [vmem:[%s287] sm:$0x3]
  %v290 = vlaneseq
  %v291 = vshrl.u32 %v290, 7
  %v292 = vsub.s32 0, %v291
  %v293 = vrot.slane %v288, %v292
  %v294 = vlaneseq
  %v295 = vshrl.u32 %v294, 7
  %v296 = vsub.s32 1, %v295
  %v297 = vrot.slane %v288, %v296
  %v300 = vmul.f32 %v279, %v293
  %v301 = vmul.f32 %v281, %v297
  %v302 = vmul.f32 %v283, %v293
  %v303 = vmul.f32 %v285, %v297
  %v304 = vadd.f32 %v229, %v300
  %v305 = vadd.f32 %v230, %v301
  %v306 = vadd.f32 %v231, %v302
  %v307 = vadd.f32 %v232, %v303
  %s308 = scalar_lea.vmem %s4, 16
  %v309 = vld [vmem:[%s308] sm:$0xf]
  %v310 = vld [vmem:[%s308 + $0x4] sm:$0xf]
  %v313 = vunpack.c.l.b16 %v309
  %v314 = vunpack.c.l.b16 %v310
  %v315 = vpack.c.b16 %v314, %v313
  %v317 = vsel %vm166, %v315, 0
  %319 = vmatprep.subr.bf16.mxu0 %v158
  %320 = vmatpush1.bf16.msra.mxu0 %v157
  %321 = vmatprep.subr.bf16.mxu0 0
  %322 = vmatpush1.bf16.msra.mxu0 0
  %323 = vmatprep.subr.bf16.mxu0 0
  %324 = vmatpush1.bf16.msra.mxu0 0
  %325 = vmatprep.subr.bf16.mxu0 0
  %326 = vmatpush1.bf16.msra.mxu0 0
  %327 = vmatprep.subr.bf16.mxu0 0
  %328 = vmatpush1.bf16.msra.mxu0 0
  %329 = vmatprep.subr.bf16.mxu0 0
  %330 = vmatpush1.bf16.msra.mxu0 0
  %331 = vmatprep.subr.bf16.mxu0 0
  %332 = vmatpush1.bf16.msra.mxu0 0
  %333 = vmatprep.subr.bf16.mxu0 0
  %334 = vmatpush1.bf16.msra.mxu0 0
  %335 = vmatprep.subr.bf16.mxu0 0
  %336 = vmatpush1.bf16.msra.mxu0 0
  %337 = vmatprep.subr.bf16.mxu0 0
  %338 = vmatpush1.bf16.msra.mxu0 0
  %339 = vmatprep.subr.bf16.mxu0 0
  %340 = vmatpush1.bf16.msra.mxu0 0
  %341 = vmatprep.subr.bf16.mxu0 0
  %342 = vmatpush1.bf16.msra.mxu0 0
  %343 = vmatprep.subr.bf16.mxu0 0
  %344 = vmatpush1.bf16.msra.mxu0 0
  %345 = vmatprep.subr.bf16.mxu0 0
  %346 = vmatpush1.bf16.msra.mxu0 0
  %347 = vmatprep.subr.bf16.mxu0 0
  %348 = vmatpush1.bf16.msra.mxu0 0
  %349 = vmatprep.subr.bf16.mxu0 0
  %350 = vmatpush1.bf16.msra.mxu0 0
  %351 = vmatprep.mubr.bf16.mxu0 0
  %352 = vmatmul.mubr.bf16.gmra.mrb[0].mxu0 %v317
  %v353 = vpop.f32.mrb[0].mxu0
  %v354 = vadd.f32 0.0, %v353
  %v355 = vpop.f32.mrb[0].mxu0
  %v356 = vadd.f32 0.0, %v355
  %v357 = vpop.f32.mrb[0].mxu0
  %v358 = vadd.f32 0.0, %v357
  %v359 = vpop.f32.mrb[0].mxu0
  %v360 = vadd.f32 0.0, %v359
  %361 = vdwg.mxu0
  %s362 = scalar_lea.vmem %s5, 4
  %v363 = vld [vmem:[%s362] sm:$0x3]
  %v365 = vlaneseq
  %v366 = vshrl.u32 %v365, 7
  %v367 = vsub.s32 0, %v366
  %v368 = vrot.slane %v363, %v367
  %v369 = vlaneseq
  %v370 = vshrl.u32 %v369, 7
  %v371 = vsub.s32 1, %v370
  %v372 = vrot.slane %v363, %v371
  %v375 = vmul.f32 %v354, %v368
  %v376 = vmul.f32 %v356, %v372
  %v377 = vmul.f32 %v358, %v368
  %v378 = vmul.f32 %v360, %v372
  %v379 = vadd.f32 %v304, %v375
  %v380 = vadd.f32 %v305, %v376
  %v381 = vadd.f32 %v306, %v377
  %v382 = vadd.f32 %v307, %v378
  %v383 = vld [vmem:[%s6] sm:$0x3]
  %v385 = vlaneseq
  %v386 = vshrl.u32 %v385, 7
  %v387 = vsub.s32 0, %v386
  %v388 = vrot.slane %v383, %v387
  %v389 = vlaneseq
  %v390 = vshrl.u32 %v389, 7
  %v391 = vsub.s32 1, %v390
  %v392 = vrot.slane %v383, %v391
  %v395 = vmul.f32 %v379, %v388
  %v396 = vmul.f32 %v380, %v392
  %v397 = vmul.f32 %v381, %v388
  %v398 = vmul.f32 %v382, %v392
  %v399 = vld [vmem:[%s7] sm:$0x3]
  %v401 = vlaneseq
  %v402 = vshrl.u32 %v401, 7
  %v403 = vsub.s32 0, %v402
  %v404 = vrot.slane %v399, %v403
  %v405 = vlaneseq
  %v406 = vshrl.u32 %v405, 7
  %v407 = vsub.s32 1, %v406
  %v408 = vrot.slane %v399, %v407
  %v411 = vadd.f32 %v395, %v404
  %v412 = vadd.f32 %v396, %v408
  %v413 = vadd.f32 %v397, %v404
  %v414 = vadd.f32 %v398, %v408
  %v415 = vmax.f32 %v411, 0.0
  %v416 = vmax.f32 %v412, 0.0
  %v417 = vmax.f32 %v413, 0.0
  %v418 = vmax.f32 %v414, 0.0
  %v419 = vmin.f32 %v415, 6.0
  %v420 = vmin.f32 %v416, 6.0
  %v421 = vmin.f32 %v417, 6.0
  %v422 = vmin.f32 %v418, 6.0
  %v423 = vpack.c.bf16 %v421, %v419
  %v424 = vpack.c.bf16 %v422, %v420
  %v425 = vld [vmem:[%s8] sm:$0xf]
  %v426 = vld [vmem:[%s8 + $0x4] sm:$0xf]
  %v427 = vld [vmem:[%s8 + $0x8] sm:$0xf]
  %v428 = vld [vmem:[%s8 + $0xc] sm:$0xf]
  %v429 = vld [vmem:[%s8 + $0x10] sm:$0xf]
  %v430 = vld [vmem:[%s8 + $0x14] sm:$0xf]
  %v431 = vld [vmem:[%s8 + $0x18] sm:$0xf]
  %v432 = vld [vmem:[%s8 + $0x1c] sm:$0xf]
  %v433 = vld [vmem:[%s8 + $0x20] sm:$0xf]
  %v434 = vld [vmem:[%s8 + $0x24] sm:$0xf]
  %v435 = vld [vmem:[%s8 + $0x28] sm:$0xf]
  %v436 = vld [vmem:[%s8 + $0x2c] sm:$0xf]
  %v437 = vld [vmem:[%s8 + $0x30] sm:$0xf]
  %v438 = vld [vmem:[%s8 + $0x34] sm:$0xf]
  %v439 = vld [vmem:[%s8 + $0x38] sm:$0xf]
  %v440 = vld [vmem:[%s8 + $0x3c] sm:$0xf]
  %v441 = vld [vmem:[%s8 + $0x40] sm:$0xf]
  %v442 = vld [vmem:[%s8 + $0x44] sm:$0xf]
  %v443 = vld [vmem:[%s8 + $0x48] sm:$0xf]
  %v444 = vld [vmem:[%s8 + $0x4c] sm:$0xf]
  %v445 = vld [vmem:[%s8 + $0x50] sm:$0xf]
  %v446 = vld [vmem:[%s8 + $0x54] sm:$0xf]
  %v447 = vld [vmem:[%s8 + $0x58] sm:$0xf]
  %v448 = vld [vmem:[%s8 + $0x5c] sm:$0xf]
  %v473 = vunpack.c.l.b16 %v425
  %v474 = vunpack.c.l.b16 %v426
  %v475 = vunpack.c.l.b16 %v427
  %v476 = vunpack.c.l.b16 %v428
  %v477 = vunpack.c.l.b16 %v429
  %v478 = vunpack.c.l.b16 %v430
  %v479 = vunpack.c.l.b16 %v431
  %v480 = vunpack.c.l.b16 %v432
  %v481 = vunpack.c.l.b16 %v433
  %v482 = vunpack.c.l.b16 %v434
  %v483 = vunpack.c.l.b16 %v435
  %v484 = vunpack.c.l.b16 %v436
  %v485 = vunpack.c.l.b16 %v437
  %v486 = vunpack.c.l.b16 %v438
  %v487 = vunpack.c.l.b16 %v439
  %v488 = vunpack.c.l.b16 %v440
  %v489 = vunpack.c.l.b16 %v441
  %v490 = vunpack.c.l.b16 %v442
  %v491 = vunpack.c.l.b16 %v443
  %v492 = vunpack.c.l.b16 %v444
  %v493 = vunpack.c.l.b16 %v445
  %v494 = vunpack.c.l.b16 %v446
  %v495 = vunpack.c.l.b16 %v447
  %v496 = vunpack.c.l.b16 %v448
  %v497 = vpack.c.b16 %v474, %v473
  %v498 = vpack.c.b16 %v476, %v475
  %v499 = vpack.c.b16 %v478, %v477
  %v500 = vpack.c.b16 %v480, %v479
  %v501 = vpack.c.b16 %v482, %v481
  %v502 = vpack.c.b16 %v484, %v483
  %v503 = vpack.c.b16 %v486, %v485
  %v504 = vpack.c.b16 %v488, %v487
  %v505 = vpack.c.b16 %v490, %v489
  %v506 = vpack.c.b16 %v492, %v491
  %v507 = vpack.c.b16 %v494, %v493
  %v508 = vpack.c.b16 %v496, %v495
  %vm521 = vcmask 523264
  %v523 = vsel %vm521, %v424, 0
  %525 = vmatprep.subr.bf16.mxu0 0
  %526 = vmatpush1.bf16.msra.mxu0 %v497
  %527 = vmatprep.subr.bf16.mxu0 0
  %528 = vmatpush1.bf16.msra.mxu0 %v498
  %529 = vmatprep.subr.bf16.mxu0 0
  %530 = vmatpush1.bf16.msra.mxu0 %v499
  %531 = vmatprep.subr.bf16.mxu0 0
  %532 = vmatpush1.bf16.msra.mxu0 %v500
  %533 = vmatprep.subr.bf16.mxu0 0
  %534 = vmatpush1.bf16.msra.mxu0 %v501
  %535 = vmatprep.subr.bf16.mxu0 0
  %536 = vmatpush1.bf16.msra.mxu0 %v502
  %537 = vmatprep.subr.bf16.mxu0 0
  %538 = vmatpush1.bf16.msra.mxu0 %v503
  %539 = vmatprep.subr.bf16.mxu0 0
  %540 = vmatpush1.bf16.msra.mxu0 %v504
  %541 = vmatprep.subr.bf16.mxu0 0
  %542 = vmatpush1.bf16.msra.mxu0 %v505
  %543 = vmatprep.subr.bf16.mxu0 0
  %544 = vmatpush1.bf16.msra.mxu0 %v506
  %545 = vmatprep.subr.bf16.mxu0 0
  %546 = vmatpush1.bf16.msra.mxu0 %v507
  %547 = vmatprep.subr.bf16.mxu0 0
  %548 = vmatpush1.bf16.msra.mxu0 %v508
  %549 = vmatprep.subr.bf16.mxu0 0
  %550 = vmatpush1.bf16.msra.mxu0 0
  %551 = vmatprep.subr.bf16.mxu0 0
  %552 = vmatpush1.bf16.msra.mxu0 0
  %553 = vmatprep.subr.bf16.mxu0 0
  %554 = vmatpush1.bf16.msra.mxu0 0
  %555 = vmatprep.subr.bf16.mxu0 0
  %556 = vmatpush1.bf16.msra.mxu0 0
  %557 = vmatprep.mubr.bf16.mxu0 %v523
  %558 = vmatmul.mubr.bf16.gmra.mrb[0].mxu0 %v423
  %v559 = vpop.f32.mrb[0].mxu0
  %v560 = vadd.f32 0.0, %v559
  %v561 = vpop.f32.mrb[0].mxu0
  %v562 = vpop.f32.mrb[0].mxu0
  %v563 = vadd.f32 0.0, %v562
  %v564 = vpop.f32.mrb[0].mxu0
  %565 = vdwg.mxu0
  %v566 = vld [vmem:[%s9] sm:$0x1]
  %v568 = vlaneseq
  %v569 = vshrl.u32 %v568, 7
  %v570 = vsub.s32 0, %v569
  %v571 = vrot.slane %v566, %v570
  %v573 = vmul.f32 %v560, %v571
  %v574 = vmul.f32 %v563, %v571
  %v575 = vld [vmem:[%s10] sm:$0x1]
  %v577 = vlaneseq
  %v578 = vshrl.u32 %v577, 7
  %v579 = vsub.s32 0, %v578
  %v580 = vrot.slane %v575, %v579
  %v582 = vadd.f32 %v573, %v580
  %v583 = vadd.f32 %v574, %v580
  %v584 = vunpack.c.l.bf16 %v39
  %v585 = vunpack.c.l.bf16 %v40
  %v586 = vadd.f32 %v582, %v584
  %v587 = vadd.f32 %v583, %v585
  %v588 = vpack.c.bf16 %v587, %v586
  %v590 = vunpack.c.l.b16 %v588
  %v591 = vunpack.c.h.b16 %v588
  %v592 = vpack.c.b16 %v590, %v590
  %v593 = vpack.c.b16 %v591, %v591
  %vm596 = vcmask 257024
  %597 = vst.msk [vmem:[%s11] sm:$0xf] %vm596, %v592
  %598 = vst.msk [vmem:[%s11 + $0x4] sm:$0xf] %vm596, %v593
  // Predicated region
  $region46: #{_lambda_.10} parent=0 // pred_check
    _
  $region47: #{_lambda_.10} parent=0 // pred_check_branch
    %600 = sbr.rel (0) target = $region49
  $region48: #{_lambda_.10} parent=0 // pred_region
    _
  $region49: #{_lambda_.10} parent=0 // pred_fallthru
    _
  // Predicated region
  $region50: #{_lambda_.10} parent=0 // pred_check
    _
  $region51: #{_lambda_.10} parent=0 // pred_check_branch
    %602 = sbr.rel (0) target = $region53
  $region52: #{_lambda_.10} parent=0 // pred_region
    _
  $region53: #{_lambda_.10} parent=0 // pred_fallthru
    _

// kernel: _lambda_.7
$region0: #{_lambda_.7}
  #allocation0 [shape = 'u32[]', space=smem, size = 0x4, offset = 0x4, fixed_abs, tag = 'smem constant byte address 0x4 - core index']
  #allocation1 [shape = 'u32[144,128]{1,0:T(1,128)}', space=vmem, size = 0x12000, scoped, tag = 'internal scratch']
  %s0 = inlined_call_operand.vmem [shape: bf16[128,32], index: 0, kind: input, shape index: {}]
  %s1 = inlined_call_operand.vmem [shape: bf16[3,64,128], index: 1, kind: input, shape index: {}]
  %s2 = inlined_call_operand.vmem [shape: bf16[3,32,32], index: 2, kind: input, shape index: {}]
  %s3 = inlined_call_operand.vmem [shape: f32[1,32], index: 3, kind: input, shape index: {}]
  %s4 = inlined_call_operand.vmem [shape: f32[1,32], index: 4, kind: input, shape index: {}]
  %s5 = inlined_call_operand.vmem [shape: bf16[64,32], index: 5, kind: output, shape index: {}]
  %s6 = sld [smem:[#allocation0]]
  $region30: #{_lambda_.7} parent=0
    _
  %s8 = ssub.s32 1, %s6
  %s9 = scalar_select 0, %s8, %s6
  // Predicated region
  $region2: #{_lambda_.7} parent=0 // pred_check
    _
  $region3: #{_lambda_.7} parent=0 // pred_check_branch
    %11 = sbr.rel (0) target = $region5
  $region4: #{_lambda_.7} parent=0 // pred_region
    _
  $region5: #{_lambda_.7} parent=0 // pred_fallthru
    _
  // Predicated region
  $region6: #{_lambda_.7} parent=0 // pred_check
    _
  $region7: #{_lambda_.7} parent=0 // pred_check_branch
    %13 = sbr.rel (0) target = $region9
  $region8: #{_lambda_.7} parent=0 // pred_region
    _
  $region9: #{_lambda_.7} parent=0 // pred_fallthru
    _
  // Predicated region
  $region10: #{_lambda_.7} parent=0 // pred_check
    _
  $region11: #{_lambda_.7} parent=0 // pred_check_branch
    %15 = sbr.rel (0) target = $region13
  $region12: #{_lambda_.7} parent=0 // pred_region
    _
  $region13: #{_lambda_.7} parent=0 // pred_fallthru
    _
  // Predicated region
  $region14: #{_lambda_.7} parent=0 // pred_check
    _
  $region15: #{_lambda_.7} parent=0 // pred_check_branch
    %17 = sbr.rel (0) target = $region17
  $region16: #{_lambda_.7} parent=0 // pred_region
    _
  $region17: #{_lambda_.7} parent=0 // pred_fallthru
    _
  // Predicated region
  $region18: #{_lambda_.7} parent=0 // pred_check
    _
  $region19: #{_lambda_.7} parent=0 // pred_check_branch
    %19 = sbr.rel (0) target = $region21
  $region20: #{_lambda_.7} parent=0 // pred_region
    _
  $region21: #{_lambda_.7} parent=0 // pred_fallthru
    _
  %v21 = vld [vmem:[%s0] sm:$0xf]
  %v22 = vld [vmem:[%s0 + $0x4] sm:$0xf]
  %v23 = vld [vmem:[%s0 + $0x8] sm:$0xf]
  %v24 = vld [vmem:[%s0 + $0xc] sm:$0xf]
  %v25 = vld [vmem:[%s0 + $0x10] sm:$0xf]
  %v26 = vld [vmem:[%s0 + $0x14] sm:$0xf]
  %v27 = vld [vmem:[%s0 + $0x18] sm:$0xf]
  %v28 = vld [vmem:[%s0 + $0x1c] sm:$0xf]
  %v29 = vld [vmem:[%s0 + $0x20] sm:$0xf]
  %v30 = vld [vmem:[%s0 + $0x24] sm:$0xf]
  %v31 = vld [vmem:[%s0 + $0x28] sm:$0xf]
  %v32 = vld [vmem:[%s0 + $0x2c] sm:$0xf]
  %v33 = vld [vmem:[%s0 + $0x30] sm:$0xf]
  %v34 = vld [vmem:[%s0 + $0x34] sm:$0xf]
  %v35 = vld [vmem:[%s0 + $0x38] sm:$0xf]
  %v36 = vld [vmem:[%s0 + $0x3c] sm:$0xf]
  %v37 = vld [vmem:[%s1] sm:$0xf]
  %v38 = vld [vmem:[%s1 + $0x4] sm:$0xf]
  %v39 = vld [vmem:[%s1 + $0x8] sm:$0xf]
  %v40 = vld [vmem:[%s1 + $0xc] sm:$0xf]
  %v41 = vld [vmem:[%s1 + $0x10] sm:$0xf]
  %v42 = vld [vmem:[%s1 + $0x14] sm:$0xf]
  %v43 = vld [vmem:[%s1 + $0x18] sm:$0xf]
  %v44 = vld [vmem:[%s1 + $0x1c] sm:$0xf]
  %v53 = vunpack.c.l.b16 %v37
  %v54 = vunpack.c.l.b16 %v38
  %v55 = vunpack.c.l.b16 %v39
  %v56 = vunpack.c.l.b16 %v40
  %v57 = vunpack.c.l.b16 %v41
  %v58 = vunpack.c.l.b16 %v42
  %v59 = vunpack.c.l.b16 %v43
  %v60 = vunpack.c.l.b16 %v44
  %v61 = vpack.c.b16 %v54, %v53
  %v62 = vpack.c.b16 %v56, %v55
  %v63 = vpack.c.b16 %v58, %v57
  %v64 = vpack.c.b16 %v60, %v59
  %v85 = vunpack.c.l.b16 %v21
  %v86 = vunpack.c.l.b16 %v22
  %v87 = vunpack.c.l.b16 %v23
  %v88 = vunpack.c.l.b16 %v24
  %v89 = vunpack.c.l.b16 %v25
  %v90 = vunpack.c.l.b16 %v26
  %v91 = vunpack.c.l.b16 %v27
  %v92 = vunpack.c.l.b16 %v28
  %v93 = vunpack.c.l.b16 %v29
  %v94 = vunpack.c.l.b16 %v30
  %v95 = vunpack.c.l.b16 %v31
  %v96 = vunpack.c.l.b16 %v32
  %v97 = vunpack.c.l.b16 %v33
  %v98 = vunpack.c.l.b16 %v34
  %v99 = vunpack.c.l.b16 %v35
  %v100 = vunpack.c.l.b16 %v36
  %v101 = vpack.c.b16 %v86, %v85
  %v102 = vpack.c.b16 %v88, %v87
  %v103 = vpack.c.b16 %v90, %v89
  %v104 = vpack.c.b16 %v92, %v91
  %v105 = vpack.c.b16 %v94, %v93
  %v106 = vpack.c.b16 %v96, %v95
  %v107 = vpack.c.b16 %v98, %v97
  %v108 = vpack.c.b16 %v100, %v99
  %117 = vmatprep.subr.bf16.mxu0 0
  %118 = vmatpush1.bf16.msra.mxu0 %v101
  %119 = vmatprep.subr.bf16.mxu0 0
  %120 = vmatpush1.bf16.msra.mxu0 %v102
  %121 = vmatprep.subr.bf16.mxu0 0
  %122 = vmatpush1.bf16.msra.mxu0 %v103
  %123 = vmatprep.subr.bf16.mxu0 0
  %124 = vmatpush1.bf16.msra.mxu0 %v104
  %125 = vmatprep.subr.bf16.mxu0 0
  %126 = vmatpush1.bf16.msra.mxu0 %v105
  %127 = vmatprep.subr.bf16.mxu0 0
  %128 = vmatpush1.bf16.msra.mxu0 %v106
  %129 = vmatprep.subr.bf16.mxu0 0
  %130 = vmatpush1.bf16.msra.mxu0 %v107
  %131 = vmatprep.subr.bf16.mxu0 0
  %132 = vmatpush1.bf16.msra.mxu0 %v108
  %133 = vmatprep.subr.bf16.mxu0 0
  %134 = vmatpush1.bf16.msra.mxu0 0
  %135 = vmatprep.subr.bf16.mxu0 0
  %136 = vmatpush1.bf16.msra.mxu0 0
  %137 = vmatprep.subr.bf16.mxu0 0
  %138 = vmatpush1.bf16.msra.mxu0 0
  %139 = vmatprep.subr.bf16.mxu0 0
  %140 = vmatpush1.bf16.msra.mxu0 0
  %141 = vmatprep.subr.bf16.mxu0 0
  %142 = vmatpush1.bf16.msra.mxu0 0
  %143 = vmatprep.subr.bf16.mxu0 0
  %144 = vmatpush1.bf16.msra.mxu0 0
  %145 = vmatprep.subr.bf16.mxu0 0
  %146 = vmatpush1.bf16.msra.mxu0 0
  %147 = vmatprep.subr.bf16.mxu0 0
  %148 = vmatpush1.bf16.msra.mxu0 0
  %149 = vmatprep.mubr.bf16.mxu0 0
  %150 = vmatmul.mubr.bf16.gmra.mrb[0].mxu0 %v61
  %v151 = vpop.f32.mrb[0].mxu0
  %v152 = vadd.f32 0.0, %v151
  %v153 = vpop.f32.mrb[0].mxu0
  %v154 = vpop.f32.mrb[0].mxu0
  %v155 = vadd.f32 0.0, %v154
  %v156 = vpop.f32.mrb[0].mxu0
  %157 = vmatprep.mubr.bf16.mxu0 0
  %158 = vmatmul.mubr.bf16.gmra.mrb[0].mxu0 %v62
  %v159 = vpop.f32.mrb[0].mxu0
  %v160 = vadd.f32 0.0, %v159
  %v161 = vpop.f32.mrb[0].mxu0
  %v162 = vpop.f32.mrb[0].mxu0
  %v163 = vadd.f32 0.0, %v162
  %v164 = vpop.f32.mrb[0].mxu0
  %165 = vmatprep.mubr.bf16.mxu0 0
  %166 = vmatmul.mubr.bf16.gmra.mrb[0].mxu0 %v63
  %v167 = vpop.f32.mrb[0].mxu0
  %v168 = vadd.f32 0.0, %v167
  %v169 = vpop.f32.mrb[0].mxu0
  %v170 = vpop.f32.mrb[0].mxu0
  %v171 = vadd.f32 0.0, %v170
  %v172 = vpop.f32.mrb[0].mxu0
  %173 = vmatprep.mubr.bf16.mxu0 0
  %174 = vmatmul.mubr.bf16.gmra.mrb[0].mxu0 %v64
  %v175 = vpop.f32.mrb[0].mxu0
  %v176 = vadd.f32 0.0, %v175
  %v177 = vpop.f32.mrb[0].mxu0
  %v178 = vpop.f32.mrb[0].mxu0
  %v179 = vadd.f32 0.0, %v178
  %v180 = vpop.f32.mrb[0].mxu0
  %181 = vdwg.mxu0
  %v182 = vpack.c.bf16 %v155, %v152
  %v183 = vpack.c.bf16 %v163, %v160
  %v184 = vpack.c.bf16 %v171, %v168
  %v185 = vpack.c.bf16 %v179, %v176
  %v186 = vld [vmem:[%s2] sm:$0xf]
  %v187 = vld [vmem:[%s2 + $0x4] sm:$0xf]
  %v188 = vld [vmem:[%s2 + $0x8] sm:$0xf]
  %v189 = vld [vmem:[%s2 + $0xc] sm:$0xf]
  %s190 = scalar_lea.vmem %s1, 32
  %v191 = vld [vmem:[%s190] sm:$0xf]
  %v192 = vld [vmem:[%s190 + $0x4] sm:$0xf]
  %v193 = vld [vmem:[%s190 + $0x8] sm:$0xf]
  %v194 = vld [vmem:[%s190 + $0xc] sm:$0xf]
  %v195 = vld [vmem:[%s190 + $0x10] sm:$0xf]
  %v196 = vld [vmem:[%s190 + $0x14] sm:$0xf]
  %v197 = vld [vmem:[%s190 + $0x18] sm:$0xf]
  %v198 = vld [vmem:[%s190 + $0x1c] sm:$0xf]
  %v207 = vunpack.c.l.b16 %v191
  %v208 = vunpack.c.l.b16 %v192
  %v209 = vunpack.c.l.b16 %v193
  %v210 = vunpack.c.l.b16 %v194
  %v211 = vunpack.c.l.b16 %v195
  %v212 = vunpack.c.l.b16 %v196
  %v213 = vunpack.c.l.b16 %v197
  %v214 = vunpack.c.l.b16 %v198
  %v215 = vpack.c.b16 %v208, %v207
  %v216 = vpack.c.b16 %v210, %v209
  %v217 = vpack.c.b16 %v212, %v211
  %v218 = vpack.c.b16 %v214, %v213
  %223 = vmatprep.subr.bf16.mxu0 0
  %224 = vmatpush1.bf16.msra.mxu0 %v101
  %225 = vmatprep.subr.bf16.mxu0 0
  %226 = vmatpush1.bf16.msra.mxu0 %v102
  %227 = vmatprep.subr.bf16.mxu0 0
  %228 = vmatpush1.bf16.msra.mxu0 %v103
  %229 = vmatprep.subr.bf16.mxu0 0
  %230 = vmatpush1.bf16.msra.mxu0 %v104
  %231 = vmatprep.subr.bf16.mxu0 0
  %232 = vmatpush1.bf16.msra.mxu0 %v105
  %233 = vmatprep.subr.bf16.mxu0 0
  %234 = vmatpush1.bf16.msra.mxu0 %v106
  %235 = vmatprep.subr.bf16.mxu0 0
  %236 = vmatpush1.bf16.msra.mxu0 %v107
  %237 = vmatprep.subr.bf16.mxu0 0
  %238 = vmatpush1.bf16.msra.mxu0 %v108
  %239 = vmatprep.subr.bf16.mxu0 0
  %240 = vmatpush1.bf16.msra.mxu0 0
  %241 = vmatprep.subr.bf16.mxu0 0
  %242 = vmatpush1.bf16.msra.mxu0 0
  %243 = vmatprep.subr.bf16.mxu0 0
  %244 = vmatpush1.bf16.msra.mxu0 0
  %245 = vmatprep.subr.bf16.mxu0 0
  %246 = vmatpush1.bf16.msra.mxu0 0
  %247 = vmatprep.subr.bf16.mxu0 0
  %248 = vmatpush1.bf16.msra.mxu0 0
  %249 = vmatprep.subr.bf16.mxu0 0
  %250 = vmatpush1.bf16.msra.mxu0 0
  %251 = vmatprep.subr.bf16.mxu0 0
  %252 = vmatpush1.bf16.msra.mxu0 0
  %253 = vmatprep.subr.bf16.mxu0 0
  %254 = vmatpush1.bf16.msra.mxu0 0
  %255 = vmatprep.mubr.bf16.mxu0 0
  %256 = vmatmul.mubr.bf16.gmra.mrb[0].mxu0 %v215
  %v257 = vpop.f32.mrb[0].mxu0
  %v258 = vadd.f32 0.0, %v257
  %v259 = vpop.f32.mrb[0].mxu0
  %v260 = vpop.f32.mrb[0].mxu0
  %v261 = vadd.f32 0.0, %v260
  %v262 = vpop.f32.mrb[0].mxu0
  %263 = vmatprep.mubr.bf16.mxu0 0
  %264 = vmatmul.mubr.bf16.gmra.mrb[0].mxu0 %v216
  %v265 = vpop.f32.mrb[0].mxu0
  %v266 = vadd.f32 0.0, %v265
  %v267 = vpop.f32.mrb[0].mxu0
  %v268 = vpop.f32.mrb[0].mxu0
  %v269 = vadd.f32 0.0, %v268
  %v270 = vpop.f32.mrb[0].mxu0
  %271 = vmatprep.mubr.bf16.mxu0 0
  %272 = vmatmul.mubr.bf16.gmra.mrb[0].mxu0 %v217
  %v273 = vpop.f32.mrb[0].mxu0
  %v274 = vadd.f32 0.0, %v273
  %v275 = vpop.f32.mrb[0].mxu0
  %v276 = vpop.f32.mrb[0].mxu0
  %v277 = vadd.f32 0.0, %v276
  %v278 = vpop.f32.mrb[0].mxu0
  %279 = vmatprep.mubr.bf16.mxu0 0
  %280 = vmatmul.mubr.bf16.gmra.mrb[0].mxu0 %v218
  %v281 = vpop.f32.mrb[0].mxu0
  %v282 = vadd.f32 0.0, %v281
  %v283 = vpop.f32.mrb[0].mxu0
  %v284 = vpop.f32.mrb[0].mxu0
  %v285 = vadd.f32 0.0, %v284
  %v286 = vpop.f32.mrb[0].mxu0
  %287 = vdwg.mxu0
  %v288 = vpack.c.bf16 %v261, %v258
  %v289 = vpack.c.bf16 %v269, %v266
  %v290 = vpack.c.bf16 %v277, %v274
  %v291 = vpack.c.bf16 %v285, %v282
  %s292 = scalar_lea.vmem %s2, 16
  %v293 = vld [vmem:[%s292] sm:$0xf]
  %v294 = vld [vmem:[%s292 + $0x4] sm:$0xf]
  %v295 = vld [vmem:[%s292 + $0x8] sm:$0xf]
  %v296 = vld [vmem:[%s292 + $0xc] sm:$0xf]
  %v301 = vunpack.c.l.b16 %v293
  %v302 = vunpack.c.l.b16 %v294
  %v303 = vunpack.c.l.b16 %v295
  %v304 = vunpack.c.l.b16 %v296
  %v305 = vpack.c.b16 %v302, %v301
  %v306 = vpack.c.b16 %v304, %v303
  %vm309 = vcmask 261120
  %v311 = vsel %vm309, %v288, 0
  %v314 = vsel %vm309, %v289, 0
  %v317 = vsel %vm309, %v290, 0
  %v320 = vsel %vm309, %v291, 0
  %322 = vmatprep.subr.bf16.mxu0 0
  %323 = vmatpush1.bf16.msra.mxu0 %v305
  %324 = vmatprep.subr.bf16.mxu0 0
  %325 = vmatpush1.bf16.msra.mxu0 %v306
  %326 = vmatprep.subr.bf16.mxu0 0
  %327 = vmatpush1.bf16.msra.mxu0 0
  %328 = vmatprep.subr.bf16.mxu0 0
  %329 = vmatpush1.bf16.msra.mxu0 0
  %330 = vmatprep.subr.bf16.mxu0 0
  %331 = vmatpush1.bf16.msra.mxu0 0
  %332 = vmatprep.subr.bf16.mxu0 0
  %333 = vmatpush1.bf16.msra.mxu0 0
  %334 = vmatprep.subr.bf16.mxu0 0
  %335 = vmatpush1.bf16.msra.mxu0 0
  %336 = vmatprep.subr.bf16.mxu0 0
  %337 = vmatpush1.bf16.msra.mxu0 0
  %338 = vmatprep.subr.bf16.mxu0 0
  %339 = vmatpush1.bf16.msra.mxu0 0
  %340 = vmatprep.subr.bf16.mxu0 0
  %341 = vmatpush1.bf16.msra.mxu0 0
  %342 = vmatprep.subr.bf16.mxu0 0
  %343 = vmatpush1.bf16.msra.mxu0 0
  %344 = vmatprep.subr.bf16.mxu0 0
  %345 = vmatpush1.bf16.msra.mxu0 0
  %346 = vmatprep.subr.bf16.mxu0 0
  %347 = vmatpush1.bf16.msra.mxu0 0
  %348 = vmatprep.subr.bf16.mxu0 0
  %349 = vmatpush1.bf16.msra.mxu0 0
  %350 = vmatprep.subr.bf16.mxu0 0
  %351 = vmatpush1.bf16.msra.mxu0 0
  %352 = vmatprep.subr.bf16.mxu0 0
  %353 = vmatpush1.bf16.msra.mxu0 0
  %354 = vmatprep.mubr.bf16.mxu0 0
  %355 = vmatmul.mubr.bf16.gmra.mrb[0].mxu0 %v311
  %v356 = vpop.f32.mrb[0].mxu0
  %v357 = vadd.f32 0.0, %v356
  %v358 = vpop.f32.mrb[0].mxu0
  %v359 = vpop.f32.mrb[0].mxu0
  %v360 = vadd.f32 0.0, %v359
  %v361 = vpop.f32.mrb[0].mxu0
  %362 = vmatprep.mubr.bf16.mxu0 0
  %363 = vmatmul.mubr.bf16.gmra.mrb[0].mxu0 %v314
  %v364 = vpop.f32.mrb[0].mxu0
  %v365 = vadd.f32 0.0, %v364
  %v366 = vpop.f32.mrb[0].mxu0
  %v367 = vpop.f32.mrb[0].mxu0
  %v368 = vadd.f32 0.0, %v367
  %v369 = vpop.f32.mrb[0].mxu0
  %370 = vmatprep.mubr.bf16.mxu0 0
  %371 = vmatmul.mubr.bf16.gmra.mrb[0].mxu0 %v317
  %v372 = vpop.f32.mrb[0].mxu0
  %v373 = vadd.f32 0.0, %v372
  %v374 = vpop.f32.mrb[0].mxu0
  %v375 = vpop.f32.mrb[0].mxu0
  %v376 = vadd.f32 0.0, %v375
  %v377 = vpop.f32.mrb[0].mxu0
  %378 = vmatprep.mubr.bf16.mxu0 0
  %379 = vmatmul.mubr.bf16.gmra.mrb[0].mxu0 %v320
  %v380 = vpop.f32.mrb[0].mxu0
  %v381 = vadd.f32 0.0, %v380
  %v382 = vpop.f32.mrb[0].mxu0
  %v383 = vpop.f32.mrb[0].mxu0
  %v384 = vadd.f32 0.0, %v383
  %v385 = vpop.f32.mrb[0].mxu0
  %386 = vdwg.mxu0
  %v391 = vunpack.c.l.b16 %v186
  %v392 = vunpack.c.l.b16 %v187
  %v393 = vunpack.c.l.b16 %v188
  %v394 = vunpack.c.l.b16 %v189
  %v395 = vpack.c.b16 %v392, %v391
  %v396 = vpack.c.b16 %v394, %v393
  %v400 = vsel %vm309, %v182, 0
  %v403 = vsel %vm309, %v183, 0
  %v406 = vsel %vm309, %v184, 0
  %v409 = vsel %vm309, %v185, 0
  %411 = vmatprep.subr.bf16.mxu0 0
  %412 = vmatpush1.bf16.msra.mxu0 %v395
  %413 = vmatprep.subr.bf16.mxu0 0
  %414 = vmatpush1.bf16.msra.mxu0 %v396
  %415 = vmatprep.subr.bf16.mxu0 0
  %416 = vmatpush1.bf16.msra.mxu0 0
  %417 = vmatprep.subr.bf16.mxu0 0
  %418 = vmatpush1.bf16.msra.mxu0 0
  %419 = vmatprep.subr.bf16.mxu0 0
  %420 = vmatpush1.bf16.msra.mxu0 0
  %421 = vmatprep.subr.bf16.mxu0 0
  %422 = vmatpush1.bf16.msra.mxu0 0
  %423 = vmatprep.subr.bf16.mxu0 0
  %424 = vmatpush1.bf16.msra.mxu0 0
  %425 = vmatprep.subr.bf16.mxu0 0
  %426 = vmatpush1.bf16.msra.mxu0 0
  %427 = vmatprep.subr.bf16.mxu0 0
  %428 = vmatpush1.bf16.msra.mxu0 0
  %429 = vmatprep.subr.bf16.mxu0 0
  %430 = vmatpush1.bf16.msra.mxu0 0
  %431 = vmatprep.subr.bf16.mxu0 0
  %432 = vmatpush1.bf16.msra.mxu0 0
  %433 = vmatprep.subr.bf16.mxu0 0
  %434 = vmatpush1.bf16.msra.mxu0 0
  %435 = vmatprep.subr.bf16.mxu0 0
  %436 = vmatpush1.bf16.msra.mxu0 0
  %437 = vmatprep.subr.bf16.mxu0 0
  %438 = vmatpush1.bf16.msra.mxu0 0
  %439 = vmatprep.subr.bf16.mxu0 0
  %440 = vmatpush1.bf16.msra.mxu0 0
  %441 = vmatprep.subr.bf16.mxu0 0
  %442 = vmatpush1.bf16.msra.mxu0 0
  %443 = vmatprep.mubr.bf16.mxu0 0
  %444 = vmatmul.mubr.bf16.gmra.mrb[0].mxu0 %v400
  %v445 = vpop.f32.mrb[0].mxu0
  %v446 = vadd.f32 %v357, %v445
  %v447 = vpop.f32.mrb[0].mxu0
  %v448 = vpop.f32.mrb[0].mxu0
  %v449 = vadd.f32 %v360, %v448
  %v450 = vpop.f32.mrb[0].mxu0
  %451 = vmatprep.mubr.bf16.mxu0 0
  %452 = vmatmul.mubr.bf16.gmra.mrb[0].mxu0 %v403
  %v453 = vpop.f32.mrb[0].mxu0
  %v454 = vadd.f32 %v365, %v453
  %v455 = vpop.f32.mrb[0].mxu0
  %v456 = vpop.f32.mrb[0].mxu0
  %v457 = vadd.f32 %v368, %v456
  %v458 = vpop.f32.mrb[0].mxu0
  %459 = vmatprep.mubr.bf16.mxu0 0
  %460 = vmatmul.mubr.bf16.gmra.mrb[0].mxu0 %v406
  %v461 = vpop.f32.mrb[0].mxu0
  %v462 = vadd.f32 %v373, %v461
  %v463 = vpop.f32.mrb[0].mxu0
  %v464 = vpop.f32.mrb[0].mxu0
  %v465 = vadd.f32 %v376, %v464
  %v466 = vpop.f32.mrb[0].mxu0
  %467 = vmatprep.mubr.bf16.mxu0 0
  %468 = vmatmul.mubr.bf16.gmra.mrb[0].mxu0 %v409
  %v469 = vpop.f32.mrb[0].mxu0
  %v470 = vadd.f32 %v381, %v469
  %v471 = vpop.f32.mrb[0].mxu0
  %v472 = vpop.f32.mrb[0].mxu0
  %v473 = vadd.f32 %v384, %v472
  %v474 = vpop.f32.mrb[0].mxu0
  %475 = vdwg.mxu0
  %s476 = scalar_lea.vmem %s1, 64
  %v477 = vld [vmem:[%s476] sm:$0xf]
  %v478 = vld [vmem:[%s476 + $0x4] sm:$0xf]
  %v479 = vld [vmem:[%s476 + $0x8] sm:$0xf]
  %v480 = vld [vmem:[%s476 + $0xc] sm:$0xf]
  %v481 = vld [vmem:[%s476 + $0x10] sm:$0xf]
  %v482 = vld [vmem:[%s476 + $0x14] sm:$0xf]
  %v483 = vld [vmem:[%s476 + $0x18] sm:$0xf]
  %v484 = vld [vmem:[%s476 + $0x1c] sm:$0xf]
  %v493 = vunpack.c.l.b16 %v477
  %v494 = vunpack.c.l.b16 %v478
  %v495 = vunpack.c.l.b16 %v479
  %v496 = vunpack.c.l.b16 %v480
  %v497 = vunpack.c.l.b16 %v481
  %v498 = vunpack.c.l.b16 %v482
  %v499 = vunpack.c.l.b16 %v483
  %v500 = vunpack.c.l.b16 %v484
  %v501 = vpack.c.b16 %v494, %v493
  %v502 = vpack.c.b16 %v496, %v495
  %v503 = vpack.c.b16 %v498, %v497
  %v504 = vpack.c.b16 %v500, %v499
  %509 = vmatprep.subr.bf16.mxu0 0
  %510 = vmatpush1.bf16.msra.mxu0 %v101
  %511 = vmatprep.subr.bf16.mxu0 0
  %512 = vmatpush1.bf16.msra.mxu0 %v102
  %513 = vmatprep.subr.bf16.mxu0 0
  %514 = vmatpush1.bf16.msra.mxu0 %v103
  %515 = vmatprep.subr.bf16.mxu0 0
  %516 = vmatpush1.bf16.msra.mxu0 %v104
  %517 = vmatprep.subr.bf16.mxu0 0
  %518 = vmatpush1.bf16.msra.mxu0 %v105
  %519 = vmatprep.subr.bf16.mxu0 0
  %520 = vmatpush1.bf16.msra.mxu0 %v106
  %521 = vmatprep.subr.bf16.mxu0 0
  %522 = vmatpush1.bf16.msra.mxu0 %v107
  %523 = vmatprep.subr.bf16.mxu0 0
  %524 = vmatpush1.bf16.msra.mxu0 %v108
  %525 = vmatprep.subr.bf16.mxu0 0
  %526 = vmatpush1.bf16.msra.mxu0 0
  %527 = vmatprep.subr.bf16.mxu0 0
  %528 = vmatpush1.bf16.msra.mxu0 0
  %529 = vmatprep.subr.bf16.mxu0 0
  %530 = vmatpush1.bf16.msra.mxu0 0
  %531 = vmatprep.subr.bf16.mxu0 0
  %532 = vmatpush1.bf16.msra.mxu0 0
  %533 = vmatprep.subr.bf16.mxu0 0
  %534 = vmatpush1.bf16.msra.mxu0 0
  %535 = vmatprep.subr.bf16.mxu0 0
  %536 = vmatpush1.bf16.msra.mxu0 0
  %537 = vmatprep.subr.bf16.mxu0 0
  %538 = vmatpush1.bf16.msra.mxu0 0
  %539 = vmatprep.subr.bf16.mxu0 0
  %540 = vmatpush1.bf16.msra.mxu0 0
  %541 = vmatprep.mubr.bf16.mxu0 0
  %542 = vmatmul.mubr.bf16.gmra.mrb[0].mxu0 %v501
  %v543 = vpop.f32.mrb[0].mxu0
  %v544 = vadd.f32 0.0, %v543
  %v545 = vpop.f32.mrb[0].mxu0
  %v546 = vpop.f32.mrb[0].mxu0
  %v547 = vadd.f32 0.0, %v546
  %v548 = vpop.f32.mrb[0].mxu0
  %549 = vmatprep.mubr.bf16.mxu0 0
  %550 = vmatmul.mubr.bf16.gmra.mrb[0].mxu0 %v502
  %v551 = vpop.f32.mrb[0].mxu0
  %v552 = vadd.f32 0.0, %v551
  %v553 = vpop.f32.mrb[0].mxu0
  %v554 = vpop.f32.mrb[0].mxu0
  %v555 = vadd.f32 0.0, %v554
  %v556 = vpop.f32.mrb[0].mxu0
  %557 = vmatprep.mubr.bf16.mxu0 0
  %558 = vmatmul.mubr.bf16.gmra.mrb[0].mxu0 %v503
  %v559 = vpop.f32.mrb[0].mxu0
  %v560 = vadd.f32 0.0, %v559
  %v561 = vpop.f32.mrb[0].mxu0
  %v562 = vpop.f32.mrb[0].mxu0
  %v563 = vadd.f32 0.0, %v562
  %v564 = vpop.f32.mrb[0].mxu0
  %565 = vmatprep.mubr.bf16.mxu0 0
  %566 = vmatmul.mubr.bf16.gmra.mrb[0].mxu0 %v504
  %v567 = vpop.f32.mrb[0].mxu0
  %v568 = vadd.f32 0.0, %v567
  %v569 = vpop.f32.mrb[0].mxu0
  %v570 = vpop.f32.mrb[0].mxu0
  %v571 = vadd.f32 0.0, %v570
  %v572 = vpop.f32.mrb[0].mxu0
  %573 = vdwg.mxu0
  %v574 = vpack.c.bf16 %v547, %v544
  %v575 = vpack.c.bf16 %v555, %v552
  %v576 = vpack.c.bf16 %v563, %v560
  %v577 = vpack.c.bf16 %v571, %v568
  %s578 = scalar_lea.vmem %s2, 32
  %v579 = vld [vmem:[%s578] sm:$0xf]
  %v580 = vld [vmem:[%s578 + $0x4] sm:$0xf]
  %v581 = vld [vmem:[%s578 + $0x8] sm:$0xf]
  %v582 = vld [vmem:[%s578 + $0xc] sm:$0xf]
  %v587 = vunpack.c.l.b16 %v579
  %v588 = vunpack.c.l.b16 %v580
  %v589 = vunpack.c.l.b16 %v581
  %v590 = vunpack.c.l.b16 %v582
  %v591 = vpack.c.b16 %v588, %v587
  %v592 = vpack.c.b16 %v590, %v589
  %v596 = vsel %vm309, %v574, 0
  %v599 = vsel %vm309, %v575, 0
  %v602 = vsel %vm309, %v576, 0
  %v605 = vsel %vm309, %v577, 0
  %607 = vmatprep.subr.bf16.mxu0 0
  %608 = vmatpush1.bf16.msra.mxu0 %v591
  %609 = vmatprep.subr.bf16.mxu0 0
  %610 = vmatpush1.bf16.msra.mxu0 %v592
  %611 = vmatprep.subr.bf16.mxu0 0
  %612 = vmatpush1.bf16.msra.mxu0 0
  %613 = vmatprep.subr.bf16.mxu0 0
  %614 = vmatpush1.bf16.msra.mxu0 0
  %615 = vmatprep.subr.bf16.mxu0 0
  %616 = vmatpush1.bf16.msra.mxu0 0
  %617 = vmatprep.subr.bf16.mxu0 0
  %618 = vmatpush1.bf16.msra.mxu0 0
  %619 = vmatprep.subr.bf16.mxu0 0
  %620 = vmatpush1.bf16.msra.mxu0 0
  %621 = vmatprep.subr.bf16.mxu0 0
  %622 = vmatpush1.bf16.msra.mxu0 0
  %623 = vmatprep.subr.bf16.mxu0 0
  %624 = vmatpush1.bf16.msra.mxu0 0
  %625 = vmatprep.subr.bf16.mxu0 0
  %626 = vmatpush1.bf16.msra.mxu0 0
  %627 = vmatprep.subr.bf16.mxu0 0
  %628 = vmatpush1.bf16.msra.mxu0 0
  %629 = vmatprep.subr.bf16.mxu0 0
  %630 = vmatpush1.bf16.msra.mxu0 0
  %631 = vmatprep.subr.bf16.mxu0 0
  %632 = vmatpush1.bf16.msra.mxu0 0
  %633 = vmatprep.subr.bf16.mxu0 0
  %634 = vmatpush1.bf16.msra.mxu0 0
  %635 = vmatprep.subr.bf16.mxu0 0
  %636 = vmatpush1.bf16.msra.mxu0 0
  %637 = vmatprep.subr.bf16.mxu0 0
  %638 = vmatpush1.bf16.msra.mxu0 0
  %639 = vmatprep.mubr.bf16.mxu0 0
  %640 = vmatmul.mubr.bf16.gmra.mrb[0].mxu0 %v596
  %v641 = vpop.f32.mrb[0].mxu0
  %v642 = vadd.f32 0.0, %v641
  %v643 = vpop.f32.mrb[0].mxu0
  %v644 = vpop.f32.mrb[0].mxu0
  %v645 = vadd.f32 0.0, %v644
  %v646 = vpop.f32.mrb[0].mxu0
  %647 = vmatprep.mubr.bf16.mxu0 0
  %648 = vmatmul.mubr.bf16.gmra.mrb[0].mxu0 %v599
  %v649 = vpop.f32.mrb[0].mxu0
  %v650 = vadd.f32 0.0, %v649
  %v651 = vpop.f32.mrb[0].mxu0
  %v652 = vpop.f32.mrb[0].mxu0
  %v653 = vadd.f32 0.0, %v652
  %v654 = vpop.f32.mrb[0].mxu0
  %655 = vmatprep.mubr.bf16.mxu0 0
  %656 = vmatmul.mubr.bf16.gmra.mrb[0].mxu0 %v602
  %v657 = vpop.f32.mrb[0].mxu0
  %v658 = vadd.f32 0.0, %v657
  %v659 = vpop.f32.mrb[0].mxu0
  %v660 = vpop.f32.mrb[0].mxu0
  %v661 = vadd.f32 0.0, %v660
  %v662 = vpop.f32.mrb[0].mxu0
  %663 = vmatprep.mubr.bf16.mxu0 0
  %664 = vmatmul.mubr.bf16.gmra.mrb[0].mxu0 %v605
  %v665 = vpop.f32.mrb[0].mxu0
  %v666 = vadd.f32 0.0, %v665
  %v667 = vpop.f32.mrb[0].mxu0
  %v668 = vpop.f32.mrb[0].mxu0
  %v669 = vadd.f32 0.0, %v668
  %v670 = vpop.f32.mrb[0].mxu0
  %671 = vdwg.mxu0
  %v672 = vadd.f32 %v446, %v642
  %v673 = vadd.f32 %v449, %v645
  %v674 = vadd.f32 %v454, %v650
  %v675 = vadd.f32 %v457, %v653
  %v676 = vadd.f32 %v462, %v658
  %v677 = vadd.f32 %v465, %v661
  %v678 = vadd.f32 %v470, %v666
  %v679 = vadd.f32 %v473, %v669
  %v680 = vld [vmem:[%s3] sm:$0x1]
  %v682 = vlaneseq
  %v683 = vshrl.u32 %v682, 7
  %v684 = vsub.s32 0, %v683
  %v685 = vrot.slane %v680, %v684
  %v687 = vmul.f32 %v672, %v685
  %v688 = vmul.f32 %v673, %v685
  %v689 = vmul.f32 %v674, %v685
  %v690 = vmul.f32 %v675, %v685
  %v691 = vmul.f32 %v676, %v685
  %v692 = vmul.f32 %v677, %v685
  %v693 = vmul.f32 %v678, %v685
  %v694 = vmul.f32 %v679, %v685
  %v695 = vld [vmem:[%s4] sm:$0x1]
  %v697 = vlaneseq
  %v698 = vshrl.u32 %v697, 7
  %v699 = vsub.s32 0, %v698
  %v700 = vrot.slane %v695, %v699
  %v702 = vadd.f32 %v687, %v700
  %v703 = vadd.f32 %v688, %v700
  %v704 = vadd.f32 %v689, %v700
  %v705 = vadd.f32 %v690, %v700
  %v706 = vadd.f32 %v691, %v700
  %v707 = vadd.f32 %v692, %v700
  %v708 = vadd.f32 %v693, %v700
  %v709 = vadd.f32 %v694, %v700
  %v710 = vmax.f32 %v702, 0.0
  %v711 = vmax.f32 %v703, 0.0
  %v712 = vmax.f32 %v704, 0.0
  %v713 = vmax.f32 %v705, 0.0
  %v714 = vmax.f32 %v706, 0.0
  %v715 = vmax.f32 %v707, 0.0
  %v716 = vmax.f32 %v708, 0.0
  %v717 = vmax.f32 %v709, 0.0
  %v718 = vmin.f32 %v710, 6.0
  %v719 = vmin.f32 %v711, 6.0
  %v720 = vmin.f32 %v712, 6.0
  %v721 = vmin.f32 %v713, 6.0
  %v722 = vmin.f32 %v714, 6.0
  %v723 = vmin.f32 %v715, 6.0
  %v724 = vmin.f32 %v716, 6.0
  %v725 = vmin.f32 %v717, 6.0
  %v726 = vpack.c.bf16 %v719, %v718
  %v727 = vpack.c.bf16 %v721, %v720
  %v728 = vpack.c.bf16 %v723, %v722
  %v729 = vpack.c.bf16 %v725, %v724
  %v734 = vunpack.c.l.b16 %v726
  %v735 = vunpack.c.h.b16 %v726
  %v736 = vunpack.c.l.b16 %v727
  %v737 = vunpack.c.h.b16 %v727
  %v738 = vunpack.c.l.b16 %v728
  %v739 = vunpack.c.h.b16 %v728
  %v740 = vunpack.c.l.b16 %v729
  %v741 = vunpack.c.h.b16 %v729
  %v742 = vpack.c.b16 %v734, %v734
  %v743 = vpack.c.b16 %v735, %v735
  %v744 = vpack.c.b16 %v736, %v736
  %v745 = vpack.c.b16 %v737, %v737
  %v746 = vpack.c.b16 %v738, %v738
  %v747 = vpack.c.b16 %v739, %v739
  %v748 = vpack.c.b16 %v740, %v740
  %v749 = vpack.c.b16 %v741, %v741
  %vm758 = vcmask 257024
  %759 = vst.msk [vmem:[%s5] sm:$0xf] %vm758, %v742
  %760 = vst.msk [vmem:[%s5 + $0x4] sm:$0xf] %vm758, %v743
  %761 = vst.msk [vmem:[%s5 + $0x8] sm:$0xf] %vm758, %v744
  %762 = vst.msk [vmem:[%s5 + $0xc] sm:$0xf] %vm758, %v745
  %763 = vst.msk [vmem:[%s5 + $0x10] sm:$0xf] %vm758, %v746
  %764 = vst.msk [vmem:[%s5 + $0x14] sm:$0xf] %vm758, %v747
  %765 = vst.msk [vmem:[%s5 + $0x18] sm:$0xf] %vm758, %v748
  %766 = vst.msk [vmem:[%s5 + $0x1c] sm:$0xf] %vm758, %v749
  // Predicated region
  $region22: #{_lambda_.7} parent=0 // pred_check
    _
  $region23: #{_lambda_.7} parent=0 // pred_check_branch
    %768 = sbr.rel (0) target = $region25
  $region24: #{_lambda_.7} parent=0 // pred_region
    _
  $region25: #{_lambda_.7} parent=0 // pred_fallthru
    _
  // Predicated region
  $region26: #{_lambda_.7} parent=0 // pred_check
    _
  $region27: #{_lambda_.7} parent=0 // pred_check_branch
    %770 = sbr.rel (0) target = $region29
  $region28: #{_lambda_.7} parent=0 // pred_region
    _
  $region29: #{_lambda_.7} parent=0 // pred_fallthru
    _

// kernel: _lambda_.11
$region0: #{_lambda_.11}
  #allocation0 [shape = 'u32[]', space=smem, size = 0x4, offset = 0x4, fixed_abs, tag = 'smem constant byte address 0x4 - core index']
  #allocation1 [shape = 'u32[144,128]{1,0:T(1,128)}', space=vmem, size = 0x12000, scoped, tag = 'internal scratch']
  %s0 = inlined_call_operand.vmem [shape: bf16[16,32], index: 0, kind: input, shape index: {}]
  %s1 = inlined_call_operand.vmem [shape: bf16[32,192], index: 1, kind: input, shape index: {}]
  %s2 = inlined_call_operand.vmem [shape: f32[1,192], index: 2, kind: input, shape index: {}, may-alias: {2,6}]
  %s3 = inlined_call_operand.vmem [shape: f32[1,192], index: 3, kind: input, shape index: {}, may-alias: {3,7}]
  %s4 = inlined_call_operand.vmem [shape: bf16[3,8,16], index: 4, kind: input, shape index: {}]
  %s5 = inlined_call_operand.vmem [shape: f32[3,1,192], index: 5, kind: input, shape index: {}]
  %s6 = inlined_call_operand.vmem [shape: f32[1,192], index: 6, kind: input, shape index: {}, may-alias: {2,6}]
  %s7 = inlined_call_operand.vmem [shape: f32[1,192], index: 7, kind: input, shape index: {}, may-alias: {3,7}]
  %s8 = inlined_call_operand.vmem [shape: bf16[192,64], index: 8, kind: input, shape index: {}]
  %s9 = inlined_call_operand.vmem [shape: f32[1,64], index: 9, kind: input, shape index: {}]
  %s10 = inlined_call_operand.vmem [shape: f32[1,64], index: 10, kind: input, shape index: {}]
  %s11 = inlined_call_operand.vmem [shape: bf16[8,64], index: 11, kind: output, shape index: {}]
  %s12 = sld [smem:[#allocation0]]
  $region54: #{_lambda_.11} parent=0
    _
  %s14 = ssub.s32 1, %s12
  %s15 = scalar_select 0, %s14, %s12
  // Predicated region
  $region2: #{_lambda_.11} parent=0 // pred_check
    _
  $region3: #{_lambda_.11} parent=0 // pred_check_branch
    %17 = sbr.rel (0) target = $region5
  $region4: #{_lambda_.11} parent=0 // pred_region
    _
  $region5: #{_lambda_.11} parent=0 // pred_fallthru
    _
  // Predicated region
  $region6: #{_lambda_.11} parent=0 // pred_check
    _
  $region7: #{_lambda_.11} parent=0 // pred_check_branch
    %19 = sbr.rel (0) target = $region9
  $region8: #{_lambda_.11} parent=0 // pred_region
    _
  $region9: #{_lambda_.11} parent=0 // pred_fallthru
    _
  // Predicated region
  $region10: #{_lambda_.11} parent=0 // pred_check
    _
  $region11: #{_lambda_.11} parent=0 // pred_check_branch
    %21 = sbr.rel (0) target = $region13
  $region12: #{_lambda_.11} parent=0 // pred_region
    _
  $region13: #{_lambda_.11} parent=0 // pred_fallthru
    _
  // Predicated region
  $region14: #{_lambda_.11} parent=0 // pred_check
    _
  $region15: #{_lambda_.11} parent=0 // pred_check_branch
    %23 = sbr.rel (0) target = $region17
  $region16: #{_lambda_.11} parent=0 // pred_region
    _
  $region17: #{_lambda_.11} parent=0 // pred_fallthru
    _
  // Predicated region
  $region18: #{_lambda_.11} parent=0 // pred_check
    _
  $region19: #{_lambda_.11} parent=0 // pred_check_branch
    %25 = sbr.rel (0) target = $region21
  $region20: #{_lambda_.11} parent=0 // pred_region
    _
  $region21: #{_lambda_.11} parent=0 // pred_fallthru
    _
  // Predicated region
  $region22: #{_lambda_.11} parent=0 // pred_check
    _
  $region23: #{_lambda_.11} parent=0 // pred_check_branch
    %27 = sbr.rel (0) target = $region25
  $region24: #{_lambda_.11} parent=0 // pred_region
    _
  $region25: #{_lambda_.11} parent=0 // pred_fallthru
    _
  // Predicated region
  $region26: #{_lambda_.11} parent=0 // pred_check
    _
  $region27: #{_lambda_.11} parent=0 // pred_check_branch
    %29 = sbr.rel (0) target = $region29
  $region28: #{_lambda_.11} parent=0 // pred_region
    _
  $region29: #{_lambda_.11} parent=0 // pred_fallthru
    _
  // Predicated region
  $region30: #{_lambda_.11} parent=0 // pred_check
    _
  $region31: #{_lambda_.11} parent=0 // pred_check_branch
    %31 = sbr.rel (0) target = $region33
  $region32: #{_lambda_.11} parent=0 // pred_region
    _
  $region33: #{_lambda_.11} parent=0 // pred_fallthru
    _
  // Predicated region
  $region34: #{_lambda_.11} parent=0 // pred_check
    _
  $region35: #{_lambda_.11} parent=0 // pred_check_branch
    %33 = sbr.rel (0) target = $region37
  $region36: #{_lambda_.11} parent=0 // pred_region
    _
  $region37: #{_lambda_.11} parent=0 // pred_fallthru
    _
  // Predicated region
  $region38: #{_lambda_.11} parent=0 // pred_check
    _
  $region39: #{_lambda_.11} parent=0 // pred_check_branch
    %35 = sbr.rel (0) target = $region41
  $region40: #{_lambda_.11} parent=0 // pred_region
    _
  $region41: #{_lambda_.11} parent=0 // pred_fallthru
    _
  // Predicated region
  $region42: #{_lambda_.11} parent=0 // pred_check
    _
  $region43: #{_lambda_.11} parent=0 // pred_check_branch
    %37 = sbr.rel (0) target = $region45
  $region44: #{_lambda_.11} parent=0 // pred_region
    _
  $region45: #{_lambda_.11} parent=0 // pred_fallthru
    _
  %v39 = vld [vmem:[%s0] sm:$0xf]
  %v40 = vld [vmem:[%s0 + $0x4] sm:$0xf]
  %v41 = vld [vmem:[%s1] sm:$0xff]
  %v42 = vld [vmem:[%s1 + $0x8] sm:$0xff]
  %v43 = vld [vmem:[%s1 + $0x10] sm:$0xff]
  %v44 = vld [vmem:[%s1 + $0x18] sm:$0xff]
  %v47 = vunpack.c.l.b16 %v39
  %v48 = vunpack.c.l.b16 %v40
  %v49 = vpack.c.b16 %v48, %v47
  %v54 = vunpack.c.l.b16 %v41
  %v55 = vunpack.c.h.b16 %v41
  %v56 = vunpack.c.l.b16 %v42
  %v57 = vunpack.c.h.b16 %v42
  %v58 = vunpack.c.l.b16 %v43
  %v59 = vunpack.c.h.b16 %v43
  %v60 = vunpack.c.l.b16 %v44
  %v61 = vunpack.c.h.b16 %v44
  %v62 = vpack.c.b16 %v56, %v54
  %v63 = vpack.c.b16 %v57, %v55
  %v64 = vpack.c.b16 %v60, %v58
  %v65 = vpack.c.b16 %v61, %v59
  %vm70 = vcmask 261120
  %v72 = vsel %vm70, %v49, 0
  %74 = vmatprep.subr.bf16.mxu0 %v63
  %75 = vmatpush1.bf16.msra.mxu0 %v62
  %76 = vmatprep.subr.bf16.mxu0 %v65
  %77 = vmatpush1.bf16.msra.mxu0 %v64
  %78 = vmatprep.subr.bf16.mxu0 0
  %79 = vmatpush1.bf16.msra.mxu0 0
  %80 = vmatprep.subr.bf16.mxu0 0
  %81 = vmatpush1.bf16.msra.mxu0 0
  %82 = vmatprep.subr.bf16.mxu0 0
  %83 = vmatpush1.bf16.msra.mxu0 0
  %84 = vmatprep.subr.bf16.mxu0 0
  %85 = vmatpush1.bf16.msra.mxu0 0
  %86 = vmatprep.subr.bf16.mxu0 0
  %87 = vmatpush1.bf16.msra.mxu0 0
  %88 = vmatprep.subr.bf16.mxu0 0
  %89 = vmatpush1.bf16.msra.mxu0 0
  %90 = vmatprep.subr.bf16.mxu0 0
  %91 = vmatpush1.bf16.msra.mxu0 0
  %92 = vmatprep.subr.bf16.mxu0 0
  %93 = vmatpush1.bf16.msra.mxu0 0
  %94 = vmatprep.subr.bf16.mxu0 0
  %95 = vmatpush1.bf16.msra.mxu0 0
  %96 = vmatprep.subr.bf16.mxu0 0
  %97 = vmatpush1.bf16.msra.mxu0 0
  %98 = vmatprep.subr.bf16.mxu0 0
  %99 = vmatpush1.bf16.msra.mxu0 0
  %100 = vmatprep.subr.bf16.mxu0 0
  %101 = vmatpush1.bf16.msra.mxu0 0
  %102 = vmatprep.subr.bf16.mxu0 0
  %103 = vmatpush1.bf16.msra.mxu0 0
  %104 = vmatprep.subr.bf16.mxu0 0
  %105 = vmatpush1.bf16.msra.mxu0 0
  %106 = vmatprep.mubr.bf16.mxu0 0
  %107 = vmatmul.mubr.bf16.gmra.mrb[0].mxu0 %v72
  %v108 = vpop.f32.mrb[0].mxu0
  %v109 = vadd.f32 0.0, %v108
  %v110 = vpop.f32.mrb[0].mxu0
  %v111 = vadd.f32 0.0, %v110
  %v112 = vpop.f32.mrb[0].mxu0
  %v113 = vadd.f32 0.0, %v112
  %v114 = vpop.f32.mrb[0].mxu0
  %v115 = vadd.f32 0.0, %v114
  %116 = vdwg.mxu0
  %v117 = vld [vmem:[%s2] sm:$0x3]
  %v119 = vlaneseq
  %v120 = vshrl.u32 %v119, 7
  %v121 = vsub.s32 0, %v120
  %v122 = vrot.slane %v117, %v121
  %v123 = vlaneseq
  %v124 = vshrl.u32 %v123, 7
  %v125 = vsub.s32 1, %v124
  %v126 = vrot.slane %v117, %v125
  %v129 = vmul.f32 %v109, %v122
  %v130 = vmul.f32 %v111, %v126
  %v131 = vmul.f32 %v113, %v122
  %v132 = vmul.f32 %v115, %v126
  %v133 = vld [vmem:[%s3] sm:$0x3]
  %v135 = vlaneseq
  %v136 = vshrl.u32 %v135, 7
  %v137 = vsub.s32 0, %v136
  %v138 = vrot.slane %v133, %v137
  %v139 = vlaneseq
  %v140 = vshrl.u32 %v139, 7
  %v141 = vsub.s32 1, %v140
  %v142 = vrot.slane %v133, %v141
  %v145 = vadd.f32 %v129, %v138
  %v146 = vadd.f32 %v130, %v142
  %v147 = vadd.f32 %v131, %v138
  %v148 = vadd.f32 %v132, %v142
  %v149 = vmax.f32 %v145, 0.0
  %v150 = vmax.f32 %v146, 0.0
  %v151 = vmax.f32 %v147, 0.0
  %v152 = vmax.f32 %v148, 0.0
  %v153 = vmin.f32 %v149, 6.0
  %v154 = vmin.f32 %v150, 6.0
  %v155 = vmin.f32 %v151, 6.0
  %v156 = vmin.f32 %v152, 6.0
  %v157 = vpack.c.bf16 %v155, %v153
  %v158 = vpack.c.bf16 %v156, %v154
  %v159 = vld [vmem:[%s4] sm:$0xf]
  %vm160 = vcmask 130048
  %v162 = vsel %vm160, %v159, 0
  %164 = vmatprep.subr.bf16.mxu0 %v158
  %165 = vmatpush1.bf16.msra.mxu0 %v157
  %166 = vmatprep.subr.bf16.mxu0 0
  %167 = vmatpush1.bf16.msra.mxu0 0
  %168 = vmatprep.subr.bf16.mxu0 0
  %169 = vmatpush1.bf16.msra.mxu0 0
  %170 = vmatprep.subr.bf16.mxu0 0
  %171 = vmatpush1.bf16.msra.mxu0 0
  %172 = vmatprep.subr.bf16.mxu0 0
  %173 = vmatpush1.bf16.msra.mxu0 0
  %174 = vmatprep.subr.bf16.mxu0 0
  %175 = vmatpush1.bf16.msra.mxu0 0
  %176 = vmatprep.subr.bf16.mxu0 0
  %177 = vmatpush1.bf16.msra.mxu0 0
  %178 = vmatprep.subr.bf16.mxu0 0
  %179 = vmatpush1.bf16.msra.mxu0 0
  %180 = vmatprep.subr.bf16.mxu0 0
  %181 = vmatpush1.bf16.msra.mxu0 0
  %182 = vmatprep.subr.bf16.mxu0 0
  %183 = vmatpush1.bf16.msra.mxu0 0
  %184 = vmatprep.subr.bf16.mxu0 0
  %185 = vmatpush1.bf16.msra.mxu0 0
  %186 = vmatprep.subr.bf16.mxu0 0
  %187 = vmatpush1.bf16.msra.mxu0 0
  %188 = vmatprep.subr.bf16.mxu0 0
  %189 = vmatpush1.bf16.msra.mxu0 0
  %190 = vmatprep.subr.bf16.mxu0 0
  %191 = vmatpush1.bf16.msra.mxu0 0
  %192 = vmatprep.subr.bf16.mxu0 0
  %193 = vmatpush1.bf16.msra.mxu0 0
  %194 = vmatprep.subr.bf16.mxu0 0
  %195 = vmatpush1.bf16.msra.mxu0 0
  %196 = vmatprep.mubr.bf16.mxu0 0
  %197 = vmatmul.mubr.bf16.gmra.mrb[0].mxu0 %v162
  %v198 = vpop.f32.mrb[0].mxu0
  %v199 = vadd.f32 0.0, %v198
  %v200 = vpop.f32.mrb[0].mxu0
  %v201 = vadd.f32 0.0, %v200
  %v202 = vpop.f32.mrb[0].mxu0
  %v203 = vpop.f32.mrb[0].mxu0
  %204 = vdwg.mxu0
  %v205 = vld [vmem:[%s5] sm:$0x3]
  %v207 = vlaneseq
  %v208 = vshrl.u32 %v207, 7
  %v209 = vsub.s32 0, %v208
  %v210 = vrot.slane %v205, %v209
  %v211 = vlaneseq
  %v212 = vshrl.u32 %v211, 7
  %v213 = vsub.s32 1, %v212
  %v214 = vrot.slane %v205, %v213
  %v217 = vmul.f32 %v199, %v210
  %v218 = vmul.f32 %v201, %v214
  %v219 = vadd.f32 %v217, 0.0
  %v220 = vadd.f32 %v218, 0.0
  %s221 = scalar_lea.vmem %s4, 4
  %v222 = vld [vmem:[%s221] sm:$0xf]
  %v224 = vsel %vm160, %v222, 0
  %226 = vmatprep.subr.bf16.mxu0 %v158
  %227 = vmatpush1.bf16.msra.mxu0 %v157
  %228 = vmatprep.subr.bf16.mxu0 0
  %229 = vmatpush1.bf16.msra.mxu0 0
  %230 = vmatprep.subr.bf16.mxu0 0
  %231 = vmatpush1.bf16.msra.mxu0 0
  %232 = vmatprep.subr.bf16.mxu0 0
  %233 = vmatpush1.bf16.msra.mxu0 0
  %234 = vmatprep.subr.bf16.mxu0 0
  %235 = vmatpush1.bf16.msra.mxu0 0
  %236 = vmatprep.subr.bf16.mxu0 0
  %237 = vmatpush1.bf16.msra.mxu0 0
  %238 = vmatprep.subr.bf16.mxu0 0
  %239 = vmatpush1.bf16.msra.mxu0 0
  %240 = vmatprep.subr.bf16.mxu0 0
  %241 = vmatpush1.bf16.msra.mxu0 0
  %242 = vmatprep.subr.bf16.mxu0 0
  %243 = vmatpush1.bf16.msra.mxu0 0
  %244 = vmatprep.subr.bf16.mxu0 0
  %245 = vmatpush1.bf16.msra.mxu0 0
  %246 = vmatprep.subr.bf16.mxu0 0
  %247 = vmatpush1.bf16.msra.mxu0 0
  %248 = vmatprep.subr.bf16.mxu0 0
  %249 = vmatpush1.bf16.msra.mxu0 0
  %250 = vmatprep.subr.bf16.mxu0 0
  %251 = vmatpush1.bf16.msra.mxu0 0
  %252 = vmatprep.subr.bf16.mxu0 0
  %253 = vmatpush1.bf16.msra.mxu0 0
  %254 = vmatprep.subr.bf16.mxu0 0
  %255 = vmatpush1.bf16.msra.mxu0 0
  %256 = vmatprep.subr.bf16.mxu0 0
  %257 = vmatpush1.bf16.msra.mxu0 0
  %258 = vmatprep.mubr.bf16.mxu0 0
  %259 = vmatmul.mubr.bf16.gmra.mrb[0].mxu0 %v224
  %v260 = vpop.f32.mrb[0].mxu0
  %v261 = vadd.f32 0.0, %v260
  %v262 = vpop.f32.mrb[0].mxu0
  %v263 = vadd.f32 0.0, %v262
  %v264 = vpop.f32.mrb[0].mxu0
  %v265 = vpop.f32.mrb[0].mxu0
  %266 = vdwg.mxu0
  %s267 = scalar_lea.vmem %s5, 2
  %v268 = vld [vmem:[%s267] sm:$0x3]
  %v270 = vlaneseq
  %v271 = vshrl.u32 %v270, 7
  %v272 = vsub.s32 0, %v271
  %v273 = vrot.slane %v268, %v272
  %v274 = vlaneseq
  %v275 = vshrl.u32 %v274, 7
  %v276 = vsub.s32 1, %v275
  %v277 = vrot.slane %v268, %v276
  %v280 = vmul.f32 %v261, %v273
  %v281 = vmul.f32 %v263, %v277
  %v282 = vadd.f32 %v219, %v280
  %v283 = vadd.f32 %v220, %v281
  %s284 = scalar_lea.vmem %s4, 8
  %v285 = vld [vmem:[%s284] sm:$0xf]
  %v287 = vsel %vm160, %v285, 0
  %289 = vmatprep.subr.bf16.mxu0 %v158
  %290 = vmatpush1.bf16.msra.mxu0 %v157
  %291 = vmatprep.subr.bf16.mxu0 0
  %292 = vmatpush1.bf16.msra.mxu0 0
  %293 = vmatprep.subr.bf16.mxu0 0
  %294 = vmatpush1.bf16.msra.mxu0 0
  %295 = vmatprep.subr.bf16.mxu0 0
  %296 = vmatpush1.bf16.msra.mxu0 0
  %297 = vmatprep.subr.bf16.mxu0 0
  %298 = vmatpush1.bf16.msra.mxu0 0
  %299 = vmatprep.subr.bf16.mxu0 0
  %300 = vmatpush1.bf16.msra.mxu0 0
  %301 = vmatprep.subr.bf16.mxu0 0
  %302 = vmatpush1.bf16.msra.mxu0 0
  %303 = vmatprep.subr.bf16.mxu0 0
  %304 = vmatpush1.bf16.msra.mxu0 0
  %305 = vmatprep.subr.bf16.mxu0 0
  %306 = vmatpush1.bf16.msra.mxu0 0
  %307 = vmatprep.subr.bf16.mxu0 0
  %308 = vmatpush1.bf16.msra.mxu0 0
  %309 = vmatprep.subr.bf16.mxu0 0
  %310 = vmatpush1.bf16.msra.mxu0 0
  %311 = vmatprep.subr.bf16.mxu0 0
  %312 = vmatpush1.bf16.msra.mxu0 0
  %313 = vmatprep.subr.bf16.mxu0 0
  %314 = vmatpush1.bf16.msra.mxu0 0
  %315 = vmatprep.subr.bf16.mxu0 0
  %316 = vmatpush1.bf16.msra.mxu0 0
  %317 = vmatprep.subr.bf16.mxu0 0
  %318 = vmatpush1.bf16.msra.mxu0 0
  %319 = vmatprep.subr.bf16.mxu0 0
  %320 = vmatpush1.bf16.msra.mxu0 0
  %321 = vmatprep.mubr.bf16.mxu0 0
  %322 = vmatmul.mubr.bf16.gmra.mrb[0].mxu0 %v287
  %v323 = vpop.f32.mrb[0].mxu0
  %v324 = vadd.f32 0.0, %v323
  %v325 = vpop.f32.mrb[0].mxu0
  %v326 = vadd.f32 0.0, %v325
  %v327 = vpop.f32.mrb[0].mxu0
  %v328 = vpop.f32.mrb[0].mxu0
  %329 = vdwg.mxu0
  %s330 = scalar_lea.vmem %s5, 4
  %v331 = vld [vmem:[%s330] sm:$0x3]
  %v333 = vlaneseq
  %v334 = vshrl.u32 %v333, 7
  %v335 = vsub.s32 0, %v334
  %v336 = vrot.slane %v331, %v335
  %v337 = vlaneseq
  %v338 = vshrl.u32 %v337, 7
  %v339 = vsub.s32 1, %v338
  %v340 = vrot.slane %v331, %v339
  %v343 = vmul.f32 %v324, %v336
  %v344 = vmul.f32 %v326, %v340
  %v345 = vadd.f32 %v282, %v343
  %v346 = vadd.f32 %v283, %v344
  %v347 = vld [vmem:[%s6] sm:$0x3]
  %v349 = vlaneseq
  %v350 = vshrl.u32 %v349, 7
  %v351 = vsub.s32 0, %v350
  %v352 = vrot.slane %v347, %v351
  %v353 = vlaneseq
  %v354 = vshrl.u32 %v353, 7
  %v355 = vsub.s32 1, %v354
  %v356 = vrot.slane %v347, %v355
  %v359 = vmul.f32 %v345, %v352
  %v360 = vmul.f32 %v346, %v356
  %v361 = vld [vmem:[%s7] sm:$0x3]
  %v363 = vlaneseq
  %v364 = vshrl.u32 %v363, 7
  %v365 = vsub.s32 0, %v364
  %v366 = vrot.slane %v361, %v365
  %v367 = vlaneseq
  %v368 = vshrl.u32 %v367, 7
  %v369 = vsub.s32 1, %v368
  %v370 = vrot.slane %v361, %v369
  %v373 = vadd.f32 %v359, %v366
  %v374 = vadd.f32 %v360, %v370
  %v375 = vmax.f32 %v373, 0.0
  %v376 = vmax.f32 %v374, 0.0
  %v377 = vmin.f32 %v375, 6.0
  %v378 = vmin.f32 %v376, 6.0
  %v379 = vpack.c.bf16 %v377, %v377
  %v380 = vpack.c.bf16 %v378, %v378
  %v381 = vld [vmem:[%s8] sm:$0xf]
  %v382 = vld [vmem:[%s8 + $0x4] sm:$0xf]
  %v383 = vld [vmem:[%s8 + $0x8] sm:$0xf]
  %v384 = vld [vmem:[%s8 + $0xc] sm:$0xf]
  %v385 = vld [vmem:[%s8 + $0x10] sm:$0xf]
  %v386 = vld [vmem:[%s8 + $0x14] sm:$0xf]
  %v387 = vld [vmem:[%s8 + $0x18] sm:$0xf]
  %v388 = vld [vmem:[%s8 + $0x1c] sm:$0xf]
  %v389 = vld [vmem:[%s8 + $0x20] sm:$0xf]
  %v390 = vld [vmem:[%s8 + $0x24] sm:$0xf]
  %v391 = vld [vmem:[%s8 + $0x28] sm:$0xf]
  %v392 = vld [vmem:[%s8 + $0x2c] sm:$0xf]
  %v393 = vld [vmem:[%s8 + $0x30] sm:$0xf]
  %v394 = vld [vmem:[%s8 + $0x34] sm:$0xf]
  %v395 = vld [vmem:[%s8 + $0x38] sm:$0xf]
  %v396 = vld [vmem:[%s8 + $0x3c] sm:$0xf]
  %v397 = vld [vmem:[%s8 + $0x40] sm:$0xf]
  %v398 = vld [vmem:[%s8 + $0x44] sm:$0xf]
  %v399 = vld [vmem:[%s8 + $0x48] sm:$0xf]
  %v400 = vld [vmem:[%s8 + $0x4c] sm:$0xf]
  %v401 = vld [vmem:[%s8 + $0x50] sm:$0xf]
  %v402 = vld [vmem:[%s8 + $0x54] sm:$0xf]
  %v403 = vld [vmem:[%s8 + $0x58] sm:$0xf]
  %v404 = vld [vmem:[%s8 + $0x5c] sm:$0xf]
  %v429 = vunpack.c.l.b16 %v381
  %v430 = vunpack.c.l.b16 %v382
  %v431 = vunpack.c.l.b16 %v383
  %v432 = vunpack.c.l.b16 %v384
  %v433 = vunpack.c.l.b16 %v385
  %v434 = vunpack.c.l.b16 %v386
  %v435 = vunpack.c.l.b16 %v387
  %v436 = vunpack.c.l.b16 %v388
  %v437 = vunpack.c.l.b16 %v389
  %v438 = vunpack.c.l.b16 %v390
  %v439 = vunpack.c.l.b16 %v391
  %v440 = vunpack.c.l.b16 %v392
  %v441 = vunpack.c.l.b16 %v393
  %v442 = vunpack.c.l.b16 %v394
  %v443 = vunpack.c.l.b16 %v395
  %v444 = vunpack.c.l.b16 %v396
  %v445 = vunpack.c.l.b16 %v397
  %v446 = vunpack.c.l.b16 %v398
  %v447 = vunpack.c.l.b16 %v399
  %v448 = vunpack.c.l.b16 %v400
  %v449 = vunpack.c.l.b16 %v401
  %v450 = vunpack.c.l.b16 %v402
  %v451 = vunpack.c.l.b16 %v403
  %v452 = vunpack.c.l.b16 %v404
  %v453 = vpack.c.b16 %v430, %v429
  %v454 = vpack.c.b16 %v432, %v431
  %v455 = vpack.c.b16 %v434, %v433
  %v456 = vpack.c.b16 %v436, %v435
  %v457 = vpack.c.b16 %v438, %v437
  %v458 = vpack.c.b16 %v440, %v439
  %v459 = vpack.c.b16 %v442, %v441
  %v460 = vpack.c.b16 %v444, %v443
  %v461 = vpack.c.b16 %v446, %v445
  %v462 = vpack.c.b16 %v448, %v447
  %v463 = vpack.c.b16 %v450, %v449
  %v464 = vpack.c.b16 %v452, %v451
  %vm477 = vcmask 523264
  %v479 = vsel %vm477, %v380, 0
  %481 = vmatprep.subr.bf16.mxu0 0
  %482 = vmatpush1.bf16.msra.mxu0 %v453
  %483 = vmatprep.subr.bf16.mxu0 0
  %484 = vmatpush1.bf16.msra.mxu0 %v454
  %485 = vmatprep.subr.bf16.mxu0 0
  %486 = vmatpush1.bf16.msra.mxu0 %v455
  %487 = vmatprep.subr.bf16.mxu0 0
  %488 = vmatpush1.bf16.msra.mxu0 %v456
  %489 = vmatprep.subr.bf16.mxu0 0
  %490 = vmatpush1.bf16.msra.mxu0 %v457
  %491 = vmatprep.subr.bf16.mxu0 0
  %492 = vmatpush1.bf16.msra.mxu0 %v458
  %493 = vmatprep.subr.bf16.mxu0 0
  %494 = vmatpush1.bf16.msra.mxu0 %v459
  %495 = vmatprep.subr.bf16.mxu0 0
  %496 = vmatpush1.bf16.msra.mxu0 %v460
  %497 = vmatprep.subr.bf16.mxu0 0
  %498 = vmatpush1.bf16.msra.mxu0 %v461
  %499 = vmatprep.subr.bf16.mxu0 0
  %500 = vmatpush1.bf16.msra.mxu0 %v462
  %501 = vmatprep.subr.bf16.mxu0 0
  %502 = vmatpush1.bf16.msra.mxu0 %v463
  %503 = vmatprep.subr.bf16.mxu0 0
  %504 = vmatpush1.bf16.msra.mxu0 %v464
  %505 = vmatprep.subr.bf16.mxu0 0
  %506 = vmatpush1.bf16.msra.mxu0 0
  %507 = vmatprep.subr.bf16.mxu0 0
  %508 = vmatpush1.bf16.msra.mxu0 0
  %509 = vmatprep.subr.bf16.mxu0 0
  %510 = vmatpush1.bf16.msra.mxu0 0
  %511 = vmatprep.subr.bf16.mxu0 0
  %512 = vmatpush1.bf16.msra.mxu0 0
  %513 = vmatprep.mubr.bf16.mxu0 %v479
  %514 = vmatmul.mubr.bf16.gmra.mrb[0].mxu0 %v379
  %v515 = vpop.f32.mrb[0].mxu0
  %v516 = vadd.f32 0.0, %v515
  %v517 = vpop.f32.mrb[0].mxu0
  %v518 = vpop.f32.mrb[0].mxu0
  %v519 = vpop.f32.mrb[0].mxu0
  %520 = vdwg.mxu0
  %v521 = vld [vmem:[%s9] sm:$0x1]
  %v523 = vlaneseq
  %v524 = vshrl.u32 %v523, 7
  %v525 = vsub.s32 0, %v524
  %v526 = vrot.slane %v521, %v525
  %v528 = vmul.f32 %v516, %v526
  %v529 = vld [vmem:[%s10] sm:$0x1]
  %v531 = vlaneseq
  %v532 = vshrl.u32 %v531, 7
  %v533 = vsub.s32 0, %v532
  %v534 = vrot.slane %v529, %v533
  %v536 = vadd.f32 %v528, %v534
  %v537 = vpack.c.bf16 %v536, %v536
  %vm538 = vcmask 519168
  %539 = vst.msk [vmem:[%s11] sm:$0xf] %vm538, %v537
  // Predicated region
  $region46: #{_lambda_.11} parent=0 // pred_check
    _
  $region47: #{_lambda_.11} parent=0 // pred_check_branch
    %541 = sbr.rel (0) target = $region49
  $region48: #{_lambda_.11} parent=0 // pred_region
    _
  $region49: #{_lambda_.11} parent=0 // pred_fallthru
    _
  // Predicated region
  $region50: #{_lambda_.11} parent=0 // pred_check
    _
  $region51: #{_lambda_.11} parent=0 // pred_check_branch
    %543 = sbr.rel (0) target = $region53
  $region52: #{_lambda_.11} parent=0 // pred_region
    _
  $region53: #{_lambda_.11} parent=0 // pred_fallthru
    _

// kernel: _lambda_.12
$region0: #{_lambda_.12}
  #allocation0 [shape = 'u32[]', space=smem, size = 0x4, offset = 0x4, fixed_abs, tag = 'smem constant byte address 0x4 - core index']
  #allocation1 [shape = 'u32[144,128]{1,0:T(1,128)}', space=vmem, size = 0x12000, scoped, tag = 'internal scratch']
  %s0 = inlined_call_operand.vmem [shape: bf16[8,64], index: 0, kind: input, shape index: {}]
  %s1 = inlined_call_operand.vmem [shape: bf16[64,384], index: 1, kind: input, shape index: {}]
  %s2 = inlined_call_operand.vmem [shape: f32[1,384], index: 2, kind: input, shape index: {}, may-alias: {2,6}]
  %s3 = inlined_call_operand.vmem [shape: f32[1,384], index: 3, kind: input, shape index: {}, may-alias: {3,7}]
  %s4 = inlined_call_operand.vmem [shape: bf16[3,8,8], index: 4, kind: input, shape index: {}]
  %s5 = inlined_call_operand.vmem [shape: f32[3,1,384], index: 5, kind: input, shape index: {}]
  %s6 = inlined_call_operand.vmem [shape: f32[1,384], index: 6, kind: input, shape index: {}, may-alias: {2,6}]
  %s7 = inlined_call_operand.vmem [shape: f32[1,384], index: 7, kind: input, shape index: {}, may-alias: {3,7}]
  %s8 = inlined_call_operand.vmem [shape: bf16[384,64], index: 8, kind: input, shape index: {}]
  %s9 = inlined_call_operand.vmem [shape: f32[1,64], index: 9, kind: input, shape index: {}]
  %s10 = inlined_call_operand.vmem [shape: f32[1,64], index: 10, kind: input, shape index: {}]
  %s11 = inlined_call_operand.vmem [shape: bf16[8,64], index: 11, kind: output, shape index: {}]
  %s12 = sld [smem:[#allocation0]]
  $region54: #{_lambda_.12} parent=0
    _
  %s14 = ssub.s32 1, %s12
  %s15 = scalar_select 0, %s14, %s12
  // Predicated region
  $region2: #{_lambda_.12} parent=0 // pred_check
    _
  $region3: #{_lambda_.12} parent=0 // pred_check_branch
    %17 = sbr.rel (0) target = $region5
  $region4: #{_lambda_.12} parent=0 // pred_region
    _
  $region5: #{_lambda_.12} parent=0 // pred_fallthru
    _
  // Predicated region
  $region6: #{_lambda_.12} parent=0 // pred_check
    _
  $region7: #{_lambda_.12} parent=0 // pred_check_branch
    %19 = sbr.rel (0) target = $region9
  $region8: #{_lambda_.12} parent=0 // pred_region
    _
  $region9: #{_lambda_.12} parent=0 // pred_fallthru
    _
  // Predicated region
  $region10: #{_lambda_.12} parent=0 // pred_check
    _
  $region11: #{_lambda_.12} parent=0 // pred_check_branch
    %21 = sbr.rel (0) target = $region13
  $region12: #{_lambda_.12} parent=0 // pred_region
    _
  $region13: #{_lambda_.12} parent=0 // pred_fallthru
    _
  // Predicated region
  $region14: #{_lambda_.12} parent=0 // pred_check
    _
  $region15: #{_lambda_.12} parent=0 // pred_check_branch
    %23 = sbr.rel (0) target = $region17
  $region16: #{_lambda_.12} parent=0 // pred_region
    _
  $region17: #{_lambda_.12} parent=0 // pred_fallthru
    _
  // Predicated region
  $region18: #{_lambda_.12} parent=0 // pred_check
    _
  $region19: #{_lambda_.12} parent=0 // pred_check_branch
    %25 = sbr.rel (0) target = $region21
  $region20: #{_lambda_.12} parent=0 // pred_region
    _
  $region21: #{_lambda_.12} parent=0 // pred_fallthru
    _
  // Predicated region
  $region22: #{_lambda_.12} parent=0 // pred_check
    _
  $region23: #{_lambda_.12} parent=0 // pred_check_branch
    %27 = sbr.rel (0) target = $region25
  $region24: #{_lambda_.12} parent=0 // pred_region
    _
  $region25: #{_lambda_.12} parent=0 // pred_fallthru
    _
  // Predicated region
  $region26: #{_lambda_.12} parent=0 // pred_check
    _
  $region27: #{_lambda_.12} parent=0 // pred_check_branch
    %29 = sbr.rel (0) target = $region29
  $region28: #{_lambda_.12} parent=0 // pred_region
    _
  $region29: #{_lambda_.12} parent=0 // pred_fallthru
    _
  // Predicated region
  $region30: #{_lambda_.12} parent=0 // pred_check
    _
  $region31: #{_lambda_.12} parent=0 // pred_check_branch
    %31 = sbr.rel (0) target = $region33
  $region32: #{_lambda_.12} parent=0 // pred_region
    _
  $region33: #{_lambda_.12} parent=0 // pred_fallthru
    _
  // Predicated region
  $region34: #{_lambda_.12} parent=0 // pred_check
    _
  $region35: #{_lambda_.12} parent=0 // pred_check_branch
    %33 = sbr.rel (0) target = $region37
  $region36: #{_lambda_.12} parent=0 // pred_region
    _
  $region37: #{_lambda_.12} parent=0 // pred_fallthru
    _
  // Predicated region
  $region38: #{_lambda_.12} parent=0 // pred_check
    _
  $region39: #{_lambda_.12} parent=0 // pred_check_branch
    %35 = sbr.rel (0) target = $region41
  $region40: #{_lambda_.12} parent=0 // pred_region
    _
  $region41: #{_lambda_.12} parent=0 // pred_fallthru
    _
  // Predicated region
  $region42: #{_lambda_.12} parent=0 // pred_check
    _
  $region43: #{_lambda_.12} parent=0 // pred_check_branch
    %37 = sbr.rel (0) target = $region45
  $region44: #{_lambda_.12} parent=0 // pred_region
    _
  $region45: #{_lambda_.12} parent=0 // pred_fallthru
    _
  %v39 = vld [vmem:[%s0] sm:$0xf]
  %v40 = vld [vmem:[%s1] sm:$0xff]
  %v41 = vld [vmem:[%s1 + $0x8] sm:$0xf]
  %v42 = vld [vmem:[%s1 + $0xc] sm:$0xff]
  %v43 = vld [vmem:[%s1 + $0x14] sm:$0xf]
  %v44 = vld [vmem:[%s1 + $0x18] sm:$0xff]
  %v45 = vld [vmem:[%s1 + $0x20] sm:$0xf]
  %v46 = vld [vmem:[%s1 + $0x24] sm:$0xff]
  %v47 = vld [vmem:[%s1 + $0x2c] sm:$0xf]
  %v48 = vld [vmem:[%s1 + $0x30] sm:$0xff]
  %v49 = vld [vmem:[%s1 + $0x38] sm:$0xf]
  %v50 = vld [vmem:[%s1 + $0x3c] sm:$0xff]
  %v51 = vld [vmem:[%s1 + $0x44] sm:$0xf]
  %v52 = vld [vmem:[%s1 + $0x48] sm:$0xff]
  %v53 = vld [vmem:[%s1 + $0x50] sm:$0xf]
  %v54 = vld [vmem:[%s1 + $0x54] sm:$0xff]
  %v55 = vld [vmem:[%s1 + $0x5c] sm:$0xf]
  %v72 = vunpack.c.l.b16 %v40
  %v73 = vunpack.c.h.b16 %v40
  %v74 = vunpack.c.l.b16 %v41
  %v75 = vunpack.c.l.b16 %v42
  %v76 = vunpack.c.h.b16 %v42
  %v77 = vunpack.c.l.b16 %v43
  %v78 = vunpack.c.l.b16 %v44
  %v79 = vunpack.c.h.b16 %v44
  %v80 = vunpack.c.l.b16 %v45
  %v81 = vunpack.c.l.b16 %v46
  %v82 = vunpack.c.h.b16 %v46
  %v83 = vunpack.c.l.b16 %v47
  %v84 = vunpack.c.l.b16 %v48
  %v85 = vunpack.c.h.b16 %v48
  %v86 = vunpack.c.l.b16 %v49
  %v87 = vunpack.c.l.b16 %v50
  %v88 = vunpack.c.h.b16 %v50
  %v89 = vunpack.c.l.b16 %v51
  %v90 = vunpack.c.l.b16 %v52
  %v91 = vunpack.c.h.b16 %v52
  %v92 = vunpack.c.l.b16 %v53
  %v93 = vunpack.c.l.b16 %v54
  %v94 = vunpack.c.h.b16 %v54
  %v95 = vunpack.c.l.b16 %v55
  %v96 = vpack.c.b16 %v75, %v72
  %v97 = vpack.c.b16 %v76, %v73
  %v98 = vpack.c.b16 %v77, %v74
  %v99 = vpack.c.b16 %v81, %v78
  %v100 = vpack.c.b16 %v82, %v79
  %v101 = vpack.c.b16 %v83, %v80
  %v102 = vpack.c.b16 %v87, %v84
  %v103 = vpack.c.b16 %v88, %v85
  %v104 = vpack.c.b16 %v89, %v86
  %v105 = vpack.c.b16 %v93, %v90
  %v106 = vpack.c.b16 %v94, %v91
  %v107 = vpack.c.b16 %v95, %v92
  %vm120 = vcmask 523264
  %v122 = vsel %vm120, %v39, 0
  %124 = vmatprep.subr.bf16.mxu0 %v97
  %125 = vmatpush1.bf16.msra.mxu0 %v96
  %126 = vmatprep.subr.bf16.mxu0 %v100
  %127 = vmatpush1.bf16.msra.mxu0 %v99
  %128 = vmatprep.subr.bf16.mxu0 %v103
  %129 = vmatpush1.bf16.msra.mxu0 %v102
  %130 = vmatprep.subr.bf16.mxu0 %v106
  %131 = vmatpush1.bf16.msra.mxu0 %v105
  %132 = vmatprep.subr.bf16.mxu0 0
  %133 = vmatpush1.bf16.msra.mxu0 0
  %134 = vmatprep.subr.bf16.mxu0 0
  %135 = vmatpush1.bf16.msra.mxu0 0
  %136 = vmatprep.subr.bf16.mxu0 0
  %137 = vmatpush1.bf16.msra.mxu0 0
  %138 = vmatprep.subr.bf16.mxu0 0
  %139 = vmatpush1.bf16.msra.mxu0 0
  %140 = vmatprep.subr.bf16.mxu0 0
  %141 = vmatpush1.bf16.msra.mxu0 0
  %142 = vmatprep.subr.bf16.mxu0 0
  %143 = vmatpush1.bf16.msra.mxu0 0
  %144 = vmatprep.subr.bf16.mxu0 0
  %145 = vmatpush1.bf16.msra.mxu0 0
  %146 = vmatprep.subr.bf16.mxu0 0
  %147 = vmatpush1.bf16.msra.mxu0 0
  %148 = vmatprep.subr.bf16.mxu0 0
  %149 = vmatpush1.bf16.msra.mxu0 0
  %150 = vmatprep.subr.bf16.mxu0 0
  %151 = vmatpush1.bf16.msra.mxu0 0
  %152 = vmatprep.subr.bf16.mxu0 0
  %153 = vmatpush1.bf16.msra.mxu0 0
  %154 = vmatprep.subr.bf16.mxu0 0
  %155 = vmatpush1.bf16.msra.mxu0 0
  %156 = vmatprep.mubr.bf16.mxu0 0
  %157 = vmatmul.mubr.bf16.gmra.mrb[0].mxu0 %v122
  %v158 = vpop.f32.mrb[0].mxu0
  %v159 = vadd.f32 0.0, %v158
  %v160 = vpop.f32.mrb[0].mxu0
  %v161 = vadd.f32 0.0, %v160
  %v162 = vpop.f32.mrb[0].mxu0
  %v163 = vpop.f32.mrb[0].mxu0
  %164 = vdwg.mxu0
  %165 = vmatprep.subr.bf16.mxu0 0
  %166 = vmatpush1.bf16.msra.mxu0 %v98
  %167 = vmatprep.subr.bf16.mxu0 0
  %168 = vmatpush1.bf16.msra.mxu0 %v101
  %169 = vmatprep.subr.bf16.mxu0 0
  %170 = vmatpush1.bf16.msra.mxu0 %v104
  %171 = vmatprep.subr.bf16.mxu0 0
  %172 = vmatpush1.bf16.msra.mxu0 %v107
  %173 = vmatprep.subr.bf16.mxu0 0
  %174 = vmatpush1.bf16.msra.mxu0 0
  %175 = vmatprep.subr.bf16.mxu0 0
  %176 = vmatpush1.bf16.msra.mxu0 0
  %177 = vmatprep.subr.bf16.mxu0 0
  %178 = vmatpush1.bf16.msra.mxu0 0
  %179 = vmatprep.subr.bf16.mxu0 0
  %180 = vmatpush1.bf16.msra.mxu0 0
  %181 = vmatprep.subr.bf16.mxu0 0
  %182 = vmatpush1.bf16.msra.mxu0 0
  %183 = vmatprep.subr.bf16.mxu0 0
  %184 = vmatpush1.bf16.msra.mxu0 0
  %185 = vmatprep.subr.bf16.mxu0 0
  %186 = vmatpush1.bf16.msra.mxu0 0
  %187 = vmatprep.subr.bf16.mxu0 0
  %188 = vmatpush1.bf16.msra.mxu0 0
  %189 = vmatprep.subr.bf16.mxu0 0
  %190 = vmatpush1.bf16.msra.mxu0 0
  %191 = vmatprep.subr.bf16.mxu0 0
  %192 = vmatpush1.bf16.msra.mxu0 0
  %193 = vmatprep.subr.bf16.mxu0 0
  %194 = vmatpush1.bf16.msra.mxu0 0
  %195 = vmatprep.subr.bf16.mxu0 0
  %196 = vmatpush1.bf16.msra.mxu0 0
  %197 = vmatprep.mubr.bf16.mxu0 0
  %198 = vmatmul.mubr.bf16.gmra.mrb[0].mxu0 %v122
  %v199 = vpop.f32.mrb[0].mxu0
  %v200 = vadd.f32 0.0, %v199
  %v201 = vpop.f32.mrb[0].mxu0
  %v202 = vpop.f32.mrb[0].mxu0
  %v203 = vpop.f32.mrb[0].mxu0
  %204 = vdwg.mxu0
  %v205 = vld [vmem:[%s2] sm:$0x7]
  %v207 = vlaneseq
  %v208 = vshrl.u32 %v207, 7
  %v209 = vsub.s32 0, %v208
  %v210 = vrot.slane %v205, %v209
  %v211 = vlaneseq
  %v212 = vshrl.u32 %v211, 7
  %v213 = vsub.s32 1, %v212
  %v214 = vrot.slane %v205, %v213
  %v215 = vlaneseq
  %v216 = vshrl.u32 %v215, 7
  %v217 = vsub.s32 2, %v216
  %v218 = vrot.slane %v205, %v217
  %v222 = vmul.f32 %v159, %v210
  %v223 = vmul.f32 %v161, %v214
  %v224 = vmul.f32 %v200, %v218
  %v225 = vld [vmem:[%s3] sm:$0x7]
  %v227 = vlaneseq
  %v228 = vshrl.u32 %v227, 7
  %v229 = vsub.s32 0, %v228
  %v230 = vrot.slane %v225, %v229
  %v231 = vlaneseq
  %v232 = vshrl.u32 %v231, 7
  %v233 = vsub.s32 1, %v232
  %v234 = vrot.slane %v225, %v233
  %v235 = vlaneseq
  %v236 = vshrl.u32 %v235, 7
  %v237 = vsub.s32 2, %v236
  %v238 = vrot.slane %v225, %v237
  %v242 = vadd.f32 %v222, %v230
  %v243 = vadd.f32 %v223, %v234
  %v244 = vadd.f32 %v224, %v238
  %v245 = vmax.f32 %v242, 0.0
  %v246 = vmax.f32 %v243, 0.0
  %v247 = vmax.f32 %v244, 0.0
  %v248 = vmin.f32 %v245, 6.0
  %v249 = vmin.f32 %v246, 6.0
  %v250 = vmin.f32 %v247, 6.0
  %v251 = vpack.c.bf16 %v248, %v248
  %v252 = vpack.c.bf16 %v249, %v249
  %v253 = vpack.c.bf16 %v250, %v250
  %v254 = vld [vmem:[%s4] sm:$0xf]
  %vm255 = vcmask 64512
  %v257 = vsel %vm255, %v254, 0
  %vm259 = vcmask 1043456
  %v261 = vsel %vm259, %v251, 0
  %v264 = vsel %vm259, %v252, 0
  %v267 = vsel %vm259, %v253, 0
  %269 = vmatprep.subr.bf16.mxu0 %v264
  %270 = vmatpush1.bf16.msra.mxu0 %v261
  %271 = vmatprep.subr.bf16.mxu0 0
  %272 = vmatpush1.bf16.msra.mxu0 0
  %273 = vmatprep.subr.bf16.mxu0 0
  %274 = vmatpush1.bf16.msra.mxu0 0
  %275 = vmatprep.subr.bf16.mxu0 0
  %276 = vmatpush1.bf16.msra.mxu0 0
  %277 = vmatprep.subr.bf16.mxu0 0
  %278 = vmatpush1.bf16.msra.mxu0 0
  %279 = vmatprep.subr.bf16.mxu0 0
  %280 = vmatpush1.bf16.msra.mxu0 0
  %281 = vmatprep.subr.bf16.mxu0 0
  %282 = vmatpush1.bf16.msra.mxu0 0
  %283 = vmatprep.subr.bf16.mxu0 0
  %284 = vmatpush1.bf16.msra.mxu0 0
  %285 = vmatprep.subr.bf16.mxu0 0
  %286 = vmatpush1.bf16.msra.mxu0 0
  %287 = vmatprep.subr.bf16.mxu0 0
  %288 = vmatpush1.bf16.msra.mxu0 0
  %289 = vmatprep.subr.bf16.mxu0 0
  %290 = vmatpush1.bf16.msra.mxu0 0
  %291 = vmatprep.subr.bf16.mxu0 0
  %292 = vmatpush1.bf16.msra.mxu0 0
  %293 = vmatprep.subr.bf16.mxu0 0
  %294 = vmatpush1.bf16.msra.mxu0 0
  %295 = vmatprep.subr.bf16.mxu0 0
  %296 = vmatpush1.bf16.msra.mxu0 0
  %297 = vmatprep.subr.bf16.mxu0 0
  %298 = vmatpush1.bf16.msra.mxu0 0
  %299 = vmatprep.subr.bf16.mxu0 0
  %300 = vmatpush1.bf16.msra.mxu0 0
  %301 = vmatprep.mubr.bf16.mxu0 0
  %302 = vmatmul.mubr.bf16.gmra.mrb[0].mxu0 %v257
  %v303 = vpop.f32.mrb[0].mxu0
  %v304 = vadd.f32 0.0, %v303
  %v305 = vpop.f32.mrb[0].mxu0
  %v306 = vadd.f32 0.0, %v305
  %v307 = vpop.f32.mrb[0].mxu0
  %v308 = vpop.f32.mrb[0].mxu0
  %309 = vdwg.mxu0
  %310 = vmatprep.subr.bf16.mxu0 0
  %311 = vmatpush1.bf16.msra.mxu0 %v267
  %312 = vmatprep.subr.bf16.mxu0 0
  %313 = vmatpush1.bf16.msra.mxu0 0
  %314 = vmatprep.subr.bf16.mxu0 0
  %315 = vmatpush1.bf16.msra.mxu0 0
  %316 = vmatprep.subr.bf16.mxu0 0
  %317 = vmatpush1.bf16.msra.mxu0 0
  %318 = vmatprep.subr.bf16.mxu0 0
  %319 = vmatpush1.bf16.msra.mxu0 0
  %320 = vmatprep.subr.bf16.mxu0 0
  %321 = vmatpush1.bf16.msra.mxu0 0
  %322 = vmatprep.subr.bf16.mxu0 0
  %323 = vmatpush1.bf16.msra.mxu0 0
  %324 = vmatprep.subr.bf16.mxu0 0
  %325 = vmatpush1.bf16.msra.mxu0 0
  %326 = vmatprep.subr.bf16.mxu0 0
  %327 = vmatpush1.bf16.msra.mxu0 0
  %328 = vmatprep.subr.bf16.mxu0 0
  %329 = vmatpush1.bf16.msra.mxu0 0
  %330 = vmatprep.subr.bf16.mxu0 0
  %331 = vmatpush1.bf16.msra.mxu0 0
  %332 = vmatprep.subr.bf16.mxu0 0
  %333 = vmatpush1.bf16.msra.mxu0 0
  %334 = vmatprep.subr.bf16.mxu0 0
  %335 = vmatpush1.bf16.msra.mxu0 0
  %336 = vmatprep.subr.bf16.mxu0 0
  %337 = vmatpush1.bf16.msra.mxu0 0
  %338 = vmatprep.subr.bf16.mxu0 0
  %339 = vmatpush1.bf16.msra.mxu0 0
  %340 = vmatprep.subr.bf16.mxu0 0
  %341 = vmatpush1.bf16.msra.mxu0 0
  %342 = vmatprep.mubr.bf16.mxu0 0
  %343 = vmatmul.mubr.bf16.gmra.mrb[0].mxu0 %v257
  %v344 = vpop.f32.mrb[0].mxu0
  %v345 = vadd.f32 0.0, %v344
  %v346 = vpop.f32.mrb[0].mxu0
  %v347 = vpop.f32.mrb[0].mxu0
  %v348 = vpop.f32.mrb[0].mxu0
  %349 = vdwg.mxu0
  %v350 = vld [vmem:[%s5] sm:$0x7]
  %v352 = vlaneseq
  %v353 = vshrl.u32 %v352, 7
  %v354 = vsub.s32 0, %v353
  %v355 = vrot.slane %v350, %v354
  %v356 = vlaneseq
  %v357 = vshrl.u32 %v356, 7
  %v358 = vsub.s32 1, %v357
  %v359 = vrot.slane %v350, %v358
  %v360 = vlaneseq
  %v361 = vshrl.u32 %v360, 7
  %v362 = vsub.s32 2, %v361
  %v363 = vrot.slane %v350, %v362
  %v367 = vmul.f32 %v304, %v355
  %v368 = vmul.f32 %v306, %v359
  %v369 = vmul.f32 %v345, %v363
  %v370 = vadd.f32 %v367, 0.0
  %v371 = vadd.f32 %v368, 0.0
  %v372 = vadd.f32 %v369, 0.0
  %s373 = scalar_lea.vmem %s4, 4
  %v374 = vld [vmem:[%s373] sm:$0xf]
  %v376 = vsel %vm255, %v374, 0
  %378 = vmatprep.subr.bf16.mxu0 %v264
  %379 = vmatpush1.bf16.msra.mxu0 %v261
  %380 = vmatprep.subr.bf16.mxu0 0
  %381 = vmatpush1.bf16.msra.mxu0 0
  %382 = vmatprep.subr.bf16.mxu0 0
  %383 = vmatpush1.bf16.msra.mxu0 0
  %384 = vmatprep.subr.bf16.mxu0 0
  %385 = vmatpush1.bf16.msra.mxu0 0
  %386 = vmatprep.subr.bf16.mxu0 0
  %387 = vmatpush1.bf16.msra.mxu0 0
  %388 = vmatprep.subr.bf16.mxu0 0
  %389 = vmatpush1.bf16.msra.mxu0 0
  %390 = vmatprep.subr.bf16.mxu0 0
  %391 = vmatpush1.bf16.msra.mxu0 0
  %392 = vmatprep.subr.bf16.mxu0 0
  %393 = vmatpush1.bf16.msra.mxu0 0
  %394 = vmatprep.subr.bf16.mxu0 0
  %395 = vmatpush1.bf16.msra.mxu0 0
  %396 = vmatprep.subr.bf16.mxu0 0
  %397 = vmatpush1.bf16.msra.mxu0 0
  %398 = vmatprep.subr.bf16.mxu0 0
  %399 = vmatpush1.bf16.msra.mxu0 0
  %400 = vmatprep.subr.bf16.mxu0 0
  %401 = vmatpush1.bf16.msra.mxu0 0
  %402 = vmatprep.subr.bf16.mxu0 0
  %403 = vmatpush1.bf16.msra.mxu0 0
  %404 = vmatprep.subr.bf16.mxu0 0
  %405 = vmatpush1.bf16.msra.mxu0 0
  %406 = vmatprep.subr.bf16.mxu0 0
  %407 = vmatpush1.bf16.msra.mxu0 0
  %408 = vmatprep.subr.bf16.mxu0 0
  %409 = vmatpush1.bf16.msra.mxu0 0
  %410 = vmatprep.mubr.bf16.mxu0 0
  %411 = vmatmul.mubr.bf16.gmra.mrb[0].mxu0 %v376
  %v412 = vpop.f32.mrb[0].mxu0
  %v413 = vadd.f32 0.0, %v412
  %v414 = vpop.f32.mrb[0].mxu0
  %v415 = vadd.f32 0.0, %v414
  %v416 = vpop.f32.mrb[0].mxu0
  %v417 = vpop.f32.mrb[0].mxu0
  %418 = vdwg.mxu0
  %419 = vmatprep.subr.bf16.mxu0 0
  %420 = vmatpush1.bf16.msra.mxu0 %v267
  %421 = vmatprep.subr.bf16.mxu0 0
  %422 = vmatpush1.bf16.msra.mxu0 0
  %423 = vmatprep.subr.bf16.mxu0 0
  %424 = vmatpush1.bf16.msra.mxu0 0
  %425 = vmatprep.subr.bf16.mxu0 0
  %426 = vmatpush1.bf16.msra.mxu0 0
  %427 = vmatprep.subr.bf16.mxu0 0
  %428 = vmatpush1.bf16.msra.mxu0 0
  %429 = vmatprep.subr.bf16.mxu0 0
  %430 = vmatpush1.bf16.msra.mxu0 0
  %431 = vmatprep.subr.bf16.mxu0 0
  %432 = vmatpush1.bf16.msra.mxu0 0
  %433 = vmatprep.subr.bf16.mxu0 0
  %434 = vmatpush1.bf16.msra.mxu0 0
  %435 = vmatprep.subr.bf16.mxu0 0
  %436 = vmatpush1.bf16.msra.mxu0 0
  %437 = vmatprep.subr.bf16.mxu0 0
  %438 = vmatpush1.bf16.msra.mxu0 0
  %439 = vmatprep.subr.bf16.mxu0 0
  %440 = vmatpush1.bf16.msra.mxu0 0
  %441 = vmatprep.subr.bf16.mxu0 0
  %442 = vmatpush1.bf16.msra.mxu0 0
  %443 = vmatprep.subr.bf16.mxu0 0
  %444 = vmatpush1.bf16.msra.mxu0 0
  %445 = vmatprep.subr.bf16.mxu0 0
  %446 = vmatpush1.bf16.msra.mxu0 0
  %447 = vmatprep.subr.bf16.mxu0 0
  %448 = vmatpush1.bf16.msra.mxu0 0
  %449 = vmatprep.subr.bf16.mxu0 0
  %450 = vmatpush1.bf16.msra.mxu0 0
  %451 = vmatprep.mubr.bf16.mxu0 0
  %452 = vmatmul.mubr.bf16.gmra.mrb[0].mxu0 %v376
  %v453 = vpop.f32.mrb[0].mxu0
  %v454 = vadd.f32 0.0, %v453
  %v455 = vpop.f32.mrb[0].mxu0
  %v456 = vpop.f32.mrb[0].mxu0
  %v457 = vpop.f32.mrb[0].mxu0
  %458 = vdwg.mxu0
  %s459 = scalar_lea.vmem %s5, 3
  %v460 = vld [vmem:[%s459] sm:$0x7]
  %v462 = vlaneseq
  %v463 = vshrl.u32 %v462, 7
  %v464 = vsub.s32 0, %v463
  %v465 = vrot.slane %v460, %v464
  %v466 = vlaneseq
  %v467 = vshrl.u32 %v466, 7
  %v468 = vsub.s32 1, %v467
  %v469 = vrot.slane %v460, %v468
  %v470 = vlaneseq
  %v471 = vshrl.u32 %v470, 7
  %v472 = vsub.s32 2, %v471
  %v473 = vrot.slane %v460, %v472
  %v477 = vmul.f32 %v413, %v465
  %v478 = vmul.f32 %v415, %v469
  %v479 = vmul.f32 %v454, %v473
  %v480 = vadd.f32 %v370, %v477
  %v481 = vadd.f32 %v371, %v478
  %v482 = vadd.f32 %v372, %v479
  %s483 = scalar_lea.vmem %s4, 8
  %v484 = vld [vmem:[%s483] sm:$0xf]
  %v486 = vsel %vm255, %v484, 0
  %488 = vmatprep.subr.bf16.mxu0 %v264
  %489 = vmatpush1.bf16.msra.mxu0 %v261
  %490 = vmatprep.subr.bf16.mxu0 0
  %491 = vmatpush1.bf16.msra.mxu0 0
  %492 = vmatprep.subr.bf16.mxu0 0
  %493 = vmatpush1.bf16.msra.mxu0 0
  %494 = vmatprep.subr.bf16.mxu0 0
  %495 = vmatpush1.bf16.msra.mxu0 0
  %496 = vmatprep.subr.bf16.mxu0 0
  %497 = vmatpush1.bf16.msra.mxu0 0
  %498 = vmatprep.subr.bf16.mxu0 0
  %499 = vmatpush1.bf16.msra.mxu0 0
  %500 = vmatprep.subr.bf16.mxu0 0
  %501 = vmatpush1.bf16.msra.mxu0 0
  %502 = vmatprep.subr.bf16.mxu0 0
  %503 = vmatpush1.bf16.msra.mxu0 0
  %504 = vmatprep.subr.bf16.mxu0 0
  %505 = vmatpush1.bf16.msra.mxu0 0
  %506 = vmatprep.subr.bf16.mxu0 0
  %507 = vmatpush1.bf16.msra.mxu0 0
  %508 = vmatprep.subr.bf16.mxu0 0
  %509 = vmatpush1.bf16.msra.mxu0 0
  %510 = vmatprep.subr.bf16.mxu0 0
  %511 = vmatpush1.bf16.msra.mxu0 0
  %512 = vmatprep.subr.bf16.mxu0 0
  %513 = vmatpush1.bf16.msra.mxu0 0
  %514 = vmatprep.subr.bf16.mxu0 0
  %515 = vmatpush1.bf16.msra.mxu0 0
  %516 = vmatprep.subr.bf16.mxu0 0
  %517 = vmatpush1.bf16.msra.mxu0 0
  %518 = vmatprep.subr.bf16.mxu0 0
  %519 = vmatpush1.bf16.msra.mxu0 0
  %520 = vmatprep.mubr.bf16.mxu0 0
  %521 = vmatmul.mubr.bf16.gmra.mrb[0].mxu0 %v486
  %v522 = vpop.f32.mrb[0].mxu0
  %v523 = vadd.f32 0.0, %v522
  %v524 = vpop.f32.mrb[0].mxu0
  %v525 = vadd.f32 0.0, %v524
  %v526 = vpop.f32.mrb[0].mxu0
  %v527 = vpop.f32.mrb[0].mxu0
  %528 = vdwg.mxu0
  %529 = vmatprep.subr.bf16.mxu0 0
  %530 = vmatpush1.bf16.msra.mxu0 %v267
  %531 = vmatprep.subr.bf16.mxu0 0
  %532 = vmatpush1.bf16.msra.mxu0 0
  %533 = vmatprep.subr.bf16.mxu0 0
  %534 = vmatpush1.bf16.msra.mxu0 0
  %535 = vmatprep.subr.bf16.mxu0 0
  %536 = vmatpush1.bf16.msra.mxu0 0
  %537 = vmatprep.subr.bf16.mxu0 0
  %538 = vmatpush1.bf16.msra.mxu0 0
  %539 = vmatprep.subr.bf16.mxu0 0
  %540 = vmatpush1.bf16.msra.mxu0 0
  %541 = vmatprep.subr.bf16.mxu0 0
  %542 = vmatpush1.bf16.msra.mxu0 0
  %543 = vmatprep.subr.bf16.mxu0 0
  %544 = vmatpush1.bf16.msra.mxu0 0
  %545 = vmatprep.subr.bf16.mxu0 0
  %546 = vmatpush1.bf16.msra.mxu0 0
  %547 = vmatprep.subr.bf16.mxu0 0
  %548 = vmatpush1.bf16.msra.mxu0 0
  %549 = vmatprep.subr.bf16.mxu0 0
  %550 = vmatpush1.bf16.msra.mxu0 0
  %551 = vmatprep.subr.bf16.mxu0 0
  %552 = vmatpush1.bf16.msra.mxu0 0
  %553 = vmatprep.subr.bf16.mxu0 0
  %554 = vmatpush1.bf16.msra.mxu0 0
  %555 = vmatprep.subr.bf16.mxu0 0
  %556 = vmatpush1.bf16.msra.mxu0 0
  %557 = vmatprep.subr.bf16.mxu0 0
  %558 = vmatpush1.bf16.msra.mxu0 0
  %559 = vmatprep.subr.bf16.mxu0 0
  %560 = vmatpush1.bf16.msra.mxu0 0
  %561 = vmatprep.mubr.bf16.mxu0 0
  %562 = vmatmul.mubr.bf16.gmra.mrb[0].mxu0 %v486
  %v563 = vpop.f32.mrb[0].mxu0
  %v564 = vadd.f32 0.0, %v563
  %v565 = vpop.f32.mrb[0].mxu0
  %v566 = vpop.f32.mrb[0].mxu0
  %v567 = vpop.f32.mrb[0].mxu0
  %568 = vdwg.mxu0
  %s569 = scalar_lea.vmem %s5, 6
  %v570 = vld [vmem:[%s569] sm:$0x7]
  %v572 = vlaneseq
  %v573 = vshrl.u32 %v572, 7
  %v574 = vsub.s32 0, %v573
  %v575 = vrot.slane %v570, %v574
  %v576 = vlaneseq
  %v577 = vshrl.u32 %v576, 7
  %v578 = vsub.s32 1, %v577
  %v579 = vrot.slane %v570, %v578
  %v580 = vlaneseq
  %v581 = vshrl.u32 %v580, 7
  %v582 = vsub.s32 2, %v581
  %v583 = vrot.slane %v570, %v582
  %v587 = vmul.f32 %v523, %v575
  %v588 = vmul.f32 %v525, %v579
  %v589 = vmul.f32 %v564, %v583
  %v590 = vadd.f32 %v480, %v587
  %v591 = vadd.f32 %v481, %v588
  %v592 = vadd.f32 %v482, %v589
  %v593 = vld [vmem:[%s6] sm:$0x7]
  %v595 = vlaneseq
  %v596 = vshrl.u32 %v595, 7
  %v597 = vsub.s32 0, %v596
  %v598 = vrot.slane %v593, %v597
  %v599 = vlaneseq
  %v600 = vshrl.u32 %v599, 7
  %v601 = vsub.s32 1, %v600
  %v602 = vrot.slane %v593, %v601
  %v603 = vlaneseq
  %v604 = vshrl.u32 %v603, 7
  %v605 = vsub.s32 2, %v604
  %v606 = vrot.slane %v593, %v605
  %v610 = vmul.f32 %v590, %v598
  %v611 = vmul.f32 %v591, %v602
  %v612 = vmul.f32 %v592, %v606
  %v613 = vld [vmem:[%s7] sm:$0x7]
  %v615 = vlaneseq
  %v616 = vshrl.u32 %v615, 7
  %v617 = vsub.s32 0, %v616
  %v618 = vrot.slane %v613, %v617
  %v619 = vlaneseq
  %v620 = vshrl.u32 %v619, 7
  %v621 = vsub.s32 1, %v620
  %v622 = vrot.slane %v613, %v621
  %v623 = vlaneseq
  %v624 = vshrl.u32 %v623, 7
  %v625 = vsub.s32 2, %v624
  %v626 = vrot.slane %v613, %v625
  %v630 = vadd.f32 %v610, %v618
  %v631 = vadd.f32 %v611, %v622
  %v632 = vadd.f32 %v612, %v626
  %v633 = vmax.f32 %v630, 0.0
  %v634 = vmax.f32 %v631, 0.0
  %v635 = vmax.f32 %v632, 0.0
  %v636 = vmin.f32 %v633, 6.0
  %v637 = vmin.f32 %v634, 6.0
  %v638 = vmin.f32 %v635, 6.0
  %v639 = vpack.c.bf16 %v636, %v636
  %v640 = vpack.c.bf16 %v637, %v637
  %v641 = vpack.c.bf16 %v638, %v638
  %v642 = vld [vmem:[%s8] sm:$0xf]
  %v643 = vld [vmem:[%s8 + $0x4] sm:$0xf]
  %v644 = vld [vmem:[%s8 + $0x8] sm:$0xf]
  %v645 = vld [vmem:[%s8 + $0xc] sm:$0xf]
  %v646 = vld [vmem:[%s8 + $0x10] sm:$0xf]
  %v647 = vld [vmem:[%s8 + $0x14] sm:$0xf]
  %v648 = vld [vmem:[%s8 + $0x18] sm:$0xf]
  %v649 = vld [vmem:[%s8 + $0x1c] sm:$0xf]
  %v650 = vld [vmem:[%s8 + $0x20] sm:$0xf]
  %v651 = vld [vmem:[%s8 + $0x24] sm:$0xf]
  %v652 = vld [vmem:[%s8 + $0x28] sm:$0xf]
  %v653 = vld [vmem:[%s8 + $0x2c] sm:$0xf]
  %v654 = vld [vmem:[%s8 + $0x30] sm:$0xf]
  %v655 = vld [vmem:[%s8 + $0x34] sm:$0xf]
  %v656 = vld [vmem:[%s8 + $0x38] sm:$0xf]
  %v657 = vld [vmem:[%s8 + $0x3c] sm:$0xf]
  %v658 = vld [vmem:[%s8 + $0x40] sm:$0xf]
  %v659 = vld [vmem:[%s8 + $0x44] sm:$0xf]
  %v660 = vld [vmem:[%s8 + $0x48] sm:$0xf]
  %v661 = vld [vmem:[%s8 + $0x4c] sm:$0xf]
  %v662 = vld [vmem:[%s8 + $0x50] sm:$0xf]
  %v663 = vld [vmem:[%s8 + $0x54] sm:$0xf]
  %v664 = vld [vmem:[%s8 + $0x58] sm:$0xf]
  %v665 = vld [vmem:[%s8 + $0x5c] sm:$0xf]
  %v666 = vld [vmem:[%s8 + $0x60] sm:$0xf]
  %v667 = vld [vmem:[%s8 + $0x64] sm:$0xf]
  %v668 = vld [vmem:[%s8 + $0x68] sm:$0xf]
  %v669 = vld [vmem:[%s8 + $0x6c] sm:$0xf]
  %v670 = vld [vmem:[%s8 + $0x70] sm:$0xf]
  %v671 = vld [vmem:[%s8 + $0x74] sm:$0xf]
  %v672 = vld [vmem:[%s8 + $0x78] sm:$0xf]
  %v673 = vld [vmem:[%s8 + $0x7c] sm:$0xf]
  %v674 = vld [vmem:[%s8 + $0x80] sm:$0xf]
  %v675 = vld [vmem:[%s8 + $0x84] sm:$0xf]
  %v676 = vld [vmem:[%s8 + $0x88] sm:$0xf]
  %v677 = vld [vmem:[%s8 + $0x8c] sm:$0xf]
  %v678 = vld [vmem:[%s8 + $0x90] sm:$0xf]
  %v679 = vld [vmem:[%s8 + $0x94] sm:$0xf]
  %v680 = vld [vmem:[%s8 + $0x98] sm:$0xf]
  %v681 = vld [vmem:[%s8 + $0x9c] sm:$0xf]
  %v682 = vld [vmem:[%s8 + $0xa0] sm:$0xf]
  %v683 = vld [vmem:[%s8 + $0xa4] sm:$0xf]
  %v684 = vld [vmem:[%s8 + $0xa8] sm:$0xf]
  %v685 = vld [vmem:[%s8 + $0xac] sm:$0xf]
  %v686 = vld [vmem:[%s8 + $0xb0] sm:$0xf]
  %v687 = vld [vmem:[%s8 + $0xb4] sm:$0xf]
  %v688 = vld [vmem:[%s8 + $0xb8] sm:$0xf]
  %v689 = vld [vmem:[%s8 + $0xbc] sm:$0xf]
  %v738 = vunpack.c.l.b16 %v642
  %v739 = vunpack.c.l.b16 %v643
  %v740 = vunpack.c.l.b16 %v644
  %v741 = vunpack.c.l.b16 %v645
  %v742 = vunpack.c.l.b16 %v646
  %v743 = vunpack.c.l.b16 %v647
  %v744 = vunpack.c.l.b16 %v648
  %v745 = vunpack.c.l.b16 %v649
  %v746 = vunpack.c.l.b16 %v650
  %v747 = vunpack.c.l.b16 %v651
  %v748 = vunpack.c.l.b16 %v652
  %v749 = vunpack.c.l.b16 %v653
  %v750 = vunpack.c.l.b16 %v654
  %v751 = vunpack.c.l.b16 %v655
  %v752 = vunpack.c.l.b16 %v656
  %v753 = vunpack.c.l.b16 %v657
  %v754 = vunpack.c.l.b16 %v658
  %v755 = vunpack.c.l.b16 %v659
  %v756 = vunpack.c.l.b16 %v660
  %v757 = vunpack.c.l.b16 %v661
  %v758 = vunpack.c.l.b16 %v662
  %v759 = vunpack.c.l.b16 %v663
  %v760 = vunpack.c.l.b16 %v664
  %v761 = vunpack.c.l.b16 %v665
  %v762 = vunpack.c.l.b16 %v666
  %v763 = vunpack.c.l.b16 %v667
  %v764 = vunpack.c.l.b16 %v668
  %v765 = vunpack.c.l.b16 %v669
  %v766 = vunpack.c.l.b16 %v670
  %v767 = vunpack.c.l.b16 %v671
  %v768 = vunpack.c.l.b16 %v672
  %v769 = vunpack.c.l.b16 %v673
  %v770 = vunpack.c.l.b16 %v674
  %v771 = vunpack.c.l.b16 %v675
  %v772 = vunpack.c.l.b16 %v676
  %v773 = vunpack.c.l.b16 %v677
  %v774 = vunpack.c.l.b16 %v678
  %v775 = vunpack.c.l.b16 %v679
  %v776 = vunpack.c.l.b16 %v680
  %v777 = vunpack.c.l.b16 %v681
  %v778 = vunpack.c.l.b16 %v682
  %v779 = vunpack.c.l.b16 %v683
  %v780 = vunpack.c.l.b16 %v684
  %v781 = vunpack.c.l.b16 %v685
  %v782 = vunpack.c.l.b16 %v686
  %v783 = vunpack.c.l.b16 %v687
  %v784 = vunpack.c.l.b16 %v688
  %v785 = vunpack.c.l.b16 %v689
  %v786 = vpack.c.b16 %v739, %v738
  %v787 = vpack.c.b16 %v741, %v740
  %v788 = vpack.c.b16 %v743, %v742
  %v789 = vpack.c.b16 %v745, %v744
  %v790 = vpack.c.b16 %v747, %v746
  %v791 = vpack.c.b16 %v749, %v748
  %v792 = vpack.c.b16 %v751, %v750
  %v793 = vpack.c.b16 %v753, %v752
  %v794 = vpack.c.b16 %v755, %v754
  %v795 = vpack.c.b16 %v757, %v756
  %v796 = vpack.c.b16 %v759, %v758
  %v797 = vpack.c.b16 %v761, %v760
  %v798 = vpack.c.b16 %v763, %v762
  %v799 = vpack.c.b16 %v765, %v764
  %v800 = vpack.c.b16 %v767, %v766
  %v801 = vpack.c.b16 %v769, %v768
  %v802 = vpack.c.b16 %v771, %v770
  %v803 = vpack.c.b16 %v773, %v772
  %v804 = vpack.c.b16 %v775, %v774
  %v805 = vpack.c.b16 %v777, %v776
  %v806 = vpack.c.b16 %v779, %v778
  %v807 = vpack.c.b16 %v781, %v780
  %v808 = vpack.c.b16 %v783, %v782
  %v809 = vpack.c.b16 %v785, %v784
  %834 = vmatprep.subr.bf16.mxu0 0
  %835 = vmatpush1.bf16.msra.mxu0 %v786
  %836 = vmatprep.subr.bf16.mxu0 0
  %837 = vmatpush1.bf16.msra.mxu0 %v787
  %838 = vmatprep.subr.bf16.mxu0 0
  %839 = vmatpush1.bf16.msra.mxu0 %v788
  %840 = vmatprep.subr.bf16.mxu0 0
  %841 = vmatpush1.bf16.msra.mxu0 %v789
  %842 = vmatprep.subr.bf16.mxu0 0
  %843 = vmatpush1.bf16.msra.mxu0 %v790
  %844 = vmatprep.subr.bf16.mxu0 0
  %845 = vmatpush1.bf16.msra.mxu0 %v791
  %846 = vmatprep.subr.bf16.mxu0 0
  %847 = vmatpush1.bf16.msra.mxu0 %v792
  %848 = vmatprep.subr.bf16.mxu0 0
  %849 = vmatpush1.bf16.msra.mxu0 %v793
  %850 = vmatprep.subr.bf16.mxu0 0
  %851 = vmatpush1.bf16.msra.mxu0 %v794
  %852 = vmatprep.subr.bf16.mxu0 0
  %853 = vmatpush1.bf16.msra.mxu0 %v795
  %854 = vmatprep.subr.bf16.mxu0 0
  %855 = vmatpush1.bf16.msra.mxu0 %v796
  %856 = vmatprep.subr.bf16.mxu0 0
  %857 = vmatpush1.bf16.msra.mxu0 %v797
  %858 = vmatprep.subr.bf16.mxu0 0
  %859 = vmatpush1.bf16.msra.mxu0 %v798
  %860 = vmatprep.subr.bf16.mxu0 0
  %861 = vmatpush1.bf16.msra.mxu0 %v799
  %862 = vmatprep.subr.bf16.mxu0 0
  %863 = vmatpush1.bf16.msra.mxu0 %v800
  %864 = vmatprep.subr.bf16.mxu0 0
  %865 = vmatpush1.bf16.msra.mxu0 %v801
  %866 = vmatprep.mubr.bf16.mxu0 %v640
  %867 = vmatmul.mubr.bf16.gmra.mrb[0].mxu0 %v639
  %v868 = vpop.f32.mrb[0].mxu0
  %v869 = vadd.f32 0.0, %v868
  %v870 = vpop.f32.mrb[0].mxu0
  %v871 = vpop.f32.mrb[0].mxu0
  %v872 = vpop.f32.mrb[0].mxu0
  %873 = vdwg.mxu0
  %874 = vmatprep.subr.bf16.mxu0 0
  %875 = vmatpush1.bf16.msra.mxu0 %v802
  %876 = vmatprep.subr.bf16.mxu0 0
  %877 = vmatpush1.bf16.msra.mxu0 %v803
  %878 = vmatprep.subr.bf16.mxu0 0
  %879 = vmatpush1.bf16.msra.mxu0 %v804
  %880 = vmatprep.subr.bf16.mxu0 0
  %881 = vmatpush1.bf16.msra.mxu0 %v805
  %882 = vmatprep.subr.bf16.mxu0 0
  %883 = vmatpush1.bf16.msra.mxu0 %v806
  %884 = vmatprep.subr.bf16.mxu0 0
  %885 = vmatpush1.bf16.msra.mxu0 %v807
  %886 = vmatprep.subr.bf16.mxu0 0
  %887 = vmatpush1.bf16.msra.mxu0 %v808
  %888 = vmatprep.subr.bf16.mxu0 0
  %889 = vmatpush1.bf16.msra.mxu0 %v809
  %890 = vmatprep.subr.bf16.mxu0 0
  %891 = vmatpush1.bf16.msra.mxu0 0
  %892 = vmatprep.subr.bf16.mxu0 0
  %893 = vmatpush1.bf16.msra.mxu0 0
  %894 = vmatprep.subr.bf16.mxu0 0
  %895 = vmatpush1.bf16.msra.mxu0 0
  %896 = vmatprep.subr.bf16.mxu0 0
  %897 = vmatpush1.bf16.msra.mxu0 0
  %898 = vmatprep.subr.bf16.mxu0 0
  %899 = vmatpush1.bf16.msra.mxu0 0
  %900 = vmatprep.subr.bf16.mxu0 0
  %901 = vmatpush1.bf16.msra.mxu0 0
  %902 = vmatprep.subr.bf16.mxu0 0
  %903 = vmatpush1.bf16.msra.mxu0 0
  %904 = vmatprep.subr.bf16.mxu0 0
  %905 = vmatpush1.bf16.msra.mxu0 0
  %906 = vmatprep.mubr.bf16.mxu0 0
  %907 = vmatmul.mubr.bf16.gmra.mrb[0].mxu0 %v641
  %v908 = vpop.f32.mrb[0].mxu0
  %v909 = vadd.f32 %v869, %v908
  %v910 = vpop.f32.mrb[0].mxu0
  %v911 = vpop.f32.mrb[0].mxu0
  %v912 = vpop.f32.mrb[0].mxu0
  %913 = vdwg.mxu0
  %v914 = vld [vmem:[%s9] sm:$0x1]
  %v916 = vlaneseq
  %v917 = vshrl.u32 %v916, 7
  %v918 = vsub.s32 0, %v917
  %v919 = vrot.slane %v914, %v918
  %v921 = vmul.f32 %v909, %v919
  %v922 = vld [vmem:[%s10] sm:$0x1]
  %v924 = vlaneseq
  %v925 = vshrl.u32 %v924, 7
  %v926 = vsub.s32 0, %v925
  %v927 = vrot.slane %v922, %v926
  %v929 = vadd.f32 %v921, %v927
  %v930 = vunpack.c.l.bf16 %v39
  %v931 = vadd.f32 %v929, %v930
  %v932 = vpack.c.bf16 %v931, %v931
  %vm933 = vcmask 519168
  %934 = vst.msk [vmem:[%s11] sm:$0xf] %vm933, %v932
  // Predicated region
  $region46: #{_lambda_.12} parent=0 // pred_check
    _
  $region47: #{_lambda_.12} parent=0 // pred_check_branch
    %936 = sbr.rel (0) target = $region49
  $region48: #{_lambda_.12} parent=0 // pred_region
    _
  $region49: #{_lambda_.12} parent=0 // pred_fallthru
    _
  // Predicated region
  $region50: #{_lambda_.12} parent=0 // pred_check
    _
  $region51: #{_lambda_.12} parent=0 // pred_check_branch
    %938 = sbr.rel (0) target = $region53
  $region52: #{_lambda_.12} parent=0 // pred_region
    _
  $region53: #{_lambda_.12} parent=0 // pred_fallthru
    _

// kernel: _lambda_.13
$region0: #{_lambda_.13}
  #allocation0 [shape = 'u32[]', space=smem, size = 0x4, offset = 0x4, fixed_abs, tag = 'smem constant byte address 0x4 - core index']
  #allocation1 [shape = 'u32[144,128]{1,0:T(1,128)}', space=vmem, size = 0x12000, scoped, tag = 'internal scratch']
  %s0 = inlined_call_operand.vmem [shape: bf16[8,64], index: 0, kind: input, shape index: {}]
  %s1 = inlined_call_operand.vmem [shape: bf16[64,384], index: 1, kind: input, shape index: {}]
  %s2 = inlined_call_operand.vmem [shape: f32[1,384], index: 2, kind: input, shape index: {}, may-alias: {2,6}]
  %s3 = inlined_call_operand.vmem [shape: f32[1,384], index: 3, kind: input, shape index: {}, may-alias: {3,7}]
  %s4 = inlined_call_operand.vmem [shape: bf16[3,8,8], index: 4, kind: input, shape index: {}]
  %s5 = inlined_call_operand.vmem [shape: f32[3,1,384], index: 5, kind: input, shape index: {}]
  %s6 = inlined_call_operand.vmem [shape: f32[1,384], index: 6, kind: input, shape index: {}, may-alias: {2,6}]
  %s7 = inlined_call_operand.vmem [shape: f32[1,384], index: 7, kind: input, shape index: {}, may-alias: {3,7}]
  %s8 = inlined_call_operand.vmem [shape: bf16[384,128], index: 8, kind: input, shape index: {}]
  %s9 = inlined_call_operand.vmem [shape: f32[1,128], index: 9, kind: input, shape index: {}]
  %s10 = inlined_call_operand.vmem [shape: f32[1,128], index: 10, kind: input, shape index: {}]
  %s11 = inlined_call_operand.vmem [shape: bf16[8,128], index: 11, kind: output, shape index: {}]
  %s12 = sld [smem:[#allocation0]]
  $region54: #{_lambda_.13} parent=0
    _
  %s14 = ssub.s32 1, %s12
  %s15 = scalar_select 0, %s14, %s12
  // Predicated region
  $region2: #{_lambda_.13} parent=0 // pred_check
    _
  $region3: #{_lambda_.13} parent=0 // pred_check_branch
    %17 = sbr.rel (0) target = $region5
  $region4: #{_lambda_.13} parent=0 // pred_region
    _
  $region5: #{_lambda_.13} parent=0 // pred_fallthru
    _
  // Predicated region
  $region6: #{_lambda_.13} parent=0 // pred_check
    _
  $region7: #{_lambda_.13} parent=0 // pred_check_branch
    %19 = sbr.rel (0) target = $region9
  $region8: #{_lambda_.13} parent=0 // pred_region
    _
  $region9: #{_lambda_.13} parent=0 // pred_fallthru
    _
  // Predicated region
  $region10: #{_lambda_.13} parent=0 // pred_check
    _
  $region11: #{_lambda_.13} parent=0 // pred_check_branch
    %21 = sbr.rel (0) target = $region13
  $region12: #{_lambda_.13} parent=0 // pred_region
    _
  $region13: #{_lambda_.13} parent=0 // pred_fallthru
    _
  // Predicated region
  $region14: #{_lambda_.13} parent=0 // pred_check
    _
  $region15: #{_lambda_.13} parent=0 // pred_check_branch
    %23 = sbr.rel (0) target = $region17
  $region16: #{_lambda_.13} parent=0 // pred_region
    _
  $region17: #{_lambda_.13} parent=0 // pred_fallthru
    _
  // Predicated region
  $region18: #{_lambda_.13} parent=0 // pred_check
    _
  $region19: #{_lambda_.13} parent=0 // pred_check_branch
    %25 = sbr.rel (0) target = $region21
  $region20: #{_lambda_.13} parent=0 // pred_region
    _
  $region21: #{_lambda_.13} parent=0 // pred_fallthru
    _
  // Predicated region
  $region22: #{_lambda_.13} parent=0 // pred_check
    _
  $region23: #{_lambda_.13} parent=0 // pred_check_branch
    %27 = sbr.rel (0) target = $region25
  $region24: #{_lambda_.13} parent=0 // pred_region
    _
  $region25: #{_lambda_.13} parent=0 // pred_fallthru
    _
  // Predicated region
  $region26: #{_lambda_.13} parent=0 // pred_check
    _
  $region27: #{_lambda_.13} parent=0 // pred_check_branch
    %29 = sbr.rel (0) target = $region29
  $region28: #{_lambda_.13} parent=0 // pred_region
    _
  $region29: #{_lambda_.13} parent=0 // pred_fallthru
    _
  // Predicated region
  $region30: #{_lambda_.13} parent=0 // pred_check
    _
  $region31: #{_lambda_.13} parent=0 // pred_check_branch
    %31 = sbr.rel (0) target = $region33
  $region32: #{_lambda_.13} parent=0 // pred_region
    _
  $region33: #{_lambda_.13} parent=0 // pred_fallthru
    _
  // Predicated region
  $region34: #{_lambda_.13} parent=0 // pred_check
    _
  $region35: #{_lambda_.13} parent=0 // pred_check_branch
    %33 = sbr.rel (0) target = $region37
  $region36: #{_lambda_.13} parent=0 // pred_region
    _
  $region37: #{_lambda_.13} parent=0 // pred_fallthru
    _
  // Predicated region
  $region38: #{_lambda_.13} parent=0 // pred_check
    _
  $region39: #{_lambda_.13} parent=0 // pred_check_branch
    %35 = sbr.rel (0) target = $region41
  $region40: #{_lambda_.13} parent=0 // pred_region
    _
  $region41: #{_lambda_.13} parent=0 // pred_fallthru
    _
  // Predicated region
  $region42: #{_lambda_.13} parent=0 // pred_check
    _
  $region43: #{_lambda_.13} parent=0 // pred_check_branch
    %37 = sbr.rel (0) target = $region45
  $region44: #{_lambda_.13} parent=0 // pred_region
    _
  $region45: #{_lambda_.13} parent=0 // pred_fallthru
    _
  %v39 = vld [vmem:[%s0] sm:$0xf]
  %v40 = vld [vmem:[%s1] sm:$0xff]
  %v41 = vld [vmem:[%s1 + $0x8] sm:$0xf]
  %v42 = vld [vmem:[%s1 + $0xc] sm:$0xff]
  %v43 = vld [vmem:[%s1 + $0x14] sm:$0xf]
  %v44 = vld [vmem:[%s1 + $0x18] sm:$0xff]
  %v45 = vld [vmem:[%s1 + $0x20] sm:$0xf]
  %v46 = vld [vmem:[%s1 + $0x24] sm:$0xff]
  %v47 = vld [vmem:[%s1 + $0x2c] sm:$0xf]
  %v48 = vld [vmem:[%s1 + $0x30] sm:$0xff]
  %v49 = vld [vmem:[%s1 + $0x38] sm:$0xf]
  %v50 = vld [vmem:[%s1 + $0x3c] sm:$0xff]
  %v51 = vld [vmem:[%s1 + $0x44] sm:$0xf]
  %v52 = vld [vmem:[%s1 + $0x48] sm:$0xff]
  %v53 = vld [vmem:[%s1 + $0x50] sm:$0xf]
  %v54 = vld [vmem:[%s1 + $0x54] sm:$0xff]
  %v55 = vld [vmem:[%s1 + $0x5c] sm:$0xf]
  %v72 = vunpack.c.l.b16 %v40
  %v73 = vunpack.c.h.b16 %v40
  %v74 = vunpack.c.l.b16 %v41
  %v75 = vunpack.c.l.b16 %v42
  %v76 = vunpack.c.h.b16 %v42
  %v77 = vunpack.c.l.b16 %v43
  %v78 = vunpack.c.l.b16 %v44
  %v79 = vunpack.c.h.b16 %v44
  %v80 = vunpack.c.l.b16 %v45
  %v81 = vunpack.c.l.b16 %v46
  %v82 = vunpack.c.h.b16 %v46
  %v83 = vunpack.c.l.b16 %v47
  %v84 = vunpack.c.l.b16 %v48
  %v85 = vunpack.c.h.b16 %v48
  %v86 = vunpack.c.l.b16 %v49
  %v87 = vunpack.c.l.b16 %v50
  %v88 = vunpack.c.h.b16 %v50
  %v89 = vunpack.c.l.b16 %v51
  %v90 = vunpack.c.l.b16 %v52
  %v91 = vunpack.c.h.b16 %v52
  %v92 = vunpack.c.l.b16 %v53
  %v93 = vunpack.c.l.b16 %v54
  %v94 = vunpack.c.h.b16 %v54
  %v95 = vunpack.c.l.b16 %v55
  %v96 = vpack.c.b16 %v75, %v72
  %v97 = vpack.c.b16 %v76, %v73
  %v98 = vpack.c.b16 %v77, %v74
  %v99 = vpack.c.b16 %v81, %v78
  %v100 = vpack.c.b16 %v82, %v79
  %v101 = vpack.c.b16 %v83, %v80
  %v102 = vpack.c.b16 %v87, %v84
  %v103 = vpack.c.b16 %v88, %v85
  %v104 = vpack.c.b16 %v89, %v86
  %v105 = vpack.c.b16 %v93, %v90
  %v106 = vpack.c.b16 %v94, %v91
  %v107 = vpack.c.b16 %v95, %v92
  %vm120 = vcmask 523264
  %v122 = vsel %vm120, %v39, 0
  %124 = vmatprep.subr.bf16.mxu0 %v97
  %125 = vmatpush1.bf16.msra.mxu0 %v96
  %126 = vmatprep.subr.bf16.mxu0 %v100
  %127 = vmatpush1.bf16.msra.mxu0 %v99
  %128 = vmatprep.subr.bf16.mxu0 %v103
  %129 = vmatpush1.bf16.msra.mxu0 %v102
  %130 = vmatprep.subr.bf16.mxu0 %v106
  %131 = vmatpush1.bf16.msra.mxu0 %v105
  %132 = vmatprep.subr.bf16.mxu0 0
  %133 = vmatpush1.bf16.msra.mxu0 0
  %134 = vmatprep.subr.bf16.mxu0 0
  %135 = vmatpush1.bf16.msra.mxu0 0
  %136 = vmatprep.subr.bf16.mxu0 0
  %137 = vmatpush1.bf16.msra.mxu0 0
  %138 = vmatprep.subr.bf16.mxu0 0
  %139 = vmatpush1.bf16.msra.mxu0 0
  %140 = vmatprep.subr.bf16.mxu0 0
  %141 = vmatpush1.bf16.msra.mxu0 0
  %142 = vmatprep.subr.bf16.mxu0 0
  %143 = vmatpush1.bf16.msra.mxu0 0
  %144 = vmatprep.subr.bf16.mxu0 0
  %145 = vmatpush1.bf16.msra.mxu0 0
  %146 = vmatprep.subr.bf16.mxu0 0
  %147 = vmatpush1.bf16.msra.mxu0 0
  %148 = vmatprep.subr.bf16.mxu0 0
  %149 = vmatpush1.bf16.msra.mxu0 0
  %150 = vmatprep.subr.bf16.mxu0 0
  %151 = vmatpush1.bf16.msra.mxu0 0
  %152 = vmatprep.subr.bf16.mxu0 0
  %153 = vmatpush1.bf16.msra.mxu0 0
  %154 = vmatprep.subr.bf16.mxu0 0
  %155 = vmatpush1.bf16.msra.mxu0 0
  %156 = vmatprep.mubr.bf16.mxu0 0
  %157 = vmatmul.mubr.bf16.gmra.mrb[0].mxu0 %v122
  %v158 = vpop.f32.mrb[0].mxu0
  %v159 = vadd.f32 0.0, %v158
  %v160 = vpop.f32.mrb[0].mxu0
  %v161 = vadd.f32 0.0, %v160
  %v162 = vpop.f32.mrb[0].mxu0
  %v163 = vpop.f32.mrb[0].mxu0
  %164 = vdwg.mxu0
  %165 = vmatprep.subr.bf16.mxu0 0
  %166 = vmatpush1.bf16.msra.mxu0 %v98
  %167 = vmatprep.subr.bf16.mxu0 0
  %168 = vmatpush1.bf16.msra.mxu0 %v101
  %169 = vmatprep.subr.bf16.mxu0 0
  %170 = vmatpush1.bf16.msra.mxu0 %v104
  %171 = vmatprep.subr.bf16.mxu0 0
  %172 = vmatpush1.bf16.msra.mxu0 %v107
  %173 = vmatprep.subr.bf16.mxu0 0
  %174 = vmatpush1.bf16.msra.mxu0 0
  %175 = vmatprep.subr.bf16.mxu0 0
  %176 = vmatpush1.bf16.msra.mxu0 0
  %177 = vmatprep.subr.bf16.mxu0 0
  %178 = vmatpush1.bf16.msra.mxu0 0
  %179 = vmatprep.subr.bf16.mxu0 0
  %180 = vmatpush1.bf16.msra.mxu0 0
  %181 = vmatprep.subr.bf16.mxu0 0
  %182 = vmatpush1.bf16.msra.mxu0 0
  %183 = vmatprep.subr.bf16.mxu0 0
  %184 = vmatpush1.bf16.msra.mxu0 0
  %185 = vmatprep.subr.bf16.mxu0 0
  %186 = vmatpush1.bf16.msra.mxu0 0
  %187 = vmatprep.subr.bf16.mxu0 0
  %188 = vmatpush1.bf16.msra.mxu0 0
  %189 = vmatprep.subr.bf16.mxu0 0
  %190 = vmatpush1.bf16.msra.mxu0 0
  %191 = vmatprep.subr.bf16.mxu0 0
  %192 = vmatpush1.bf16.msra.mxu0 0
  %193 = vmatprep.subr.bf16.mxu0 0
  %194 = vmatpush1.bf16.msra.mxu0 0
  %195 = vmatprep.subr.bf16.mxu0 0
  %196 = vmatpush1.bf16.msra.mxu0 0
  %197 = vmatprep.mubr.bf16.mxu0 0
  %198 = vmatmul.mubr.bf16.gmra.mrb[0].mxu0 %v122
  %v199 = vpop.f32.mrb[0].mxu0
  %v200 = vadd.f32 0.0, %v199
  %v201 = vpop.f32.mrb[0].mxu0
  %v202 = vpop.f32.mrb[0].mxu0
  %v203 = vpop.f32.mrb[0].mxu0
  %204 = vdwg.mxu0
  %v205 = vld [vmem:[%s2] sm:$0x7]
  %v207 = vlaneseq
  %v208 = vshrl.u32 %v207, 7
  %v209 = vsub.s32 0, %v208
  %v210 = vrot.slane %v205, %v209
  %v211 = vlaneseq
  %v212 = vshrl.u32 %v211, 7
  %v213 = vsub.s32 1, %v212
  %v214 = vrot.slane %v205, %v213
  %v215 = vlaneseq
  %v216 = vshrl.u32 %v215, 7
  %v217 = vsub.s32 2, %v216
  %v218 = vrot.slane %v205, %v217
  %v222 = vmul.f32 %v159, %v210
  %v223 = vmul.f32 %v161, %v214
  %v224 = vmul.f32 %v200, %v218
  %v225 = vld [vmem:[%s3] sm:$0x7]
  %v227 = vlaneseq
  %v228 = vshrl.u32 %v227, 7
  %v229 = vsub.s32 0, %v228
  %v230 = vrot.slane %v225, %v229
  %v231 = vlaneseq
  %v232 = vshrl.u32 %v231, 7
  %v233 = vsub.s32 1, %v232
  %v234 = vrot.slane %v225, %v233
  %v235 = vlaneseq
  %v236 = vshrl.u32 %v235, 7
  %v237 = vsub.s32 2, %v236
  %v238 = vrot.slane %v225, %v237
  %v242 = vadd.f32 %v222, %v230
  %v243 = vadd.f32 %v223, %v234
  %v244 = vadd.f32 %v224, %v238
  %v245 = vmax.f32 %v242, 0.0
  %v246 = vmax.f32 %v243, 0.0
  %v247 = vmax.f32 %v244, 0.0
  %v248 = vmin.f32 %v245, 6.0
  %v249 = vmin.f32 %v246, 6.0
  %v250 = vmin.f32 %v247, 6.0
  %v251 = vpack.c.bf16 %v248, %v248
  %v252 = vpack.c.bf16 %v249, %v249
  %v253 = vpack.c.bf16 %v250, %v250
  %v254 = vld [vmem:[%s4] sm:$0xf]
  %vm255 = vcmask 64512
  %v257 = vsel %vm255, %v254, 0
  %vm259 = vcmask 1043456
  %v261 = vsel %vm259, %v251, 0
  %v264 = vsel %vm259, %v252, 0
  %v267 = vsel %vm259, %v253, 0
  %269 = vmatprep.subr.bf16.mxu0 %v264
  %270 = vmatpush1.bf16.msra.mxu0 %v261
  %271 = vmatprep.subr.bf16.mxu0 0
  %272 = vmatpush1.bf16.msra.mxu0 0
  %273 = vmatprep.subr.bf16.mxu0 0
  %274 = vmatpush1.bf16.msra.mxu0 0
  %275 = vmatprep.subr.bf16.mxu0 0
  %276 = vmatpush1.bf16.msra.mxu0 0
  %277 = vmatprep.subr.bf16.mxu0 0
  %278 = vmatpush1.bf16.msra.mxu0 0
  %279 = vmatprep.subr.bf16.mxu0 0
  %280 = vmatpush1.bf16.msra.mxu0 0
  %281 = vmatprep.subr.bf16.mxu0 0
  %282 = vmatpush1.bf16.msra.mxu0 0
  %283 = vmatprep.subr.bf16.mxu0 0
  %284 = vmatpush1.bf16.msra.mxu0 0
  %285 = vmatprep.subr.bf16.mxu0 0
  %286 = vmatpush1.bf16.msra.mxu0 0
  %287 = vmatprep.subr.bf16.mxu0 0
  %288 = vmatpush1.bf16.msra.mxu0 0
  %289 = vmatprep.subr.bf16.mxu0 0
  %290 = vmatpush1.bf16.msra.mxu0 0
  %291 = vmatprep.subr.bf16.mxu0 0
  %292 = vmatpush1.bf16.msra.mxu0 0
  %293 = vmatprep.subr.bf16.mxu0 0
  %294 = vmatpush1.bf16.msra.mxu0 0
  %295 = vmatprep.subr.bf16.mxu0 0
  %296 = vmatpush1.bf16.msra.mxu0 0
  %297 = vmatprep.subr.bf16.mxu0 0
  %298 = vmatpush1.bf16.msra.mxu0 0
  %299 = vmatprep.subr.bf16.mxu0 0
  %300 = vmatpush1.bf16.msra.mxu0 0
  %301 = vmatprep.mubr.bf16.mxu0 0
  %302 = vmatmul.mubr.bf16.gmra.mrb[0].mxu0 %v257
  %v303 = vpop.f32.mrb[0].mxu0
  %v304 = vadd.f32 0.0, %v303
  %v305 = vpop.f32.mrb[0].mxu0
  %v306 = vadd.f32 0.0, %v305
  %v307 = vpop.f32.mrb[0].mxu0
  %v308 = vpop.f32.mrb[0].mxu0
  %309 = vdwg.mxu0
  %310 = vmatprep.subr.bf16.mxu0 0
  %311 = vmatpush1.bf16.msra.mxu0 %v267
  %312 = vmatprep.subr.bf16.mxu0 0
  %313 = vmatpush1.bf16.msra.mxu0 0
  %314 = vmatprep.subr.bf16.mxu0 0
  %315 = vmatpush1.bf16.msra.mxu0 0
  %316 = vmatprep.subr.bf16.mxu0 0
  %317 = vmatpush1.bf16.msra.mxu0 0
  %318 = vmatprep.subr.bf16.mxu0 0
  %319 = vmatpush1.bf16.msra.mxu0 0
  %320 = vmatprep.subr.bf16.mxu0 0
  %321 = vmatpush1.bf16.msra.mxu0 0
  %322 = vmatprep.subr.bf16.mxu0 0
  %323 = vmatpush1.bf16.msra.mxu0 0
  %324 = vmatprep.subr.bf16.mxu0 0
  %325 = vmatpush1.bf16.msra.mxu0 0
  %326 = vmatprep.subr.bf16.mxu0 0
  %327 = vmatpush1.bf16.msra.mxu0 0
  %328 = vmatprep.subr.bf16.mxu0 0
  %329 = vmatpush1.bf16.msra.mxu0 0
  %330 = vmatprep.subr.bf16.mxu0 0
  %331 = vmatpush1.bf16.msra.mxu0 0
  %332 = vmatprep.subr.bf16.mxu0 0
  %333 = vmatpush1.bf16.msra.mxu0 0
  %334 = vmatprep.subr.bf16.mxu0 0
  %335 = vmatpush1.bf16.msra.mxu0 0
  %336 = vmatprep.subr.bf16.mxu0 0
  %337 = vmatpush1.bf16.msra.mxu0 0
  %338 = vmatprep.subr.bf16.mxu0 0
  %339 = vmatpush1.bf16.msra.mxu0 0
  %340 = vmatprep.subr.bf16.mxu0 0
  %341 = vmatpush1.bf16.msra.mxu0 0
  %342 = vmatprep.mubr.bf16.mxu0 0
  %343 = vmatmul.mubr.bf16.gmra.mrb[0].mxu0 %v257
  %v344 = vpop.f32.mrb[0].mxu0
  %v345 = vadd.f32 0.0, %v344
  %v346 = vpop.f32.mrb[0].mxu0
  %v347 = vpop.f32.mrb[0].mxu0
  %v348 = vpop.f32.mrb[0].mxu0
  %349 = vdwg.mxu0
  %v350 = vld [vmem:[%s5] sm:$0x7]
  %v352 = vlaneseq
  %v353 = vshrl.u32 %v352, 7
  %v354 = vsub.s32 0, %v353
  %v355 = vrot.slane %v350, %v354
  %v356 = vlaneseq
  %v357 = vshrl.u32 %v356, 7
  %v358 = vsub.s32 1, %v357
  %v359 = vrot.slane %v350, %v358
  %v360 = vlaneseq
  %v361 = vshrl.u32 %v360, 7
  %v362 = vsub.s32 2, %v361
  %v363 = vrot.slane %v350, %v362
  %v367 = vmul.f32 %v304, %v355
  %v368 = vmul.f32 %v306, %v359
  %v369 = vmul.f32 %v345, %v363
  %v370 = vadd.f32 %v367, 0.0
  %v371 = vadd.f32 %v368, 0.0
  %v372 = vadd.f32 %v369, 0.0
  %s373 = scalar_lea.vmem %s4, 4
  %v374 = vld [vmem:[%s373] sm:$0xf]
  %v376 = vsel %vm255, %v374, 0
  %378 = vmatprep.subr.bf16.mxu0 %v264
  %379 = vmatpush1.bf16.msra.mxu0 %v261
  %380 = vmatprep.subr.bf16.mxu0 0
  %381 = vmatpush1.bf16.msra.mxu0 0
  %382 = vmatprep.subr.bf16.mxu0 0
  %383 = vmatpush1.bf16.msra.mxu0 0
  %384 = vmatprep.subr.bf16.mxu0 0
  %385 = vmatpush1.bf16.msra.mxu0 0
  %386 = vmatprep.subr.bf16.mxu0 0
  %387 = vmatpush1.bf16.msra.mxu0 0
  %388 = vmatprep.subr.bf16.mxu0 0
  %389 = vmatpush1.bf16.msra.mxu0 0
  %390 = vmatprep.subr.bf16.mxu0 0
  %391 = vmatpush1.bf16.msra.mxu0 0
  %392 = vmatprep.subr.bf16.mxu0 0
  %393 = vmatpush1.bf16.msra.mxu0 0
  %394 = vmatprep.subr.bf16.mxu0 0
  %395 = vmatpush1.bf16.msra.mxu0 0
  %396 = vmatprep.subr.bf16.mxu0 0
  %397 = vmatpush1.bf16.msra.mxu0 0
  %398 = vmatprep.subr.bf16.mxu0 0
  %399 = vmatpush1.bf16.msra.mxu0 0
  %400 = vmatprep.subr.bf16.mxu0 0
  %401 = vmatpush1.bf16.msra.mxu0 0
  %402 = vmatprep.subr.bf16.mxu0 0
  %403 = vmatpush1.bf16.msra.mxu0 0
  %404 = vmatprep.subr.bf16.mxu0 0
  %405 = vmatpush1.bf16.msra.mxu0 0
  %406 = vmatprep.subr.bf16.mxu0 0
  %407 = vmatpush1.bf16.msra.mxu0 0
  %408 = vmatprep.subr.bf16.mxu0 0
  %409 = vmatpush1.bf16.msra.mxu0 0
  %410 = vmatprep.mubr.bf16.mxu0 0
  %411 = vmatmul.mubr.bf16.gmra.mrb[0].mxu0 %v376
  %v412 = vpop.f32.mrb[0].mxu0
  %v413 = vadd.f32 0.0, %v412
  %v414 = vpop.f32.mrb[0].mxu0
  %v415 = vadd.f32 0.0, %v414
  %v416 = vpop.f32.mrb[0].mxu0
  %v417 = vpop.f32.mrb[0].mxu0
  %418 = vdwg.mxu0
  %419 = vmatprep.subr.bf16.mxu0 0
  %420 = vmatpush1.bf16.msra.mxu0 %v267
  %421 = vmatprep.subr.bf16.mxu0 0
  %422 = vmatpush1.bf16.msra.mxu0 0
  %423 = vmatprep.subr.bf16.mxu0 0
  %424 = vmatpush1.bf16.msra.mxu0 0
  %425 = vmatprep.subr.bf16.mxu0 0
  %426 = vmatpush1.bf16.msra.mxu0 0
  %427 = vmatprep.subr.bf16.mxu0 0
  %428 = vmatpush1.bf16.msra.mxu0 0
  %429 = vmatprep.subr.bf16.mxu0 0
  %430 = vmatpush1.bf16.msra.mxu0 0
  %431 = vmatprep.subr.bf16.mxu0 0
  %432 = vmatpush1.bf16.msra.mxu0 0
  %433 = vmatprep.subr.bf16.mxu0 0
  %434 = vmatpush1.bf16.msra.mxu0 0
  %435 = vmatprep.subr.bf16.mxu0 0
  %436 = vmatpush1.bf16.msra.mxu0 0
  %437 = vmatprep.subr.bf16.mxu0 0
  %438 = vmatpush1.bf16.msra.mxu0 0
  %439 = vmatprep.subr.bf16.mxu0 0
  %440 = vmatpush1.bf16.msra.mxu0 0
  %441 = vmatprep.subr.bf16.mxu0 0
  %442 = vmatpush1.bf16.msra.mxu0 0
  %443 = vmatprep.subr.bf16.mxu0 0
  %444 = vmatpush1.bf16.msra.mxu0 0
  %445 = vmatprep.subr.bf16.mxu0 0
  %446 = vmatpush1.bf16.msra.mxu0 0
  %447 = vmatprep.subr.bf16.mxu0 0
  %448 = vmatpush1.bf16.msra.mxu0 0
  %449 = vmatprep.subr.bf16.mxu0 0
  %450 = vmatpush1.bf16.msra.mxu0 0
  %451 = vmatprep.mubr.bf16.mxu0 0
  %452 = vmatmul.mubr.bf16.gmra.mrb[0].mxu0 %v376
  %v453 = vpop.f32.mrb[0].mxu0
  %v454 = vadd.f32 0.0, %v453
  %v455 = vpop.f32.mrb[0].mxu0
  %v456 = vpop.f32.mrb[0].mxu0
  %v457 = vpop.f32.mrb[0].mxu0
  %458 = vdwg.mxu0
  %s459 = scalar_lea.vmem %s5, 3
  %v460 = vld [vmem:[%s459] sm:$0x7]
  %v462 = vlaneseq
  %v463 = vshrl.u32 %v462, 7
  %v464 = vsub.s32 0, %v463
  %v465 = vrot.slane %v460, %v464
  %v466 = vlaneseq
  %v467 = vshrl.u32 %v466, 7
  %v468 = vsub.s32 1, %v467
  %v469 = vrot.slane %v460, %v468
  %v470 = vlaneseq
  %v471 = vshrl.u32 %v470, 7
  %v472 = vsub.s32 2, %v471
  %v473 = vrot.slane %v460, %v472
  %v477 = vmul.f32 %v413, %v465
  %v478 = vmul.f32 %v415, %v469
  %v479 = vmul.f32 %v454, %v473
  %v480 = vadd.f32 %v370, %v477
  %v481 = vadd.f32 %v371, %v478
  %v482 = vadd.f32 %v372, %v479
  %s483 = scalar_lea.vmem %s4, 8
  %v484 = vld [vmem:[%s483] sm:$0xf]
  %v486 = vsel %vm255, %v484, 0
  %488 = vmatprep.subr.bf16.mxu0 %v264
  %489 = vmatpush1.bf16.msra.mxu0 %v261
  %490 = vmatprep.subr.bf16.mxu0 0
  %491 = vmatpush1.bf16.msra.mxu0 0
  %492 = vmatprep.subr.bf16.mxu0 0
  %493 = vmatpush1.bf16.msra.mxu0 0
  %494 = vmatprep.subr.bf16.mxu0 0
  %495 = vmatpush1.bf16.msra.mxu0 0
  %496 = vmatprep.subr.bf16.mxu0 0
  %497 = vmatpush1.bf16.msra.mxu0 0
  %498 = vmatprep.subr.bf16.mxu0 0
  %499 = vmatpush1.bf16.msra.mxu0 0
  %500 = vmatprep.subr.bf16.mxu0 0
  %501 = vmatpush1.bf16.msra.mxu0 0
  %502 = vmatprep.subr.bf16.mxu0 0
  %503 = vmatpush1.bf16.msra.mxu0 0
  %504 = vmatprep.subr.bf16.mxu0 0
  %505 = vmatpush1.bf16.msra.mxu0 0
  %506 = vmatprep.subr.bf16.mxu0 0
  %507 = vmatpush1.bf16.msra.mxu0 0
  %508 = vmatprep.subr.bf16.mxu0 0
  %509 = vmatpush1.bf16.msra.mxu0 0
  %510 = vmatprep.subr.bf16.mxu0 0
  %511 = vmatpush1.bf16.msra.mxu0 0
  %512 = vmatprep.subr.bf16.mxu0 0
  %513 = vmatpush1.bf16.msra.mxu0 0
  %514 = vmatprep.subr.bf16.mxu0 0
  %515 = vmatpush1.bf16.msra.mxu0 0
  %516 = vmatprep.subr.bf16.mxu0 0
  %517 = vmatpush1.bf16.msra.mxu0 0
  %518 = vmatprep.subr.bf16.mxu0 0
  %519 = vmatpush1.bf16.msra.mxu0 0
  %520 = vmatprep.mubr.bf16.mxu0 0
  %521 = vmatmul.mubr.bf16.gmra.mrb[0].mxu0 %v486
  %v522 = vpop.f32.mrb[0].mxu0
  %v523 = vadd.f32 0.0, %v522
  %v524 = vpop.f32.mrb[0].mxu0
  %v525 = vadd.f32 0.0, %v524
  %v526 = vpop.f32.mrb[0].mxu0
  %v527 = vpop.f32.mrb[0].mxu0
  %528 = vdwg.mxu0
  %529 = vmatprep.subr.bf16.mxu0 0
  %530 = vmatpush1.bf16.msra.mxu0 %v267
  %531 = vmatprep.subr.bf16.mxu0 0
  %532 = vmatpush1.bf16.msra.mxu0 0
  %533 = vmatprep.subr.bf16.mxu0 0
  %534 = vmatpush1.bf16.msra.mxu0 0
  %535 = vmatprep.subr.bf16.mxu0 0
  %536 = vmatpush1.bf16.msra.mxu0 0
  %537 = vmatprep.subr.bf16.mxu0 0
  %538 = vmatpush1.bf16.msra.mxu0 0
  %539 = vmatprep.subr.bf16.mxu0 0
  %540 = vmatpush1.bf16.msra.mxu0 0
  %541 = vmatprep.subr.bf16.mxu0 0
  %542 = vmatpush1.bf16.msra.mxu0 0
  %543 = vmatprep.subr.bf16.mxu0 0
  %544 = vmatpush1.bf16.msra.mxu0 0
  %545 = vmatprep.subr.bf16.mxu0 0
  %546 = vmatpush1.bf16.msra.mxu0 0
  %547 = vmatprep.subr.bf16.mxu0 0
  %548 = vmatpush1.bf16.msra.mxu0 0
  %549 = vmatprep.subr.bf16.mxu0 0
  %550 = vmatpush1.bf16.msra.mxu0 0
  %551 = vmatprep.subr.bf16.mxu0 0
  %552 = vmatpush1.bf16.msra.mxu0 0
  %553 = vmatprep.subr.bf16.mxu0 0
  %554 = vmatpush1.bf16.msra.mxu0 0
  %555 = vmatprep.subr.bf16.mxu0 0
  %556 = vmatpush1.bf16.msra.mxu0 0
  %557 = vmatprep.subr.bf16.mxu0 0
  %558 = vmatpush1.bf16.msra.mxu0 0
  %559 = vmatprep.subr.bf16.mxu0 0
  %560 = vmatpush1.bf16.msra.mxu0 0
  %561 = vmatprep.mubr.bf16.mxu0 0
  %562 = vmatmul.mubr.bf16.gmra.mrb[0].mxu0 %v486
  %v563 = vpop.f32.mrb[0].mxu0
  %v564 = vadd.f32 0.0, %v563
  %v565 = vpop.f32.mrb[0].mxu0
  %v566 = vpop.f32.mrb[0].mxu0
  %v567 = vpop.f32.mrb[0].mxu0
  %568 = vdwg.mxu0
  %s569 = scalar_lea.vmem %s5, 6
  %v570 = vld [vmem:[%s569] sm:$0x7]
  %v572 = vlaneseq
  %v573 = vshrl.u32 %v572, 7
  %v574 = vsub.s32 0, %v573
  %v575 = vrot.slane %v570, %v574
  %v576 = vlaneseq
  %v577 = vshrl.u32 %v576, 7
  %v578 = vsub.s32 1, %v577
  %v579 = vrot.slane %v570, %v578
  %v580 = vlaneseq
  %v581 = vshrl.u32 %v580, 7
  %v582 = vsub.s32 2, %v581
  %v583 = vrot.slane %v570, %v582
  %v587 = vmul.f32 %v523, %v575
  %v588 = vmul.f32 %v525, %v579
  %v589 = vmul.f32 %v564, %v583
  %v590 = vadd.f32 %v480, %v587
  %v591 = vadd.f32 %v481, %v588
  %v592 = vadd.f32 %v482, %v589
  %v593 = vld [vmem:[%s6] sm:$0x7]
  %v595 = vlaneseq
  %v596 = vshrl.u32 %v595, 7
  %v597 = vsub.s32 0, %v596
  %v598 = vrot.slane %v593, %v597
  %v599 = vlaneseq
  %v600 = vshrl.u32 %v599, 7
  %v601 = vsub.s32 1, %v600
  %v602 = vrot.slane %v593, %v601
  %v603 = vlaneseq
  %v604 = vshrl.u32 %v603, 7
  %v605 = vsub.s32 2, %v604
  %v606 = vrot.slane %v593, %v605
  %v610 = vmul.f32 %v590, %v598
  %v611 = vmul.f32 %v591, %v602
  %v612 = vmul.f32 %v592, %v606
  %v613 = vld [vmem:[%s7] sm:$0x7]
  %v615 = vlaneseq
  %v616 = vshrl.u32 %v615, 7
  %v617 = vsub.s32 0, %v616
  %v618 = vrot.slane %v613, %v617
  %v619 = vlaneseq
  %v620 = vshrl.u32 %v619, 7
  %v621 = vsub.s32 1, %v620
  %v622 = vrot.slane %v613, %v621
  %v623 = vlaneseq
  %v624 = vshrl.u32 %v623, 7
  %v625 = vsub.s32 2, %v624
  %v626 = vrot.slane %v613, %v625
  %v630 = vadd.f32 %v610, %v618
  %v631 = vadd.f32 %v611, %v622
  %v632 = vadd.f32 %v612, %v626
  %v633 = vmax.f32 %v630, 0.0
  %v634 = vmax.f32 %v631, 0.0
  %v635 = vmax.f32 %v632, 0.0
  %v636 = vmin.f32 %v633, 6.0
  %v637 = vmin.f32 %v634, 6.0
  %v638 = vmin.f32 %v635, 6.0
  %v639 = vpack.c.bf16 %v636, %v636
  %v640 = vpack.c.bf16 %v637, %v637
  %v641 = vpack.c.bf16 %v638, %v638
  %v642 = vld [vmem:[%s8] sm:$0xf]
  %v643 = vld [vmem:[%s8 + $0x4] sm:$0xf]
  %v644 = vld [vmem:[%s8 + $0x8] sm:$0xf]
  %v645 = vld [vmem:[%s8 + $0xc] sm:$0xf]
  %v646 = vld [vmem:[%s8 + $0x10] sm:$0xf]
  %v647 = vld [vmem:[%s8 + $0x14] sm:$0xf]
  %v648 = vld [vmem:[%s8 + $0x18] sm:$0xf]
  %v649 = vld [vmem:[%s8 + $0x1c] sm:$0xf]
  %v650 = vld [vmem:[%s8 + $0x20] sm:$0xf]
  %v651 = vld [vmem:[%s8 + $0x24] sm:$0xf]
  %v652 = vld [vmem:[%s8 + $0x28] sm:$0xf]
  %v653 = vld [vmem:[%s8 + $0x2c] sm:$0xf]
  %v654 = vld [vmem:[%s8 + $0x30] sm:$0xf]
  %v655 = vld [vmem:[%s8 + $0x34] sm:$0xf]
  %v656 = vld [vmem:[%s8 + $0x38] sm:$0xf]
  %v657 = vld [vmem:[%s8 + $0x3c] sm:$0xf]
  %v658 = vld [vmem:[%s8 + $0x40] sm:$0xf]
  %v659 = vld [vmem:[%s8 + $0x44] sm:$0xf]
  %v660 = vld [vmem:[%s8 + $0x48] sm:$0xf]
  %v661 = vld [vmem:[%s8 + $0x4c] sm:$0xf]
  %v662 = vld [vmem:[%s8 + $0x50] sm:$0xf]
  %v663 = vld [vmem:[%s8 + $0x54] sm:$0xf]
  %v664 = vld [vmem:[%s8 + $0x58] sm:$0xf]
  %v665 = vld [vmem:[%s8 + $0x5c] sm:$0xf]
  %v666 = vld [vmem:[%s8 + $0x60] sm:$0xf]
  %v667 = vld [vmem:[%s8 + $0x64] sm:$0xf]
  %v668 = vld [vmem:[%s8 + $0x68] sm:$0xf]
  %v669 = vld [vmem:[%s8 + $0x6c] sm:$0xf]
  %v670 = vld [vmem:[%s8 + $0x70] sm:$0xf]
  %v671 = vld [vmem:[%s8 + $0x74] sm:$0xf]
  %v672 = vld [vmem:[%s8 + $0x78] sm:$0xf]
  %v673 = vld [vmem:[%s8 + $0x7c] sm:$0xf]
  %v674 = vld [vmem:[%s8 + $0x80] sm:$0xf]
  %v675 = vld [vmem:[%s8 + $0x84] sm:$0xf]
  %v676 = vld [vmem:[%s8 + $0x88] sm:$0xf]
  %v677 = vld [vmem:[%s8 + $0x8c] sm:$0xf]
  %v678 = vld [vmem:[%s8 + $0x90] sm:$0xf]
  %v679 = vld [vmem:[%s8 + $0x94] sm:$0xf]
  %v680 = vld [vmem:[%s8 + $0x98] sm:$0xf]
  %v681 = vld [vmem:[%s8 + $0x9c] sm:$0xf]
  %v682 = vld [vmem:[%s8 + $0xa0] sm:$0xf]
  %v683 = vld [vmem:[%s8 + $0xa4] sm:$0xf]
  %v684 = vld [vmem:[%s8 + $0xa8] sm:$0xf]
  %v685 = vld [vmem:[%s8 + $0xac] sm:$0xf]
  %v686 = vld [vmem:[%s8 + $0xb0] sm:$0xf]
  %v687 = vld [vmem:[%s8 + $0xb4] sm:$0xf]
  %v688 = vld [vmem:[%s8 + $0xb8] sm:$0xf]
  %v689 = vld [vmem:[%s8 + $0xbc] sm:$0xf]
  %v738 = vunpack.c.l.b16 %v642
  %v739 = vunpack.c.l.b16 %v643
  %v740 = vunpack.c.l.b16 %v644
  %v741 = vunpack.c.l.b16 %v645
  %v742 = vunpack.c.l.b16 %v646
  %v743 = vunpack.c.l.b16 %v647
  %v744 = vunpack.c.l.b16 %v648
  %v745 = vunpack.c.l.b16 %v649
  %v746 = vunpack.c.l.b16 %v650
  %v747 = vunpack.c.l.b16 %v651
  %v748 = vunpack.c.l.b16 %v652
  %v749 = vunpack.c.l.b16 %v653
  %v750 = vunpack.c.l.b16 %v654
  %v751 = vunpack.c.l.b16 %v655
  %v752 = vunpack.c.l.b16 %v656
  %v753 = vunpack.c.l.b16 %v657
  %v754 = vunpack.c.l.b16 %v658
  %v755 = vunpack.c.l.b16 %v659
  %v756 = vunpack.c.l.b16 %v660
  %v757 = vunpack.c.l.b16 %v661
  %v758 = vunpack.c.l.b16 %v662
  %v759 = vunpack.c.l.b16 %v663
  %v760 = vunpack.c.l.b16 %v664
  %v761 = vunpack.c.l.b16 %v665
  %v762 = vunpack.c.l.b16 %v666
  %v763 = vunpack.c.l.b16 %v667
  %v764 = vunpack.c.l.b16 %v668
  %v765 = vunpack.c.l.b16 %v669
  %v766 = vunpack.c.l.b16 %v670
  %v767 = vunpack.c.l.b16 %v671
  %v768 = vunpack.c.l.b16 %v672
  %v769 = vunpack.c.l.b16 %v673
  %v770 = vunpack.c.l.b16 %v674
  %v771 = vunpack.c.l.b16 %v675
  %v772 = vunpack.c.l.b16 %v676
  %v773 = vunpack.c.l.b16 %v677
  %v774 = vunpack.c.l.b16 %v678
  %v775 = vunpack.c.l.b16 %v679
  %v776 = vunpack.c.l.b16 %v680
  %v777 = vunpack.c.l.b16 %v681
  %v778 = vunpack.c.l.b16 %v682
  %v779 = vunpack.c.l.b16 %v683
  %v780 = vunpack.c.l.b16 %v684
  %v781 = vunpack.c.l.b16 %v685
  %v782 = vunpack.c.l.b16 %v686
  %v783 = vunpack.c.l.b16 %v687
  %v784 = vunpack.c.l.b16 %v688
  %v785 = vunpack.c.l.b16 %v689
  %v786 = vpack.c.b16 %v739, %v738
  %v787 = vpack.c.b16 %v741, %v740
  %v788 = vpack.c.b16 %v743, %v742
  %v789 = vpack.c.b16 %v745, %v744
  %v790 = vpack.c.b16 %v747, %v746
  %v791 = vpack.c.b16 %v749, %v748
  %v792 = vpack.c.b16 %v751, %v750
  %v793 = vpack.c.b16 %v753, %v752
  %v794 = vpack.c.b16 %v755, %v754
  %v795 = vpack.c.b16 %v757, %v756
  %v796 = vpack.c.b16 %v759, %v758
  %v797 = vpack.c.b16 %v761, %v760
  %v798 = vpack.c.b16 %v763, %v762
  %v799 = vpack.c.b16 %v765, %v764
  %v800 = vpack.c.b16 %v767, %v766
  %v801 = vpack.c.b16 %v769, %v768
  %v802 = vpack.c.b16 %v771, %v770
  %v803 = vpack.c.b16 %v773, %v772
  %v804 = vpack.c.b16 %v775, %v774
  %v805 = vpack.c.b16 %v777, %v776
  %v806 = vpack.c.b16 %v779, %v778
  %v807 = vpack.c.b16 %v781, %v780
  %v808 = vpack.c.b16 %v783, %v782
  %v809 = vpack.c.b16 %v785, %v784
  %834 = vmatprep.subr.bf16.mxu0 0
  %835 = vmatpush1.bf16.msra.mxu0 %v786
  %836 = vmatprep.subr.bf16.mxu0 0
  %837 = vmatpush1.bf16.msra.mxu0 %v787
  %838 = vmatprep.subr.bf16.mxu0 0
  %839 = vmatpush1.bf16.msra.mxu0 %v788
  %840 = vmatprep.subr.bf16.mxu0 0
  %841 = vmatpush1.bf16.msra.mxu0 %v789
  %842 = vmatprep.subr.bf16.mxu0 0
  %843 = vmatpush1.bf16.msra.mxu0 %v790
  %844 = vmatprep.subr.bf16.mxu0 0
  %845 = vmatpush1.bf16.msra.mxu0 %v791
  %846 = vmatprep.subr.bf16.mxu0 0
  %847 = vmatpush1.bf16.msra.mxu0 %v792
  %848 = vmatprep.subr.bf16.mxu0 0
  %849 = vmatpush1.bf16.msra.mxu0 %v793
  %850 = vmatprep.subr.bf16.mxu0 0
  %851 = vmatpush1.bf16.msra.mxu0 %v794
  %852 = vmatprep.subr.bf16.mxu0 0
  %853 = vmatpush1.bf16.msra.mxu0 %v795
  %854 = vmatprep.subr.bf16.mxu0 0
  %855 = vmatpush1.bf16.msra.mxu0 %v796
  %856 = vmatprep.subr.bf16.mxu0 0
  %857 = vmatpush1.bf16.msra.mxu0 %v797
  %858 = vmatprep.subr.bf16.mxu0 0
  %859 = vmatpush1.bf16.msra.mxu0 %v798
  %860 = vmatprep.subr.bf16.mxu0 0
  %861 = vmatpush1.bf16.msra.mxu0 %v799
  %862 = vmatprep.subr.bf16.mxu0 0
  %863 = vmatpush1.bf16.msra.mxu0 %v800
  %864 = vmatprep.subr.bf16.mxu0 0
  %865 = vmatpush1.bf16.msra.mxu0 %v801
  %866 = vmatprep.mubr.bf16.mxu0 %v640
  %867 = vmatmul.mubr.bf16.gmra.mrb[0].mxu0 %v639
  %v868 = vpop.f32.mrb[0].mxu0
  %v869 = vadd.f32 0.0, %v868
  %v870 = vpop.f32.mrb[0].mxu0
  %v871 = vpop.f32.mrb[0].mxu0
  %v872 = vpop.f32.mrb[0].mxu0
  %873 = vdwg.mxu0
  %874 = vmatprep.subr.bf16.mxu0 0
  %875 = vmatpush1.bf16.msra.mxu0 %v802
  %876 = vmatprep.subr.bf16.mxu0 0
  %877 = vmatpush1.bf16.msra.mxu0 %v803
  %878 = vmatprep.subr.bf16.mxu0 0
  %879 = vmatpush1.bf16.msra.mxu0 %v804
  %880 = vmatprep.subr.bf16.mxu0 0
  %881 = vmatpush1.bf16.msra.mxu0 %v805
  %882 = vmatprep.subr.bf16.mxu0 0
  %883 = vmatpush1.bf16.msra.mxu0 %v806
  %884 = vmatprep.subr.bf16.mxu0 0
  %885 = vmatpush1.bf16.msra.mxu0 %v807
  %886 = vmatprep.subr.bf16.mxu0 0
  %887 = vmatpush1.bf16.msra.mxu0 %v808
  %888 = vmatprep.subr.bf16.mxu0 0
  %889 = vmatpush1.bf16.msra.mxu0 %v809
  %890 = vmatprep.subr.bf16.mxu0 0
  %891 = vmatpush1.bf16.msra.mxu0 0
  %892 = vmatprep.subr.bf16.mxu0 0
  %893 = vmatpush1.bf16.msra.mxu0 0
  %894 = vmatprep.subr.bf16.mxu0 0
  %895 = vmatpush1.bf16.msra.mxu0 0
  %896 = vmatprep.subr.bf16.mxu0 0
  %897 = vmatpush1.bf16.msra.mxu0 0
  %898 = vmatprep.subr.bf16.mxu0 0
  %899 = vmatpush1.bf16.msra.mxu0 0
  %900 = vmatprep.subr.bf16.mxu0 0
  %901 = vmatpush1.bf16.msra.mxu0 0
  %902 = vmatprep.subr.bf16.mxu0 0
  %903 = vmatpush1.bf16.msra.mxu0 0
  %904 = vmatprep.subr.bf16.mxu0 0
  %905 = vmatpush1.bf16.msra.mxu0 0
  %906 = vmatprep.mubr.bf16.mxu0 0
  %907 = vmatmul.mubr.bf16.gmra.mrb[0].mxu0 %v641
  %v908 = vpop.f32.mrb[0].mxu0
  %v909 = vadd.f32 %v869, %v908
  %v910 = vpop.f32.mrb[0].mxu0
  %v911 = vpop.f32.mrb[0].mxu0
  %v912 = vpop.f32.mrb[0].mxu0
  %913 = vdwg.mxu0
  %v914 = vld [vmem:[%s9] sm:$0x1]
  %v916 = vlaneseq
  %v917 = vshrl.u32 %v916, 7
  %v918 = vsub.s32 0, %v917
  %v919 = vrot.slane %v914, %v918
  %v921 = vmul.f32 %v909, %v919
  %v922 = vld [vmem:[%s10] sm:$0x1]
  %v924 = vlaneseq
  %v925 = vshrl.u32 %v924, 7
  %v926 = vsub.s32 0, %v925
  %v927 = vrot.slane %v922, %v926
  %v929 = vadd.f32 %v921, %v927
  %v930 = vpack.c.bf16 %v929, %v929
  %931 = vst [vmem:[%s11] sm:$0xf] %v930
  // Predicated region
  $region46: #{_lambda_.13} parent=0 // pred_check
    _
  $region47: #{_lambda_.13} parent=0 // pred_check_branch
    %933 = sbr.rel (0) target = $region49
  $region48: #{_lambda_.13} parent=0 // pred_region
    _
  $region49: #{_lambda_.13} parent=0 // pred_fallthru
    _
  // Predicated region
  $region50: #{_lambda_.13} parent=0 // pred_check
    _
  $region51: #{_lambda_.13} parent=0 // pred_check_branch
    %935 = sbr.rel (0) target = $region53
  $region52: #{_lambda_.13} parent=0 // pred_region
    _
  $region53: #{_lambda_.13} parent=0 // pred_fallthru
    _

</llo_original>
